<compile_context>
chip_gen: v7x
topology: tpu7x:2x2x1
jax: 0.10.0
libtpu: 0.0.40
codegen_flags: <defaults>
</compile_context>

<pallas_src>
import math
from functools import partial

import jax
import jax.numpy as jnp
from jax.experimental import pallas as pl
from jax.experimental.pallas import tpu as pltpu


# ----------------------------- in-kernel math helpers ------------------------

def _layernorm_padded(h, gamma, beta, d_real, d_pad, eps=1e-5):
    """LayerNorm over the first `d_real` features of a lane-padded (N, Dp) slab.

    Requires padded feature lanes of `h` to be exactly zero and gamma/beta to
    be zero-padded; then full-width sums equal real-feature sums (with an
    analytic mu^2 correction for the padded lanes in the variance) and the
    padded lanes of the result stay exactly zero.
    """
    inv_d = 1.0 / d_real
    mu = jnp.sum(h, axis=-1, keepdims=True) * inv_d
    c = h - mu
    var = (jnp.sum(c * c, axis=-1, keepdims=True)
           - (d_pad - d_real) * mu * mu) * inv_d
    return c * jax.lax.rsqrt(var + eps) * gamma + beta


def _attention(q, k, v, mask, w_o, b_o, n_heads, dh_pad):
    """Multi-head attention core on lane-dense (rows, H*dh_pad) f32 slabs.

    q: (Sq, H*dhp), k/v: (Skv, H*dhp), mask: (Sq, Skv) additive f32,
    w_o: (H*dhp, Dp) bf16, b_o: (1, Dp) f32.  1/sqrt(dh) is pre-folded into q.
    Scores / softmax stay f32; matmul operands are bf16 with f32 accumulate.
    """
    bf16 = jnp.bfloat16
    ctx_parts = []
    for h in range(n_heads):                          # tiny static unroll
        sl = slice(h * dh_pad, (h + 1) * dh_pad)      # static lane offsets
        s = jnp.einsum('qe,ke->qk',
                       q[:, sl].astype(bf16), k[:, sl].astype(bf16),
                       preferred_element_type=jnp.float32) + mask
        m = jnp.max(s, axis=-1, keepdims=True)
        e = jnp.exp(s - m)
        p = e / jnp.sum(e, axis=-1, keepdims=True)    # exact divide (f32)
        ctx_parts.append(jnp.dot(p.astype(bf16), v[:, sl].astype(bf16),
                                 preferred_element_type=jnp.float32))
    ctx = jnp.concatenate(ctx_parts, axis=-1)         # (Sq, H*dhp) lane-dense
    # single output projection, K = H*dhp contraction (no per-head add chain)
    return jnp.dot(ctx.astype(bf16), w_o,
                   preferred_element_type=jnp.float32) + b_o


# ----------------------------- Pallas kernel ---------------------------------

def decoder_kernel(n_heads, dh_pad, d_real,
                   x_ref, xe_ref, smask_ref, cmask_ref,
                   wqkv_s_ref, bqkv_s_ref, wo_s_ref, bo_s_ref,
                   wq_c_ref, bq_c_ref, wkv_c_ref, bkv_c_ref, wo_c_ref, bo_c_ref,
                   gamma_ref, beta_ref, w1_ref, b1_ref, w2_ref, b2_ref,
                   out_ref):
    bf16 = jnp.bfloat16
    f32 = jnp.float32
    hd = n_heads * dh_pad
    d_pad = x_ref.shape[-1]

    x = x_ref[...]            # (S, Dp) f32, padded lanes exactly zero
    xe = xe_ref[...]          # (Se, Dp)
    gammas = gamma_ref[...]   # (3, Dp) zero-padded beyond d_real
    betas = beta_ref[...]

    # ---- self attention: fused lane-dense QKV + residual + norm1 -----------
    qkv = jnp.dot(x.astype(bf16), wqkv_s_ref[...],
                  preferred_element_type=f32) + bqkv_s_ref[...]     # (S, 3*HD)
    attn = _attention(qkv[:, :hd], qkv[:, hd:2 * hd], qkv[:, 2 * hd:],
                      smask_ref[...], wo_s_ref[...], bo_s_ref[...],
                      n_heads, dh_pad)
    x1 = _layernorm_padded(x + attn, gammas[0:1], betas[0:1], d_real, d_pad)

    # ---- cross attention: Q from x1, fused K/V from encoder + norm2 --------
    q2 = jnp.dot(x1.astype(bf16), wq_c_ref[...],
                 preferred_element_type=f32) + bq_c_ref[...]        # (S, HD)
    kv = jnp.dot(xe.astype(bf16), wkv_c_ref[...],
                 preferred_element_type=f32) + bkv_c_ref[...]       # (Se, 2*HD)
    attn2 = _attention(q2, kv[:, :hd], kv[:, hd:],
                       cmask_ref[...], wo_c_ref[...], bo_c_ref[...],
                       n_heads, dh_pad)
    x2 = _layernorm_padded(x1 + attn2, gammas[1:2], betas[1:2], d_real, d_pad)

    # ---- position-wise FFN + residual + norm3 (dropout == identity) --------
    h = jnp.maximum(jnp.dot(x2.astype(bf16), w1_ref[...],
                            preferred_element_type=f32) + b1_ref[...], 0.0)
    ff = jnp.dot(h.astype(bf16), w2_ref[...],
                 preferred_element_type=f32) + b2_ref[...]
    out_ref[...] = _layernorm_padded(x2 + ff, gammas[2:3], betas[2:3],
                                     d_real, d_pad)


# ----------------------------- wrapper-side weight prep -----------------------

def _pad_head_proj(w, b, n_heads, d_model, d_pad, dh_pad, scale=1.0):
    """(D, D) per-head-column projection -> lane-dense (Dp, H*dhp); each head's
    real dh columns land at the start of its dhp block (rest zero)."""
    H, dh = n_heads, d_model // n_heads
    w3 = (w * scale).reshape(d_model, H, dh)
    wp = jnp.zeros((d_pad, H, dh_pad), jnp.float32).at[:d_model, :, :dh].set(w3)
    b3 = (b * scale).reshape(H, dh)
    bp = jnp.zeros((1, H, dh_pad), jnp.float32).at[0, :, :dh].set(b3)
    return wp.reshape(d_pad, H * dh_pad), bp.reshape(1, H * dh_pad)


def _pad_out_proj(w, b, n_heads, d_model, d_pad, dh_pad):
    """(D, D) head-concat-rows output projection -> (H*dhp, Dp)."""
    H, dh = n_heads, d_model // n_heads
    w3 = w.reshape(H, dh, d_model)
    wp = jnp.zeros((H, dh_pad, d_pad), jnp.float32).at[:, :dh, :d_model].set(w3)
    bp = jnp.zeros((1, d_pad), jnp.float32).at[0, :d_model].set(b)
    return wp.reshape(H * dh_pad, d_pad), bp


# ----------------------------- forward wrapper --------------------------------

def decoder_forward(x, x_mask, x_enc, x_enc_mask, params, n_heads,
                    d_pad=128, f_pad=128, dh_pad=32):
    B, S, D = x.shape
    Se = x_enc.shape[1]
    F = params["w1"].shape[1]
    H = n_heads
    dh = D // H
    assert d_pad >= D and f_pad >= F and dh_pad >= dh and d_pad % 128 == 0
    scale = 1.0 / math.sqrt(dh)
    bf16 = jnp.bfloat16

    # ---- lane-pad activations (padded feature lanes are exactly zero) ------
    x_p = jnp.zeros((B, S, d_pad), jnp.float32).at[:, :, :D].set(x)
    xe_p = jnp.zeros((B, Se, d_pad), jnp.float32).at[:, :, :D].set(x_enc)
    smask = x_mask.astype(jnp.float32)        # (B, S, S)  additive
    cmask = x_enc_mask.astype(jnp.float32)    # (B, S, Se) additive

    # ---- self-attention: fused (Dp, 3*H*dhp) QKV, (H*dhp, Dp) out ----------
    wq_s, bq_s = _pad_head_proj(params["w_self"][0], params["b_self"][0],
                                H, D, d_pad, dh_pad, scale)   # 1/sqrt(dh) in Q
    wk_s, bk_s = _pad_head_proj(params["w_self"][1], params["b_self"][1],
                                H, D, d_pad, dh_pad)
    wv_s, bv_s = _pad_head_proj(params["w_self"][2], params["b_self"][2],
                                H, D, d_pad, dh_pad)
    wqkv_s = jnp.concatenate([wq_s, wk_s, wv_s], axis=1).astype(bf16)
    bqkv_s = jnp.concatenate([bq_s, bk_s, bv_s], axis=1)
    wo_s, bo_s = _pad_out_proj(params["w_self"][3], params["b_self"][3],
                               H, D, d_pad, dh_pad)
    wo_s = wo_s.astype(bf16)

    # ---- cross-attention: lone Q (projects x1), fused (Dp, 2*H*dhp) K/V ----
    wq_c, bq_c = _pad_head_proj(params["w_cross"][0], params["b_cross"][0],
                                H, D, d_pad, dh_pad, scale)
    wk_c, bk_c = _pad_head_proj(params["w_cross"][1], params["b_cross"][1],
                                H, D, d_pad, dh_pad)
    wv_c, bv_c = _pad_head_proj(params["w_cross"][2], params["b_cross"][2],
                                H, D, d_pad, dh_pad)
    wkv_c = jnp.concatenate([wk_c, wv_c], axis=1).astype(bf16)
    bkv_c = jnp.concatenate([bk_c, bv_c], axis=1)
    wq_c = wq_c.astype(bf16)
    wo_c, bo_c = _pad_out_proj(params["w_cross"][3], params["b_cross"][3],
                               H, D, d_pad, dh_pad)
    wo_c = wo_c.astype(bf16)

    # ---- layernorm / FFN params, zero-padded to lane-dense widths ----------
    gammas = jnp.zeros((3, d_pad), jnp.float32).at[:, :D].set(params["gammas"])
    betas = jnp.zeros((3, d_pad), jnp.float32).at[:, :D].set(params["betas"])
    w1 = jnp.zeros((d_pad, f_pad), jnp.float32).at[:D, :F].set(params["w1"]).astype(bf16)
    b1 = jnp.zeros((1, f_pad), jnp.float32).at[0, :F].set(params["b1"].reshape(-1))
    w2 = jnp.zeros((f_pad, d_pad), jnp.float32).at[:F, :D].set(params["w2"]).astype(bf16)
    b2 = jnp.zeros((1, d_pad), jnp.float32).at[0, :D].set(params["b2"].reshape(-1))

    def per_batch(shape):
        n = len(shape)
        return pl.BlockSpec((None,) + shape, lambda b, _n=n: (b,) + (0,) * _n)

    def resident(arr):
        n = arr.ndim
        return pl.BlockSpec(arr.shape, lambda b, _n=n: (0,) * _n)

    weights = (wqkv_s, bqkv_s, wo_s, bo_s,
               wq_c, bq_c, wkv_c, bkv_c, wo_c, bo_c,
               gammas, betas, w1, b1, w2, b2)

    in_specs = ([per_batch((S, d_pad)), per_batch((Se, d_pad)),
                 per_batch((S, S)), per_batch((S, Se))]
                + [resident(w) for w in weights])

    out = pl.pallas_call(
        partial(decoder_kernel, H, dh_pad, D),
        out_shape=jax.ShapeDtypeStruct((B, S, d_pad), jnp.float32),
        grid_spec=pltpu.PrefetchScalarGridSpec(
            num_scalar_prefetch=0,
            grid=(B,),                                  # parallel over batch
            in_specs=in_specs,
            out_specs=per_batch((S, d_pad)),
        ),
        compiler_params=pltpu.CompilerParams(
            dimension_semantics=("parallel",),          # megacore / 2 TCs on v7x
            vmem_limit_bytes=32 * 1024 * 1024,
        ),
    )(x_p, xe_p, smask, cmask, *weights)

    return out[:, :, :D]


# ----------------------------- pure-JAX reference -----------------------------

def _ref_layernorm(h, gamma, beta, eps=1e-5):
    mu = jnp.mean(h, axis=-1, keepdims=True)
    var = jnp.mean((h - mu) ** 2, axis=-1, keepdims=True)
    return (h - mu) * jax.lax.rsqrt(var + eps) * gamma + beta


def _ref_mha(q_in, kv_in, mask, w, b, n_heads):
    D = q_in.shape[-1]
    dh = D // n_heads
    scale = 1.0 / math.sqrt(dh)
    q = q_in @ w[0] + b[0]
    k = kv_in @ w[1] + b[1]
    v = kv_in @ w[2] + b[2]
    heads = []
    for h in range(n_heads):
        qs = q[:, h * dh:(h + 1) * dh]
        ks = k[:, h * dh:(h + 1) * dh]
        vs = v[:, h * dh:(h + 1) * dh]
        s = qs @ ks.T * scale + mask
        heads.append(jax.nn.softmax(s, axis=-1) @ vs)
    return jnp.concatenate(heads, axis=-1) @ w[3] + b[3]


def decoder_reference(x, x_mask, x_enc, x_enc_mask, params, n_heads):
    def per_batch(xb, mb, eb, emb):
        a = _ref_mha(xb, xb, mb, params["w_self"], params["b_self"], n_heads)
        x1 = _ref_layernorm(xb + a, params["gammas"][0], params["betas"][0])
        a2 = _ref_mha(x1, eb, emb, params["w_cross"], params["b_cross"], n_heads)
        x2 = _ref_layernorm(x1 + a2, params["gammas"][1], params["betas"][1])
        hh = jnp.maximum(x2 @ params["w1"] + params["b1"], 0.0)
        ff = hh @ params["w2"] + params["b2"]
        return _ref_layernorm(x2 + ff, params["gammas"][2], params["betas"][2])
    return jax.vmap(per_batch)(x, x_mask, x_enc, x_enc_mask)


# ----------------------------- main -------------------------------------------

if __name__ == "__main__":
    B, S, Se, D, H, F = 2, 8, 12, 32, 4, 64   # batch, seq, enc-seq, d_model, heads, d_ff

    key = jax.random.PRNGKey(0)
    keys = jax.random.split(key, 10)
    x = jax.random.normal(keys[0], (B, S, D), jnp.float32)
    x_enc = jax.random.normal(keys[1], (B, Se, D), jnp.float32)

    # causal self-attention mask (additive), full-visibility cross-attention mask
    causal = jnp.where(jnp.tril(jnp.ones((S, S), jnp.bool_)), 0.0, -1e9).astype(jnp.float32)
    x_mask = jnp.broadcast_to(causal, (B, S, S))
    x_enc_mask = jnp.zeros((B, S, Se), jnp.float32)

    scale = 0.02
    params = dict(
        w_self=jax.random.normal(keys[2], (4, D, D), jnp.float32) * scale,
        b_self=jax.random.normal(keys[3], (4, D), jnp.float32) * scale,
        w_cross=jax.random.normal(keys[4], (4, D, D), jnp.float32) * scale,
        b_cross=jax.random.normal(keys[5], (4, D), jnp.float32) * scale,
        gammas=jnp.ones((3, D), jnp.float32),   # nn.LayerNorm default init
        betas=jnp.zeros((3, D), jnp.float32),
        w1=jax.random.normal(keys[6], (D, F), jnp.float32) * scale,
        b1=jax.random.normal(keys[7], (1, F), jnp.float32) * scale,
        w2=jax.random.normal(keys[8], (F, D), jnp.float32) * scale,
        b2=jax.random.normal(keys[9], (1, D), jnp.float32) * scale,
    )

    fwd = jax.jit(partial(decoder_forward, n_heads=H))
    out = jax.block_until_ready(fwd(x, x_mask, x_enc, x_enc_mask, params))

    ref = decoder_reference(x, x_mask, x_enc, x_enc_mask, params, H)
    assert out.shape == (B, S, D)
    max_err = float(jnp.max(jnp.abs(out - ref)))
    # bf16 MXU operands (f32 accumulation) vs. the all-f32 reference: 2e-3 tol.
    assert jnp.allclose(out, ref, atol=2e-3, rtol=2e-3), f"max_err={max_err}"

    print("KERNEL_OK")
</pallas_src>

<mosaic_0001>
module attributes {stable_mosaic.version = 11 : i64} {
  func.func @decoder_kernel(%arg0: i32, %arg1: memref<1x8x128xf32, #tpu.memory_space<vmem>>, %arg2: memref<1x12x128xf32, #tpu.memory_space<vmem>>, %arg3: memref<1x8x8xf32, #tpu.memory_space<vmem>>, %arg4: memref<1x8x12xf32, #tpu.memory_space<vmem>>, %arg5: memref<128x384xbf16, #tpu.memory_space<vmem>>, %arg6: memref<1x384xf32, #tpu.memory_space<vmem>>, %arg7: memref<128x128xbf16, #tpu.memory_space<vmem>>, %arg8: memref<1x128xf32, #tpu.memory_space<vmem>>, %arg9: memref<128x128xbf16, #tpu.memory_space<vmem>>, %arg10: memref<1x128xf32, #tpu.memory_space<vmem>>, %arg11: memref<128x256xbf16, #tpu.memory_space<vmem>>, %arg12: memref<1x256xf32, #tpu.memory_space<vmem>>, %arg13: memref<128x128xbf16, #tpu.memory_space<vmem>>, %arg14: memref<1x128xf32, #tpu.memory_space<vmem>>, %arg15: memref<3x128xf32, #tpu.memory_space<vmem>>, %arg16: memref<3x128xf32, #tpu.memory_space<vmem>>, %arg17: memref<128x128xbf16, #tpu.memory_space<vmem>>, %arg18: memref<1x128xf32, #tpu.memory_space<vmem>>, %arg19: memref<128x128xbf16, #tpu.memory_space<vmem>>, %arg20: memref<1x128xf32, #tpu.memory_space<vmem>>, %arg21: memref<1x8x128xf32, #tpu.memory_space<vmem>>) attributes {dimension_semantics = [#tpu.dimension_semantics<parallel>], iteration_bounds = array<i64: 2>, scalar_prefetch = 0 : i64, scratch_operands = 0 : i64, tpu.core_type = #tpu.core_type<tc>, window_params = [{transform_indices = @transform_0, window_bounds = array<i64: 1, 8, 128>}, {transform_indices = @transform_1, window_bounds = array<i64: 1, 12, 128>}, {transform_indices = @transform_2, window_bounds = array<i64: 1, 8, 8>}, {transform_indices = @transform_3, window_bounds = array<i64: 1, 8, 12>}, {pipeline_mode = #tpu.pipeline_mode<synchronous>, transform_indices = @transform_4, window_bounds = array<i64: 128, 384>}, {pipeline_mode = #tpu.pipeline_mode<synchronous>, transform_indices = @transform_5, window_bounds = array<i64: 1, 384>}, {pipeline_mode = #tpu.pipeline_mode<synchronous>, transform_indices = @transform_6, window_bounds = array<i64: 128, 128>}, {pipeline_mode = #tpu.pipeline_mode<synchronous>, transform_indices = @transform_7, window_bounds = array<i64: 1, 128>}, {pipeline_mode = #tpu.pipeline_mode<synchronous>, transform_indices = @transform_8, window_bounds = array<i64: 128, 128>}, {pipeline_mode = #tpu.pipeline_mode<synchronous>, transform_indices = @transform_9, window_bounds = array<i64: 1, 128>}, {pipeline_mode = #tpu.pipeline_mode<synchronous>, transform_indices = @transform_10, window_bounds = array<i64: 128, 256>}, {pipeline_mode = #tpu.pipeline_mode<synchronous>, transform_indices = @transform_11, window_bounds = array<i64: 1, 256>}, {pipeline_mode = #tpu.pipeline_mode<synchronous>, transform_indices = @transform_12, window_bounds = array<i64: 128, 128>}, {pipeline_mode = #tpu.pipeline_mode<synchronous>, transform_indices = @transform_13, window_bounds = array<i64: 1, 128>}, {pipeline_mode = #tpu.pipeline_mode<synchronous>, transform_indices = @transform_14, window_bounds = array<i64: 3, 128>}, {pipeline_mode = #tpu.pipeline_mode<synchronous>, transform_indices = @transform_15, window_bounds = array<i64: 3, 128>}, {pipeline_mode = #tpu.pipeline_mode<synchronous>, transform_indices = @transform_16, window_bounds = array<i64: 128, 128>}, {pipeline_mode = #tpu.pipeline_mode<synchronous>, transform_indices = @transform_17, window_bounds = array<i64: 1, 128>}, {pipeline_mode = #tpu.pipeline_mode<synchronous>, transform_indices = @transform_18, window_bounds = array<i64: 128, 128>}, {pipeline_mode = #tpu.pipeline_mode<synchronous>, transform_indices = @transform_19, window_bounds = array<i64: 1, 128>}, {transform_indices = @transform_20, window_bounds = array<i64: 1, 8, 128>}]} {
    %c0 = arith.constant 0 : index
    %c0_0 = arith.constant 0 : index
    %c0_1 = arith.constant 0 : index
    %0 = vector.load %arg1[%c0, %c0_0, %c0_1] : memref<1x8x128xf32, #tpu.memory_space<vmem>>, vector<1x8x128xf32>
    %1 = vector.shape_cast %0 : vector<1x8x128xf32> to vector<8x128xf32>
    %c0_2 = arith.constant 0 : index
    %c0_3 = arith.constant 0 : index
    %c0_4 = arith.constant 0 : index
    %2 = vector.load %arg2[%c0_2, %c0_3, %c0_4] : memref<1x12x128xf32, #tpu.memory_space<vmem>>, vector<1x12x128xf32>
    %3 = vector.shape_cast %2 : vector<1x12x128xf32> to vector<12x128xf32>
    %c0_5 = arith.constant 0 : index
    %c0_6 = arith.constant 0 : index
    %4 = vector.load %arg15[%c0_5, %c0_6] : memref<3x128xf32, #tpu.memory_space<vmem>>, vector<3x128xf32>
    %c0_7 = arith.constant 0 : index
    %c0_8 = arith.constant 0 : index
    %5 = vector.load %arg16[%c0_7, %c0_8] : memref<3x128xf32, #tpu.memory_space<vmem>>, vector<3x128xf32>
    %6 = arith.truncf %1 : vector<8x128xf32> to vector<8x128xbf16>
    %c0_9 = arith.constant 0 : index
    %c0_10 = arith.constant 0 : index
    %7 = vector.load %arg5[%c0_9, %c0_10] : memref<128x384xbf16, #tpu.memory_space<vmem>>, vector<128x384xbf16>
    %cst = arith.constant dense<0.000000e+00> : vector<8x384xf32>
    %8 = tpu.matmul %6, %7, %cst {dimension_numbers = #tpu.dot_dimension_numbers<[1], [0], [0], [1], [0, 0, 1, 1], [], []>} : vector<8x128xbf16>, vector<128x384xbf16>, vector<8x384xf32> -> vector<8x384xf32>
    %c0_11 = arith.constant 0 : index
    %c0_12 = arith.constant 0 : index
    %9 = vector.load %arg6[%c0_11, %c0_12] : memref<1x384xf32, #tpu.memory_space<vmem>>, vector<1x384xf32>
    %10 = vector.broadcast %9 : vector<1x384xf32> to vector<8x384xf32>
    %11 = arith.addf %8, %10 : vector<8x384xf32>
    %12 = vector.extract_strided_slice %11 {offsets = [0, 0], sizes = [8, 128], strides = [1, 1]} : vector<8x384xf32> to vector<8x128xf32>
    %13 = vector.extract_strided_slice %11 {offsets = [0, 128], sizes = [8, 128], strides = [1, 1]} : vector<8x384xf32> to vector<8x128xf32>
    %14 = vector.extract_strided_slice %11 {offsets = [0, 256], sizes = [8, 128], strides = [1, 1]} : vector<8x384xf32> to vector<8x128xf32>
    %c0_13 = arith.constant 0 : index
    %c0_14 = arith.constant 0 : index
    %c0_15 = arith.constant 0 : index
    %15 = vector.load %arg3[%c0_13, %c0_14, %c0_15] : memref<1x8x8xf32, #tpu.memory_space<vmem>>, vector<1x8x8xf32>
    %16 = vector.shape_cast %15 : vector<1x8x8xf32> to vector<8x8xf32>
    %c0_16 = arith.constant 0 : index
    %c0_17 = arith.constant 0 : index
    %17 = vector.load %arg7[%c0_16, %c0_17] : memref<128x128xbf16, #tpu.memory_space<vmem>>, vector<128x128xbf16>
    %c0_18 = arith.constant 0 : index
    %c0_19 = arith.constant 0 : index
    %18 = vector.load %arg8[%c0_18, %c0_19] : memref<1x128xf32, #tpu.memory_space<vmem>>, vector<1x128xf32>
    %19 = vector.extract_strided_slice %12 {offsets = [0, 0], sizes = [8, 32], strides = [1, 1]} : vector<8x128xf32> to vector<8x32xf32>
    %20 = arith.truncf %19 : vector<8x32xf32> to vector<8x32xbf16>
    %21 = vector.extract_strided_slice %13 {offsets = [0, 0], sizes = [8, 32], strides = [1, 1]} : vector<8x128xf32> to vector<8x32xf32>
    %22 = arith.truncf %21 : vector<8x32xf32> to vector<8x32xbf16>
    "tpu.trace_start"() <{level = 10 : i32, message = "qe,ke->qk"}> : () -> ()
    %cst_20 = arith.constant dense<0.000000e+00> : vector<8x8xf32>
    %23 = tpu.matmul %20, %22, %cst_20 {dimension_numbers = #tpu.dot_dimension_numbers<[1], [1], [0], [0], [0, 0, 1, 0], [], []>} : vector<8x32xbf16>, vector<8x32xbf16>, vector<8x8xf32> -> vector<8x8xf32>
    "tpu.trace_stop"() : () -> ()
    %24 = arith.addf %23, %16 : vector<8x8xf32>
    %cst_21 = arith.constant dense<0xFF800000> : vector<8xf32>
    %25 = vector.multi_reduction <maximumf>, %24, %cst_21 [1] : vector<8x8xf32> to vector<8xf32>
    %26 = vector.shape_cast %25 : vector<8xf32> to vector<8x1xf32>
    %27 = vector.broadcast %26 : vector<8x1xf32> to vector<8x8xf32>
    %28 = arith.subf %24, %27 : vector<8x8xf32>
    %29 = math.exp %28 : vector<8x8xf32>
    %cst_22 = arith.constant dense<0.000000e+00> : vector<8xf32>
    %30 = vector.multi_reduction <add>, %29, %cst_22 [1] : vector<8x8xf32> to vector<8xf32>
    %31 = vector.shape_cast %30 : vector<8xf32> to vector<8x1xf32>
    %32 = vector.broadcast %31 : vector<8x1xf32> to vector<8x8xf32>
    %33 = arith.divf %29, %32 : vector<8x8xf32>
    %34 = arith.truncf %33 : vector<8x8xf32> to vector<8x8xbf16>
    %35 = vector.extract_strided_slice %14 {offsets = [0, 0], sizes = [8, 32], strides = [1, 1]} : vector<8x128xf32> to vector<8x32xf32>
    %36 = arith.truncf %35 : vector<8x32xf32> to vector<8x32xbf16>
    %cst_23 = arith.constant dense<0.000000e+00> : vector<8x32xf32>
    %37 = tpu.matmul %34, %36, %cst_23 {dimension_numbers = #tpu.dot_dimension_numbers<[1], [0], [0], [1], [0, 0, 1, 1], [], []>} : vector<8x8xbf16>, vector<8x32xbf16>, vector<8x32xf32> -> vector<8x32xf32>
    %38 = vector.extract_strided_slice %12 {offsets = [0, 32], sizes = [8, 32], strides = [1, 1]} : vector<8x128xf32> to vector<8x32xf32>
    %39 = arith.truncf %38 : vector<8x32xf32> to vector<8x32xbf16>
    %40 = vector.extract_strided_slice %13 {offsets = [0, 32], sizes = [8, 32], strides = [1, 1]} : vector<8x128xf32> to vector<8x32xf32>
    %41 = arith.truncf %40 : vector<8x32xf32> to vector<8x32xbf16>
    "tpu.trace_start"() <{level = 10 : i32, message = "qe,ke->qk"}> : () -> ()
    %cst_24 = arith.constant dense<0.000000e+00> : vector<8x8xf32>
    %42 = tpu.matmul %39, %41, %cst_24 {dimension_numbers = #tpu.dot_dimension_numbers<[1], [1], [0], [0], [0, 0, 1, 0], [], []>} : vector<8x32xbf16>, vector<8x32xbf16>, vector<8x8xf32> -> vector<8x8xf32>
    "tpu.trace_stop"() : () -> ()
    %43 = arith.addf %42, %16 : vector<8x8xf32>
    %cst_25 = arith.constant dense<0xFF800000> : vector<8xf32>
    %44 = vector.multi_reduction <maximumf>, %43, %cst_25 [1] : vector<8x8xf32> to vector<8xf32>
    %45 = vector.shape_cast %44 : vector<8xf32> to vector<8x1xf32>
    %46 = vector.broadcast %45 : vector<8x1xf32> to vector<8x8xf32>
    %47 = arith.subf %43, %46 : vector<8x8xf32>
    %48 = math.exp %47 : vector<8x8xf32>
    %cst_26 = arith.constant dense<0.000000e+00> : vector<8xf32>
    %49 = vector.multi_reduction <add>, %48, %cst_26 [1] : vector<8x8xf32> to vector<8xf32>
    %50 = vector.shape_cast %49 : vector<8xf32> to vector<8x1xf32>
    %51 = vector.broadcast %50 : vector<8x1xf32> to vector<8x8xf32>
    %52 = arith.divf %48, %51 : vector<8x8xf32>
    %53 = arith.truncf %52 : vector<8x8xf32> to vector<8x8xbf16>
    %54 = vector.extract_strided_slice %14 {offsets = [0, 32], sizes = [8, 32], strides = [1, 1]} : vector<8x128xf32> to vector<8x32xf32>
    %55 = arith.truncf %54 : vector<8x32xf32> to vector<8x32xbf16>
    %cst_27 = arith.constant dense<0.000000e+00> : vector<8x32xf32>
    %56 = tpu.matmul %53, %55, %cst_27 {dimension_numbers = #tpu.dot_dimension_numbers<[1], [0], [0], [1], [0, 0, 1, 1], [], []>} : vector<8x8xbf16>, vector<8x32xbf16>, vector<8x32xf32> -> vector<8x32xf32>
    %57 = vector.extract_strided_slice %12 {offsets = [0, 64], sizes = [8, 32], strides = [1, 1]} : vector<8x128xf32> to vector<8x32xf32>
    %58 = arith.truncf %57 : vector<8x32xf32> to vector<8x32xbf16>
    %59 = vector.extract_strided_slice %13 {offsets = [0, 64], sizes = [8, 32], strides = [1, 1]} : vector<8x128xf32> to vector<8x32xf32>
    %60 = arith.truncf %59 : vector<8x32xf32> to vector<8x32xbf16>
    "tpu.trace_start"() <{level = 10 : i32, message = "qe,ke->qk"}> : () -> ()
    %cst_28 = arith.constant dense<0.000000e+00> : vector<8x8xf32>
    %61 = tpu.matmul %58, %60, %cst_28 {dimension_numbers = #tpu.dot_dimension_numbers<[1], [1], [0], [0], [0, 0, 1, 0], [], []>} : vector<8x32xbf16>, vector<8x32xbf16>, vector<8x8xf32> -> vector<8x8xf32>
    "tpu.trace_stop"() : () -> ()
    %62 = arith.addf %61, %16 : vector<8x8xf32>
    %cst_29 = arith.constant dense<0xFF800000> : vector<8xf32>
    %63 = vector.multi_reduction <maximumf>, %62, %cst_29 [1] : vector<8x8xf32> to vector<8xf32>
    %64 = vector.shape_cast %63 : vector<8xf32> to vector<8x1xf32>
    %65 = vector.broadcast %64 : vector<8x1xf32> to vector<8x8xf32>
    %66 = arith.subf %62, %65 : vector<8x8xf32>
    %67 = math.exp %66 : vector<8x8xf32>
    %cst_30 = arith.constant dense<0.000000e+00> : vector<8xf32>
    %68 = vector.multi_reduction <add>, %67, %cst_30 [1] : vector<8x8xf32> to vector<8xf32>
    %69 = vector.shape_cast %68 : vector<8xf32> to vector<8x1xf32>
    %70 = vector.broadcast %69 : vector<8x1xf32> to vector<8x8xf32>
    %71 = arith.divf %67, %70 : vector<8x8xf32>
    %72 = arith.truncf %71 : vector<8x8xf32> to vector<8x8xbf16>
    %73 = vector.extract_strided_slice %14 {offsets = [0, 64], sizes = [8, 32], strides = [1, 1]} : vector<8x128xf32> to vector<8x32xf32>
    %74 = arith.truncf %73 : vector<8x32xf32> to vector<8x32xbf16>
    %cst_31 = arith.constant dense<0.000000e+00> : vector<8x32xf32>
    %75 = tpu.matmul %72, %74, %cst_31 {dimension_numbers = #tpu.dot_dimension_numbers<[1], [0], [0], [1], [0, 0, 1, 1], [], []>} : vector<8x8xbf16>, vector<8x32xbf16>, vector<8x32xf32> -> vector<8x32xf32>
    %76 = vector.extract_strided_slice %12 {offsets = [0, 96], sizes = [8, 32], strides = [1, 1]} : vector<8x128xf32> to vector<8x32xf32>
    %77 = arith.truncf %76 : vector<8x32xf32> to vector<8x32xbf16>
    %78 = vector.extract_strided_slice %13 {offsets = [0, 96], sizes = [8, 32], strides = [1, 1]} : vector<8x128xf32> to vector<8x32xf32>
    %79 = arith.truncf %78 : vector<8x32xf32> to vector<8x32xbf16>
    "tpu.trace_start"() <{level = 10 : i32, message = "qe,ke->qk"}> : () -> ()
    %cst_32 = arith.constant dense<0.000000e+00> : vector<8x8xf32>
    %80 = tpu.matmul %77, %79, %cst_32 {dimension_numbers = #tpu.dot_dimension_numbers<[1], [1], [0], [0], [0, 0, 1, 0], [], []>} : vector<8x32xbf16>, vector<8x32xbf16>, vector<8x8xf32> -> vector<8x8xf32>
    "tpu.trace_stop"() : () -> ()
    %81 = arith.addf %80, %16 : vector<8x8xf32>
    %cst_33 = arith.constant dense<0xFF800000> : vector<8xf32>
    %82 = vector.multi_reduction <maximumf>, %81, %cst_33 [1] : vector<8x8xf32> to vector<8xf32>
    %83 = vector.shape_cast %82 : vector<8xf32> to vector<8x1xf32>
    %84 = vector.broadcast %83 : vector<8x1xf32> to vector<8x8xf32>
    %85 = arith.subf %81, %84 : vector<8x8xf32>
    %86 = math.exp %85 : vector<8x8xf32>
    %cst_34 = arith.constant dense<0.000000e+00> : vector<8xf32>
    %87 = vector.multi_reduction <add>, %86, %cst_34 [1] : vector<8x8xf32> to vector<8xf32>
    %88 = vector.shape_cast %87 : vector<8xf32> to vector<8x1xf32>
    %89 = vector.broadcast %88 : vector<8x1xf32> to vector<8x8xf32>
    %90 = arith.divf %86, %89 : vector<8x8xf32>
    %91 = arith.truncf %90 : vector<8x8xf32> to vector<8x8xbf16>
    %92 = vector.extract_strided_slice %14 {offsets = [0, 96], sizes = [8, 32], strides = [1, 1]} : vector<8x128xf32> to vector<8x32xf32>
    %93 = arith.truncf %92 : vector<8x32xf32> to vector<8x32xbf16>
    %cst_35 = arith.constant dense<0.000000e+00> : vector<8x32xf32>
    %94 = tpu.matmul %91, %93, %cst_35 {dimension_numbers = #tpu.dot_dimension_numbers<[1], [0], [0], [1], [0, 0, 1, 1], [], []>} : vector<8x8xbf16>, vector<8x32xbf16>, vector<8x32xf32> -> vector<8x32xf32>
    %95 = tpu.concatenate %37, %56, %75, %94 in 1 : vector<8x32xf32>, vector<8x32xf32>, vector<8x32xf32>, vector<8x32xf32> -> vector<8x128xf32>
    %96 = arith.truncf %95 : vector<8x128xf32> to vector<8x128xbf16>
    %cst_36 = arith.constant dense<0.000000e+00> : vector<8x128xf32>
    %97 = tpu.matmul %96, %17, %cst_36 {dimension_numbers = #tpu.dot_dimension_numbers<[1], [0], [0], [1], [0, 0, 1, 1], [], []>} : vector<8x128xbf16>, vector<128x128xbf16>, vector<8x128xf32> -> vector<8x128xf32>
    %98 = vector.broadcast %18 : vector<1x128xf32> to vector<8x128xf32>
    %99 = arith.addf %97, %98 : vector<8x128xf32>
    %100 = arith.addf %1, %99 : vector<8x128xf32>
    %101 = vector.extract_strided_slice %4 {offsets = [0, 0], sizes = [1, 128], strides = [1, 1]} : vector<3x128xf32> to vector<1x128xf32>
    %102 = vector.extract_strided_slice %5 {offsets = [0, 0], sizes = [1, 128], strides = [1, 1]} : vector<3x128xf32> to vector<1x128xf32>
    %cst_37 = arith.constant dense<0.000000e+00> : vector<8xf32>
    %103 = vector.multi_reduction <add>, %100, %cst_37 [1] : vector<8x128xf32> to vector<8xf32>
    %104 = vector.shape_cast %103 : vector<8xf32> to vector<8x1xf32>
    %cst_38 = arith.constant 3.125000e-02 : f32
    %105 = vector.broadcast %cst_38 : f32 to vector<8x1xf32>
    %106 = arith.mulf %104, %105 : vector<8x1xf32>
    %107 = vector.broadcast %106 : vector<8x1xf32> to vector<8x128xf32>
    %108 = arith.subf %100, %107 : vector<8x128xf32>
    %109 = arith.mulf %108, %108 : vector<8x128xf32>
    %cst_39 = arith.constant dense<0.000000e+00> : vector<8xf32>
    %110 = vector.multi_reduction <add>, %109, %cst_39 [1] : vector<8x128xf32> to vector<8xf32>
    %111 = vector.shape_cast %110 : vector<8xf32> to vector<8x1xf32>
    %cst_40 = arith.constant 9.600000e+01 : f32
    %112 = vector.broadcast %cst_40 : f32 to vector<8x1xf32>
    %113 = arith.mulf %112, %106 : vector<8x1xf32>
    %114 = arith.mulf %113, %106 : vector<8x1xf32>
    %115 = arith.subf %111, %114 : vector<8x1xf32>
    %cst_41 = arith.constant 3.125000e-02 : f32
    %116 = vector.broadcast %cst_41 : f32 to vector<8x1xf32>
    %117 = arith.mulf %115, %116 : vector<8x1xf32>
    %cst_42 = arith.constant 9.99999974E-6 : f32
    %118 = vector.broadcast %cst_42 : f32 to vector<8x1xf32>
    %119 = arith.addf %117, %118 : vector<8x1xf32>
    %120 = math.rsqrt %119 : vector<8x1xf32>
    %121 = vector.broadcast %120 : vector<8x1xf32> to vector<8x128xf32>
    %122 = arith.mulf %108, %121 : vector<8x128xf32>
    %123 = vector.broadcast %101 : vector<1x128xf32> to vector<8x128xf32>
    %124 = arith.mulf %122, %123 : vector<8x128xf32>
    %125 = vector.broadcast %102 : vector<1x128xf32> to vector<8x128xf32>
    %126 = arith.addf %124, %125 : vector<8x128xf32>
    %127 = arith.truncf %126 : vector<8x128xf32> to vector<8x128xbf16>
    %c0_43 = arith.constant 0 : index
    %c0_44 = arith.constant 0 : index
    %128 = vector.load %arg9[%c0_43, %c0_44] : memref<128x128xbf16, #tpu.memory_space<vmem>>, vector<128x128xbf16>
    %cst_45 = arith.constant dense<0.000000e+00> : vector<8x128xf32>
    %129 = tpu.matmul %127, %128, %cst_45 {dimension_numbers = #tpu.dot_dimension_numbers<[1], [0], [0], [1], [0, 0, 1, 1], [], []>} : vector<8x128xbf16>, vector<128x128xbf16>, vector<8x128xf32> -> vector<8x128xf32>
    %c0_46 = arith.constant 0 : index
    %c0_47 = arith.constant 0 : index
    %130 = vector.load %arg10[%c0_46, %c0_47] : memref<1x128xf32, #tpu.memory_space<vmem>>, vector<1x128xf32>
    %131 = vector.broadcast %130 : vector<1x128xf32> to vector<8x128xf32>
    %132 = arith.addf %129, %131 : vector<8x128xf32>
    %133 = arith.truncf %3 : vector<12x128xf32> to vector<12x128xbf16>
    %c0_48 = arith.constant 0 : index
    %c0_49 = arith.constant 0 : index
    %134 = vector.load %arg11[%c0_48, %c0_49] : memref<128x256xbf16, #tpu.memory_space<vmem>>, vector<128x256xbf16>
    %cst_50 = arith.constant dense<0.000000e+00> : vector<12x256xf32>
    %135 = tpu.matmul %133, %134, %cst_50 {dimension_numbers = #tpu.dot_dimension_numbers<[1], [0], [0], [1], [0, 0, 1, 1], [], []>} : vector<12x128xbf16>, vector<128x256xbf16>, vector<12x256xf32> -> vector<12x256xf32>
    %c0_51 = arith.constant 0 : index
    %c0_52 = arith.constant 0 : index
    %136 = vector.load %arg12[%c0_51, %c0_52] : memref<1x256xf32, #tpu.memory_space<vmem>>, vector<1x256xf32>
    %137 = vector.broadcast %136 : vector<1x256xf32> to vector<12x256xf32>
    %138 = arith.addf %135, %137 : vector<12x256xf32>
    %139 = vector.extract_strided_slice %138 {offsets = [0, 0], sizes = [12, 128], strides = [1, 1]} : vector<12x256xf32> to vector<12x128xf32>
    %140 = vector.extract_strided_slice %138 {offsets = [0, 128], sizes = [12, 128], strides = [1, 1]} : vector<12x256xf32> to vector<12x128xf32>
    %c0_53 = arith.constant 0 : index
    %c0_54 = arith.constant 0 : index
    %c0_55 = arith.constant 0 : index
    %141 = vector.load %arg4[%c0_53, %c0_54, %c0_55] : memref<1x8x12xf32, #tpu.memory_space<vmem>>, vector<1x8x12xf32>
    %142 = vector.shape_cast %141 : vector<1x8x12xf32> to vector<8x12xf32>
    %c0_56 = arith.constant 0 : index
    %c0_57 = arith.constant 0 : index
    %143 = vector.load %arg13[%c0_56, %c0_57] : memref<128x128xbf16, #tpu.memory_space<vmem>>, vector<128x128xbf16>
    %c0_58 = arith.constant 0 : index
    %c0_59 = arith.constant 0 : index
    %144 = vector.load %arg14[%c0_58, %c0_59] : memref<1x128xf32, #tpu.memory_space<vmem>>, vector<1x128xf32>
    %145 = vector.extract_strided_slice %132 {offsets = [0, 0], sizes = [8, 32], strides = [1, 1]} : vector<8x128xf32> to vector<8x32xf32>
    %146 = arith.truncf %145 : vector<8x32xf32> to vector<8x32xbf16>
    %147 = vector.extract_strided_slice %139 {offsets = [0, 0], sizes = [12, 32], strides = [1, 1]} : vector<12x128xf32> to vector<12x32xf32>
    %148 = arith.truncf %147 : vector<12x32xf32> to vector<12x32xbf16>
    "tpu.trace_start"() <{level = 10 : i32, message = "qe,ke->qk"}> : () -> ()
    %cst_60 = arith.constant dense<0.000000e+00> : vector<8x12xf32>
    %149 = tpu.matmul %146, %148, %cst_60 {dimension_numbers = #tpu.dot_dimension_numbers<[1], [1], [0], [0], [0, 0, 1, 0], [], []>} : vector<8x32xbf16>, vector<12x32xbf16>, vector<8x12xf32> -> vector<8x12xf32>
    "tpu.trace_stop"() : () -> ()
    %150 = arith.addf %149, %142 : vector<8x12xf32>
    %cst_61 = arith.constant dense<0xFF800000> : vector<8xf32>
    %151 = vector.multi_reduction <maximumf>, %150, %cst_61 [1] : vector<8x12xf32> to vector<8xf32>
    %152 = vector.shape_cast %151 : vector<8xf32> to vector<8x1xf32>
    %153 = vector.broadcast %152 : vector<8x1xf32> to vector<8x12xf32>
    %154 = arith.subf %150, %153 : vector<8x12xf32>
    %155 = math.exp %154 : vector<8x12xf32>
    %cst_62 = arith.constant dense<0.000000e+00> : vector<8xf32>
    %156 = vector.multi_reduction <add>, %155, %cst_62 [1] : vector<8x12xf32> to vector<8xf32>
    %157 = vector.shape_cast %156 : vector<8xf32> to vector<8x1xf32>
    %158 = vector.broadcast %157 : vector<8x1xf32> to vector<8x12xf32>
    %159 = arith.divf %155, %158 : vector<8x12xf32>
    %160 = arith.truncf %159 : vector<8x12xf32> to vector<8x12xbf16>
    %161 = vector.extract_strided_slice %140 {offsets = [0, 0], sizes = [12, 32], strides = [1, 1]} : vector<12x128xf32> to vector<12x32xf32>
    %162 = arith.truncf %161 : vector<12x32xf32> to vector<12x32xbf16>
    %cst_63 = arith.constant dense<0.000000e+00> : vector<8x32xf32>
    %163 = tpu.matmul %160, %162, %cst_63 {dimension_numbers = #tpu.dot_dimension_numbers<[1], [0], [0], [1], [0, 0, 1, 1], [], []>} : vector<8x12xbf16>, vector<12x32xbf16>, vector<8x32xf32> -> vector<8x32xf32>
    %164 = vector.extract_strided_slice %132 {offsets = [0, 32], sizes = [8, 32], strides = [1, 1]} : vector<8x128xf32> to vector<8x32xf32>
    %165 = arith.truncf %164 : vector<8x32xf32> to vector<8x32xbf16>
    %166 = vector.extract_strided_slice %139 {offsets = [0, 32], sizes = [12, 32], strides = [1, 1]} : vector<12x128xf32> to vector<12x32xf32>
    %167 = arith.truncf %166 : vector<12x32xf32> to vector<12x32xbf16>
    "tpu.trace_start"() <{level = 10 : i32, message = "qe,ke->qk"}> : () -> ()
    %cst_64 = arith.constant dense<0.000000e+00> : vector<8x12xf32>
    %168 = tpu.matmul %165, %167, %cst_64 {dimension_numbers = #tpu.dot_dimension_numbers<[1], [1], [0], [0], [0, 0, 1, 0], [], []>} : vector<8x32xbf16>, vector<12x32xbf16>, vector<8x12xf32> -> vector<8x12xf32>
    "tpu.trace_stop"() : () -> ()
    %169 = arith.addf %168, %142 : vector<8x12xf32>
    %cst_65 = arith.constant dense<0xFF800000> : vector<8xf32>
    %170 = vector.multi_reduction <maximumf>, %169, %cst_65 [1] : vector<8x12xf32> to vector<8xf32>
    %171 = vector.shape_cast %170 : vector<8xf32> to vector<8x1xf32>
    %172 = vector.broadcast %171 : vector<8x1xf32> to vector<8x12xf32>
    %173 = arith.subf %169, %172 : vector<8x12xf32>
    %174 = math.exp %173 : vector<8x12xf32>
    %cst_66 = arith.constant dense<0.000000e+00> : vector<8xf32>
    %175 = vector.multi_reduction <add>, %174, %cst_66 [1] : vector<8x12xf32> to vector<8xf32>
    %176 = vector.shape_cast %175 : vector<8xf32> to vector<8x1xf32>
    %177 = vector.broadcast %176 : vector<8x1xf32> to vector<8x12xf32>
    %178 = arith.divf %174, %177 : vector<8x12xf32>
    %179 = arith.truncf %178 : vector<8x12xf32> to vector<8x12xbf16>
    %180 = vector.extract_strided_slice %140 {offsets = [0, 32], sizes = [12, 32], strides = [1, 1]} : vector<12x128xf32> to vector<12x32xf32>
    %181 = arith.truncf %180 : vector<12x32xf32> to vector<12x32xbf16>
    %cst_67 = arith.constant dense<0.000000e+00> : vector<8x32xf32>
    %182 = tpu.matmul %179, %181, %cst_67 {dimension_numbers = #tpu.dot_dimension_numbers<[1], [0], [0], [1], [0, 0, 1, 1], [], []>} : vector<8x12xbf16>, vector<12x32xbf16>, vector<8x32xf32> -> vector<8x32xf32>
    %183 = vector.extract_strided_slice %132 {offsets = [0, 64], sizes = [8, 32], strides = [1, 1]} : vector<8x128xf32> to vector<8x32xf32>
    %184 = arith.truncf %183 : vector<8x32xf32> to vector<8x32xbf16>
    %185 = vector.extract_strided_slice %139 {offsets = [0, 64], sizes = [12, 32], strides = [1, 1]} : vector<12x128xf32> to vector<12x32xf32>
    %186 = arith.truncf %185 : vector<12x32xf32> to vector<12x32xbf16>
    "tpu.trace_start"() <{level = 10 : i32, message = "qe,ke->qk"}> : () -> ()
    %cst_68 = arith.constant dense<0.000000e+00> : vector<8x12xf32>
    %187 = tpu.matmul %184, %186, %cst_68 {dimension_numbers = #tpu.dot_dimension_numbers<[1], [1], [0], [0], [0, 0, 1, 0], [], []>} : vector<8x32xbf16>, vector<12x32xbf16>, vector<8x12xf32> -> vector<8x12xf32>
    "tpu.trace_stop"() : () -> ()
    %188 = arith.addf %187, %142 : vector<8x12xf32>
    %cst_69 = arith.constant dense<0xFF800000> : vector<8xf32>
    %189 = vector.multi_reduction <maximumf>, %188, %cst_69 [1] : vector<8x12xf32> to vector<8xf32>
    %190 = vector.shape_cast %189 : vector<8xf32> to vector<8x1xf32>
    %191 = vector.broadcast %190 : vector<8x1xf32> to vector<8x12xf32>
    %192 = arith.subf %188, %191 : vector<8x12xf32>
    %193 = math.exp %192 : vector<8x12xf32>
    %cst_70 = arith.constant dense<0.000000e+00> : vector<8xf32>
    %194 = vector.multi_reduction <add>, %193, %cst_70 [1] : vector<8x12xf32> to vector<8xf32>
    %195 = vector.shape_cast %194 : vector<8xf32> to vector<8x1xf32>
    %196 = vector.broadcast %195 : vector<8x1xf32> to vector<8x12xf32>
    %197 = arith.divf %193, %196 : vector<8x12xf32>
    %198 = arith.truncf %197 : vector<8x12xf32> to vector<8x12xbf16>
    %199 = vector.extract_strided_slice %140 {offsets = [0, 64], sizes = [12, 32], strides = [1, 1]} : vector<12x128xf32> to vector<12x32xf32>
    %200 = arith.truncf %199 : vector<12x32xf32> to vector<12x32xbf16>
    %cst_71 = arith.constant dense<0.000000e+00> : vector<8x32xf32>
    %201 = tpu.matmul %198, %200, %cst_71 {dimension_numbers = #tpu.dot_dimension_numbers<[1], [0], [0], [1], [0, 0, 1, 1], [], []>} : vector<8x12xbf16>, vector<12x32xbf16>, vector<8x32xf32> -> vector<8x32xf32>
    %202 = vector.extract_strided_slice %132 {offsets = [0, 96], sizes = [8, 32], strides = [1, 1]} : vector<8x128xf32> to vector<8x32xf32>
    %203 = arith.truncf %202 : vector<8x32xf32> to vector<8x32xbf16>
    %204 = vector.extract_strided_slice %139 {offsets = [0, 96], sizes = [12, 32], strides = [1, 1]} : vector<12x128xf32> to vector<12x32xf32>
    %205 = arith.truncf %204 : vector<12x32xf32> to vector<12x32xbf16>
    "tpu.trace_start"() <{level = 10 : i32, message = "qe,ke->qk"}> : () -> ()
    %cst_72 = arith.constant dense<0.000000e+00> : vector<8x12xf32>
    %206 = tpu.matmul %203, %205, %cst_72 {dimension_numbers = #tpu.dot_dimension_numbers<[1], [1], [0], [0], [0, 0, 1, 0], [], []>} : vector<8x32xbf16>, vector<12x32xbf16>, vector<8x12xf32> -> vector<8x12xf32>
    "tpu.trace_stop"() : () -> ()
    %207 = arith.addf %206, %142 : vector<8x12xf32>
    %cst_73 = arith.constant dense<0xFF800000> : vector<8xf32>
    %208 = vector.multi_reduction <maximumf>, %207, %cst_73 [1] : vector<8x12xf32> to vector<8xf32>
    %209 = vector.shape_cast %208 : vector<8xf32> to vector<8x1xf32>
    %210 = vector.broadcast %209 : vector<8x1xf32> to vector<8x12xf32>
    %211 = arith.subf %207, %210 : vector<8x12xf32>
    %212 = math.exp %211 : vector<8x12xf32>
    %cst_74 = arith.constant dense<0.000000e+00> : vector<8xf32>
    %213 = vector.multi_reduction <add>, %212, %cst_74 [1] : vector<8x12xf32> to vector<8xf32>
    %214 = vector.shape_cast %213 : vector<8xf32> to vector<8x1xf32>
    %215 = vector.broadcast %214 : vector<8x1xf32> to vector<8x12xf32>
    %216 = arith.divf %212, %215 : vector<8x12xf32>
    %217 = arith.truncf %216 : vector<8x12xf32> to vector<8x12xbf16>
    %218 = vector.extract_strided_slice %140 {offsets = [0, 96], sizes = [12, 32], strides = [1, 1]} : vector<12x128xf32> to vector<12x32xf32>
    %219 = arith.truncf %218 : vector<12x32xf32> to vector<12x32xbf16>
    %cst_75 = arith.constant dense<0.000000e+00> : vector<8x32xf32>
    %220 = tpu.matmul %217, %219, %cst_75 {dimension_numbers = #tpu.dot_dimension_numbers<[1], [0], [0], [1], [0, 0, 1, 1], [], []>} : vector<8x12xbf16>, vector<12x32xbf16>, vector<8x32xf32> -> vector<8x32xf32>
    %221 = tpu.concatenate %163, %182, %201, %220 in 1 : vector<8x32xf32>, vector<8x32xf32>, vector<8x32xf32>, vector<8x32xf32> -> vector<8x128xf32>
    %222 = arith.truncf %221 : vector<8x128xf32> to vector<8x128xbf16>
    %cst_76 = arith.constant dense<0.000000e+00> : vector<8x128xf32>
    %223 = tpu.matmul %222, %143, %cst_76 {dimension_numbers = #tpu.dot_dimension_numbers<[1], [0], [0], [1], [0, 0, 1, 1], [], []>} : vector<8x128xbf16>, vector<128x128xbf16>, vector<8x128xf32> -> vector<8x128xf32>
    %224 = vector.broadcast %144 : vector<1x128xf32> to vector<8x128xf32>
    %225 = arith.addf %223, %224 : vector<8x128xf32>
    %226 = arith.addf %126, %225 : vector<8x128xf32>
    %227 = vector.extract_strided_slice %4 {offsets = [1, 0], sizes = [1, 128], strides = [1, 1]} : vector<3x128xf32> to vector<1x128xf32>
    %228 = vector.extract_strided_slice %5 {offsets = [1, 0], sizes = [1, 128], strides = [1, 1]} : vector<3x128xf32> to vector<1x128xf32>
    %cst_77 = arith.constant dense<0.000000e+00> : vector<8xf32>
    %229 = vector.multi_reduction <add>, %226, %cst_77 [1] : vector<8x128xf32> to vector<8xf32>
    %230 = vector.shape_cast %229 : vector<8xf32> to vector<8x1xf32>
    %cst_78 = arith.constant 3.125000e-02 : f32
    %231 = vector.broadcast %cst_78 : f32 to vector<8x1xf32>
    %232 = arith.mulf %230, %231 : vector<8x1xf32>
    %233 = vector.broadcast %232 : vector<8x1xf32> to vector<8x128xf32>
    %234 = arith.subf %226, %233 : vector<8x128xf32>
    %235 = arith.mulf %234, %234 : vector<8x128xf32>
    %cst_79 = arith.constant dense<0.000000e+00> : vector<8xf32>
    %236 = vector.multi_reduction <add>, %235, %cst_79 [1] : vector<8x128xf32> to vector<8xf32>
    %237 = vector.shape_cast %236 : vector<8xf32> to vector<8x1xf32>
    %cst_80 = arith.constant 9.600000e+01 : f32
    %238 = vector.broadcast %cst_80 : f32 to vector<8x1xf32>
    %239 = arith.mulf %238, %232 : vector<8x1xf32>
    %240 = arith.mulf %239, %232 : vector<8x1xf32>
    %241 = arith.subf %237, %240 : vector<8x1xf32>
    %cst_81 = arith.constant 3.125000e-02 : f32
    %242 = vector.broadcast %cst_81 : f32 to vector<8x1xf32>
    %243 = arith.mulf %241, %242 : vector<8x1xf32>
    %cst_82 = arith.constant 9.99999974E-6 : f32
    %244 = vector.broadcast %cst_82 : f32 to vector<8x1xf32>
    %245 = arith.addf %243, %244 : vector<8x1xf32>
    %246 = math.rsqrt %245 : vector<8x1xf32>
    %247 = vector.broadcast %246 : vector<8x1xf32> to vector<8x128xf32>
    %248 = arith.mulf %234, %247 : vector<8x128xf32>
    %249 = vector.broadcast %227 : vector<1x128xf32> to vector<8x128xf32>
    %250 = arith.mulf %248, %249 : vector<8x128xf32>
    %251 = vector.broadcast %228 : vector<1x128xf32> to vector<8x128xf32>
    %252 = arith.addf %250, %251 : vector<8x128xf32>
    %253 = arith.truncf %252 : vector<8x128xf32> to vector<8x128xbf16>
    %c0_83 = arith.constant 0 : index
    %c0_84 = arith.constant 0 : index
    %254 = vector.load %arg17[%c0_83, %c0_84] : memref<128x128xbf16, #tpu.memory_space<vmem>>, vector<128x128xbf16>
    %cst_85 = arith.constant dense<0.000000e+00> : vector<8x128xf32>
    %255 = tpu.matmul %253, %254, %cst_85 {dimension_numbers = #tpu.dot_dimension_numbers<[1], [0], [0], [1], [0, 0, 1, 1], [], []>} : vector<8x128xbf16>, vector<128x128xbf16>, vector<8x128xf32> -> vector<8x128xf32>
    %c0_86 = arith.constant 0 : index
    %c0_87 = arith.constant 0 : index
    %256 = vector.load %arg18[%c0_86, %c0_87] : memref<1x128xf32, #tpu.memory_space<vmem>>, vector<1x128xf32>
    %257 = vector.broadcast %256 : vector<1x128xf32> to vector<8x128xf32>
    %258 = arith.addf %255, %257 : vector<8x128xf32>
    %cst_88 = arith.constant 0.000000e+00 : f32
    %259 = vector.broadcast %cst_88 : f32 to vector<8x128xf32>
    %260 = arith.maximumf %258, %259 : vector<8x128xf32>
    %261 = arith.truncf %260 : vector<8x128xf32> to vector<8x128xbf16>
    %c0_89 = arith.constant 0 : index
    %c0_90 = arith.constant 0 : index
    %262 = vector.load %arg19[%c0_89, %c0_90] : memref<128x128xbf16, #tpu.memory_space<vmem>>, vector<128x128xbf16>
    %cst_91 = arith.constant dense<0.000000e+00> : vector<8x128xf32>
    %263 = tpu.matmul %261, %262, %cst_91 {dimension_numbers = #tpu.dot_dimension_numbers<[1], [0], [0], [1], [0, 0, 1, 1], [], []>} : vector<8x128xbf16>, vector<128x128xbf16>, vector<8x128xf32> -> vector<8x128xf32>
    %c0_92 = arith.constant 0 : index
    %c0_93 = arith.constant 0 : index
    %264 = vector.load %arg20[%c0_92, %c0_93] : memref<1x128xf32, #tpu.memory_space<vmem>>, vector<1x128xf32>
    %265 = vector.broadcast %264 : vector<1x128xf32> to vector<8x128xf32>
    %266 = arith.addf %263, %265 : vector<8x128xf32>
    %267 = arith.addf %252, %266 : vector<8x128xf32>
    %268 = vector.extract_strided_slice %4 {offsets = [2, 0], sizes = [1, 128], strides = [1, 1]} : vector<3x128xf32> to vector<1x128xf32>
    %269 = vector.extract_strided_slice %5 {offsets = [2, 0], sizes = [1, 128], strides = [1, 1]} : vector<3x128xf32> to vector<1x128xf32>
    %cst_94 = arith.constant dense<0.000000e+00> : vector<8xf32>
    %270 = vector.multi_reduction <add>, %267, %cst_94 [1] : vector<8x128xf32> to vector<8xf32>
    %271 = vector.shape_cast %270 : vector<8xf32> to vector<8x1xf32>
    %cst_95 = arith.constant 3.125000e-02 : f32
    %272 = vector.broadcast %cst_95 : f32 to vector<8x1xf32>
    %273 = arith.mulf %271, %272 : vector<8x1xf32>
    %274 = vector.broadcast %273 : vector<8x1xf32> to vector<8x128xf32>
    %275 = arith.subf %267, %274 : vector<8x128xf32>
    %276 = arith.mulf %275, %275 : vector<8x128xf32>
    %cst_96 = arith.constant dense<0.000000e+00> : vector<8xf32>
    %277 = vector.multi_reduction <add>, %276, %cst_96 [1] : vector<8x128xf32> to vector<8xf32>
    %278 = vector.shape_cast %277 : vector<8xf32> to vector<8x1xf32>
    %cst_97 = arith.constant 9.600000e+01 : f32
    %279 = vector.broadcast %cst_97 : f32 to vector<8x1xf32>
    %280 = arith.mulf %279, %273 : vector<8x1xf32>
    %281 = arith.mulf %280, %273 : vector<8x1xf32>
    %282 = arith.subf %278, %281 : vector<8x1xf32>
    %cst_98 = arith.constant 3.125000e-02 : f32
    %283 = vector.broadcast %cst_98 : f32 to vector<8x1xf32>
    %284 = arith.mulf %282, %283 : vector<8x1xf32>
    %cst_99 = arith.constant 9.99999974E-6 : f32
    %285 = vector.broadcast %cst_99 : f32 to vector<8x1xf32>
    %286 = arith.addf %284, %285 : vector<8x1xf32>
    %287 = math.rsqrt %286 : vector<8x1xf32>
    %288 = vector.broadcast %287 : vector<8x1xf32> to vector<8x128xf32>
    %289 = arith.mulf %275, %288 : vector<8x128xf32>
    %290 = vector.broadcast %268 : vector<1x128xf32> to vector<8x128xf32>
    %291 = arith.mulf %289, %290 : vector<8x128xf32>
    %292 = vector.broadcast %269 : vector<1x128xf32> to vector<8x128xf32>
    %293 = arith.addf %291, %292 : vector<8x128xf32>
    %c0_100 = arith.constant 0 : index
    %c0_101 = arith.constant 0 : index
    %c0_102 = arith.constant 0 : index
    %294 = vector.load %arg21[%c0_100, %c0_101, %c0_102] : memref<1x8x128xf32, #tpu.memory_space<vmem>>, vector<1x8x128xf32>
    %295 = vector.shape_cast %294 : vector<1x8x128xf32> to vector<8x128xf32>
    %296 = vector.shape_cast %293 : vector<8x128xf32> to vector<1x8x128xf32>
    tpu.vector_store %arg21[%c0_100, %c0_101, %c0_102], %296 {strides = array<i32>} : memref<1x8x128xf32, #tpu.memory_space<vmem>>, vector<1x8x128xf32>,
    return
  }
  func.func @transform_0(%arg0: i32) -> (i32, i32, i32) {
    %c0_i32 = arith.constant 0 : i32
    %c0_i32_0 = arith.constant 0 : i32
    %c0_i32_1 = arith.constant 0 : i32
    return %arg0, %c0_i32, %c0_i32_0 : i32, i32, i32
  }
  func.func @transform_1(%arg0: i32) -> (i32, i32, i32) {
    %c0_i32 = arith.constant 0 : i32
    %c0_i32_0 = arith.constant 0 : i32
    %c0_i32_1 = arith.constant 0 : i32
    return %arg0, %c0_i32, %c0_i32_0 : i32, i32, i32
  }
  func.func @transform_2(%arg0: i32) -> (i32, i32, i32) {
    %c0_i32 = arith.constant 0 : i32
    %c0_i32_0 = arith.constant 0 : i32
    %c0_i32_1 = arith.constant 0 : i32
    return %arg0, %c0_i32, %c0_i32_0 : i32, i32, i32
  }
  func.func @transform_3(%arg0: i32) -> (i32, i32, i32) {
    %c0_i32 = arith.constant 0 : i32
    %c0_i32_0 = arith.constant 0 : i32
    %c0_i32_1 = arith.constant 0 : i32
    return %arg0, %c0_i32, %c0_i32_0 : i32, i32, i32
  }
  func.func @transform_4(%arg0: i32) -> (i32, i32) {
    %c0_i32 = arith.constant 0 : i32
    %c0_i32_0 = arith.constant 0 : i32
    %c0_i32_1 = arith.constant 0 : i32
    return %c0_i32, %c0_i32_0 : i32, i32
  }
  func.func @transform_5(%arg0: i32) -> (i32, i32) {
    %c0_i32 = arith.constant 0 : i32
    %c0_i32_0 = arith.constant 0 : i32
    %c0_i32_1 = arith.constant 0 : i32
    return %c0_i32, %c0_i32_0 : i32, i32
  }
  func.func @transform_6(%arg0: i32) -> (i32, i32) {
    %c0_i32 = arith.constant 0 : i32
    %c0_i32_0 = arith.constant 0 : i32
    %c0_i32_1 = arith.constant 0 : i32
    return %c0_i32, %c0_i32_0 : i32, i32
  }
  func.func @transform_7(%arg0: i32) -> (i32, i32) {
    %c0_i32 = arith.constant 0 : i32
    %c0_i32_0 = arith.constant 0 : i32
    %c0_i32_1 = arith.constant 0 : i32
    return %c0_i32, %c0_i32_0 : i32, i32
  }
  func.func @transform_8(%arg0: i32) -> (i32, i32) {
    %c0_i32 = arith.constant 0 : i32
    %c0_i32_0 = arith.constant 0 : i32
    %c0_i32_1 = arith.constant 0 : i32
    return %c0_i32, %c0_i32_0 : i32, i32
  }
  func.func @transform_9(%arg0: i32) -> (i32, i32) {
    %c0_i32 = arith.constant 0 : i32
    %c0_i32_0 = arith.constant 0 : i32
    %c0_i32_1 = arith.constant 0 : i32
    return %c0_i32, %c0_i32_0 : i32, i32
  }
  func.func @transform_10(%arg0: i32) -> (i32, i32) {
    %c0_i32 = arith.constant 0 : i32
    %c0_i32_0 = arith.constant 0 : i32
    %c0_i32_1 = arith.constant 0 : i32
    return %c0_i32, %c0_i32_0 : i32, i32
  }
  func.func @transform_11(%arg0: i32) -> (i32, i32) {
    %c0_i32 = arith.constant 0 : i32
    %c0_i32_0 = arith.constant 0 : i32
    %c0_i32_1 = arith.constant 0 : i32
    return %c0_i32, %c0_i32_0 : i32, i32
  }
  func.func @transform_12(%arg0: i32) -> (i32, i32) {
    %c0_i32 = arith.constant 0 : i32
    %c0_i32_0 = arith.constant 0 : i32
    %c0_i32_1 = arith.constant 0 : i32
    return %c0_i32, %c0_i32_0 : i32, i32
  }
  func.func @transform_13(%arg0: i32) -> (i32, i32) {
    %c0_i32 = arith.constant 0 : i32
    %c0_i32_0 = arith.constant 0 : i32
    %c0_i32_1 = arith.constant 0 : i32
    return %c0_i32, %c0_i32_0 : i32, i32
  }
  func.func @transform_14(%arg0: i32) -> (i32, i32) {
    %c0_i32 = arith.constant 0 : i32
    %c0_i32_0 = arith.constant 0 : i32
    %c0_i32_1 = arith.constant 0 : i32
    return %c0_i32, %c0_i32_0 : i32, i32
  }
  func.func @transform_15(%arg0: i32) -> (i32, i32) {
    %c0_i32 = arith.constant 0 : i32
    %c0_i32_0 = arith.constant 0 : i32
    %c0_i32_1 = arith.constant 0 : i32
    return %c0_i32, %c0_i32_0 : i32, i32
  }
  func.func @transform_16(%arg0: i32) -> (i32, i32) {
    %c0_i32 = arith.constant 0 : i32
    %c0_i32_0 = arith.constant 0 : i32
    %c0_i32_1 = arith.constant 0 : i32
    return %c0_i32, %c0_i32_0 : i32, i32
  }
  func.func @transform_17(%arg0: i32) -> (i32, i32) {
    %c0_i32 = arith.constant 0 : i32
    %c0_i32_0 = arith.constant 0 : i32
    %c0_i32_1 = arith.constant 0 : i32
    return %c0_i32, %c0_i32_0 : i32, i32
  }
  func.func @transform_18(%arg0: i32) -> (i32, i32) {
    %c0_i32 = arith.constant 0 : i32
    %c0_i32_0 = arith.constant 0 : i32
    %c0_i32_1 = arith.constant 0 : i32
    return %c0_i32, %c0_i32_0 : i32, i32
  }
  func.func @transform_19(%arg0: i32) -> (i32, i32) {
    %c0_i32 = arith.constant 0 : i32
    %c0_i32_0 = arith.constant 0 : i32
    %c0_i32_1 = arith.constant 0 : i32
    return %c0_i32, %c0_i32_0 : i32, i32
  }
  func.func @transform_20(%arg0: i32) -> (i32, i32, i32) {
    %c0_i32 = arith.constant 0 : i32
    %c0_i32_0 = arith.constant 0 : i32
    %c0_i32_1 = arith.constant 0 : i32
    return %arg0, %c0_i32, %c0_i32_0 : i32, i32, i32
  }
}

</mosaic_0001>

<llo_original>
// kernel: decoder_forward.1
$region0: #{decoder_forward.1}
  #allocation0 [shape = 'u32[]', space=smem, size = 0x4, offset = 0x4, fixed_abs, tag = 'smem constant byte address 0x4 - core index']
  #allocation1 [shape = 'u32[144,128]{1,0:T(1,128)}', space=vmem, size = 0x12000, scoped, tag = 'internal scratch']
  %s0 = inlined_call_operand.vmem [shape: f32[2,8,128], index: 0, kind: input, shape index: {}]
  %s1 = inlined_call_operand.vmem [shape: f32[2,12,128], index: 1, kind: input, shape index: {}]
  %s2 = inlined_call_operand.vmem [shape: f32[2,8,8], index: 2, kind: input, shape index: {}]
  %s3 = inlined_call_operand.vmem [shape: f32[2,8,12], index: 3, kind: input, shape index: {}]
  %s4 = inlined_call_operand.vmem [shape: bf16[128,384], index: 4, kind: input, shape index: {}]
  %s5 = inlined_call_operand.vmem [shape: f32[1,384], index: 5, kind: input, shape index: {}]
  %s6 = inlined_call_operand.vmem [shape: bf16[128,128], index: 6, kind: input, shape index: {}]
  %s7 = inlined_call_operand.vmem [shape: f32[1,128], index: 7, kind: input, shape index: {}]
  %s8 = inlined_call_operand.vmem [shape: bf16[128,128], index: 8, kind: input, shape index: {}]
  %s9 = inlined_call_operand.vmem [shape: f32[1,128], index: 9, kind: input, shape index: {}]
  %s10 = inlined_call_operand.vmem [shape: bf16[128,256], index: 10, kind: input, shape index: {}]
  %s11 = inlined_call_operand.vmem [shape: f32[1,256], index: 11, kind: input, shape index: {}]
  %s12 = inlined_call_operand.vmem [shape: bf16[128,128], index: 12, kind: input, shape index: {}]
  %s13 = inlined_call_operand.vmem [shape: f32[1,128], index: 13, kind: input, shape index: {}]
  %s14 = inlined_call_operand.vmem [shape: f32[3,128], index: 14, kind: input, shape index: {}]
  %s15 = inlined_call_operand.vmem [shape: f32[3,128], index: 15, kind: input, shape index: {}]
  %s16 = inlined_call_operand.vmem [shape: bf16[128,128], index: 16, kind: input, shape index: {}]
  %s17 = inlined_call_operand.vmem [shape: f32[1,128], index: 17, kind: input, shape index: {}]
  %s18 = inlined_call_operand.vmem [shape: bf16[128,128], index: 18, kind: input, shape index: {}]
  %s19 = inlined_call_operand.vmem [shape: f32[1,128], index: 19, kind: input, shape index: {}]
  %s20 = inlined_call_operand.hbm [shape: f32[2,8,128], index: 20, kind: output, shape index: {}]
  %s21 = sld [smem:[#allocation0]]
  $region113: #{decoder_forward.1} parent=0
    _
  %s23 = ssub.s32 1, %s21
  %s24 = scalar_select 0, %s23, %s21
  $region1: #{decoder_forward.1} parent=0
    #allocation2 [shape = 'u8[8192]{0}', space=vmem, size = 0x2000, scoped, tag = 'output window, operand 0']
    #allocation3 [shape = 's32[2]{0}', space=sflag, size = 0x8, scoped, tag = 'scoped memory for decoder_forward.1']
    %25 = vsyncpa [#allocation3], 0
    %s26 = scalar_lea.sflag [#allocation3], 1
    %27 = vsyncpa %s26, 0
    loop: start=0, step=1, limit=4
    $region2: #{decoder_forward.1} parent=1 // loop_pre_header
      _
    $region3: #{decoder_forward.1} parent=1 // loop_header
      %s29 = sphi 0, %s33
      %p30 = scmp.ge.s32.totalorder %s29, 4
      %s39 = sphi 0, %s41
      %s42 = sphi 0, %s39
      %s43 = sphi 0, %s42
      %s59 = sphi 0, %s43
      %s65 = sphi 0, %s67
      %s68 = sphi 0, %s65
      %s69 = sphi 0, %s68
      %s85 = sphi 0, %s69
      %s91 = sphi 0, %s93
      %s94 = sphi 0, %s91
      %s95 = sphi 0, %s94
      %s111 = sphi 0, %s95
      %s117 = sphi 0, %s119
      %s120 = sphi 0, %s117
      %s121 = sphi 0, %s120
      %s137 = sphi 0, %s121
      %s141 = sphi 0, %s141
      %s143 = sphi 0, %s141
      %s144 = sphi 0, %s143
      %s158 = sphi 0, %s144
      %s162 = sphi 0, %s162
      %s164 = sphi 0, %s162
      %s165 = sphi 0, %s164
      %s179 = sphi 0, %s165
      %s183 = sphi 0, %s183
      %s185 = sphi 0, %s183
      %s186 = sphi 0, %s185
      %s200 = sphi 0, %s186
      %s204 = sphi 0, %s204
      %s206 = sphi 0, %s204
      %s207 = sphi 0, %s206
      %s221 = sphi 0, %s207
      %s225 = sphi 0, %s225
      %s227 = sphi 0, %s225
      %s228 = sphi 0, %s227
      %s242 = sphi 0, %s228
      %s246 = sphi 0, %s246
      %s248 = sphi 0, %s246
      %s249 = sphi 0, %s248
      %s263 = sphi 0, %s249
      %s267 = sphi 0, %s267
      %s269 = sphi 0, %s267
      %s270 = sphi 0, %s269
      %s284 = sphi 0, %s270
      %s288 = sphi 0, %s288
      %s290 = sphi 0, %s288
      %s291 = sphi 0, %s290
      %s305 = sphi 0, %s291
      %s309 = sphi 0, %s309
      %s311 = sphi 0, %s309
      %s312 = sphi 0, %s311
      %s326 = sphi 0, %s312
      %s330 = sphi 0, %s330
      %s332 = sphi 0, %s330
      %s333 = sphi 0, %s332
      %s347 = sphi 0, %s333
      %s351 = sphi 0, %s351
      %s353 = sphi 0, %s351
      %s354 = sphi 0, %s353
      %s368 = sphi 0, %s354
      %s372 = sphi 0, %s372
      %s374 = sphi 0, %s372
      %s375 = sphi 0, %s374
      %s389 = sphi 0, %s375
      %s393 = sphi 0, %s393
      %s395 = sphi 0, %s393
      %s396 = sphi 0, %s395
      %s410 = sphi 0, %s396
      %s414 = sphi 0, %s414
      %s416 = sphi 0, %s414
      %s417 = sphi 0, %s416
      %s431 = sphi 0, %s417
      %s435 = sphi 0, %s435
      %s437 = sphi 0, %s435
      %s438 = sphi 0, %s437
      %s452 = sphi 0, %s438
      %s456 = sphi 0, %s456
      %s458 = sphi 0, %s456
      %s459 = sphi 0, %s458
      %s473 = sphi 0, %s459
      %s479 = sphi 0, %s481
      %s482 = sphi 0, %s479
      %s483 = sphi 0, %s482
      %s499 = sphi 0, %s483
    $region4: #{decoder_forward.1} parent=1 // loop_header_branch
      %32 = sbr.rel (%p30) target = $region8
    $region5: #{decoder_forward.1} parent=1 // loop_body
      %s34 = ssub.s32 %s29, 1
      %s35 = ssub.s32 %s29, 2
      %s36 = sadd.s32 %s29, 1
      %s37 = ssub.s32 %s29, %s36
      %p38 = scmp.eq.s32.totalorder %s37, 0
      %s40 = sadd.s32 %s39, 1
      %s41 = scalar_select %p38, %s39, %s40
      %p44 = pneg %p38
      %p45 = scmp.eq.s32.totalorder %s29, 1
      %p46 = por %p44, %p45
      %p47 = scmp.ne.s32.totalorder %s39, %s42
      %p48 = scmp.eq.s32.totalorder %s29, 0
      %p49 = por %p47, %p48
      %p50 = scmp.ne.s32.totalorder %s39, %s42
      %p51 = scmp.eq.s32.totalorder %s34, 1
      %p52 = por %p50, %p51
      %p53 = scmp.ne.s32.totalorder %s42, %s43
      %p54 = scmp.eq.s32.totalorder %s34, 0
      %p55 = por %p53, %p54
      %p56 = scmp.ne.s32.totalorder %s42, %s43
      %p57 = scmp.eq.s32.totalorder %s35, 1
      %p58 = por %p56, %p57
      %p60 = scmp.ne.s32.totalorder %s43, %s59
      %p61 = scmp.eq.s32.totalorder %s35, 0
      %p62 = por %p60, %p61
      %s63 = ssub.s32 %s29, %s36
      %p64 = scmp.eq.s32.totalorder %s63, 0
      %s66 = sadd.s32 %s65, 1
      %s67 = scalar_select %p64, %s65, %s66
      %p70 = pneg %p64
      %p71 = scmp.eq.s32.totalorder %s29, 1
      %p72 = por %p70, %p71
      %p73 = scmp.ne.s32.totalorder %s65, %s68
      %p74 = scmp.eq.s32.totalorder %s29, 0
      %p75 = por %p73, %p74
      %p76 = scmp.ne.s32.totalorder %s65, %s68
      %p77 = scmp.eq.s32.totalorder %s34, 1
      %p78 = por %p76, %p77
      %p79 = scmp.ne.s32.totalorder %s68, %s69
      %p80 = scmp.eq.s32.totalorder %s34, 0
      %p81 = por %p79, %p80
      %p82 = scmp.ne.s32.totalorder %s68, %s69
      %p83 = scmp.eq.s32.totalorder %s35, 1
      %p84 = por %p82, %p83
      %p86 = scmp.ne.s32.totalorder %s69, %s85
      %p87 = scmp.eq.s32.totalorder %s35, 0
      %p88 = por %p86, %p87
      %s89 = ssub.s32 %s29, %s36
      %p90 = scmp.eq.s32.totalorder %s89, 0
      %s92 = sadd.s32 %s91, 1
      %s93 = scalar_select %p90, %s91, %s92
      %p96 = pneg %p90
      %p97 = scmp.eq.s32.totalorder %s29, 1
      %p98 = por %p96, %p97
      %p99 = scmp.ne.s32.totalorder %s91, %s94
      %p100 = scmp.eq.s32.totalorder %s29, 0
      %p101 = por %p99, %p100
      %p102 = scmp.ne.s32.totalorder %s91, %s94
      %p103 = scmp.eq.s32.totalorder %s34, 1
      %p104 = por %p102, %p103
      %p105 = scmp.ne.s32.totalorder %s94, %s95
      %p106 = scmp.eq.s32.totalorder %s34, 0
      %p107 = por %p105, %p106
      %p108 = scmp.ne.s32.totalorder %s94, %s95
      %p109 = scmp.eq.s32.totalorder %s35, 1
      %p110 = por %p108, %p109
      %p112 = scmp.ne.s32.totalorder %s95, %s111
      %p113 = scmp.eq.s32.totalorder %s35, 0
      %p114 = por %p112, %p113
      %s115 = ssub.s32 %s29, %s36
      %p116 = scmp.eq.s32.totalorder %s115, 0
      %s118 = sadd.s32 %s117, 1
      %s119 = scalar_select %p116, %s117, %s118
      %p122 = pneg %p116
      %p123 = scmp.eq.s32.totalorder %s29, 1
      %p124 = por %p122, %p123
      %p125 = scmp.ne.s32.totalorder %s117, %s120
      %p126 = scmp.eq.s32.totalorder %s29, 0
      %p127 = por %p125, %p126
      %p128 = scmp.ne.s32.totalorder %s117, %s120
      %p129 = scmp.eq.s32.totalorder %s34, 1
      %p130 = por %p128, %p129
      %p131 = scmp.ne.s32.totalorder %s120, %s121
      %p132 = scmp.eq.s32.totalorder %s34, 0
      %p133 = por %p131, %p132
      %p134 = scmp.ne.s32.totalorder %s120, %s121
      %p135 = scmp.eq.s32.totalorder %s35, 1
      %p136 = por %p134, %p135
      %p138 = scmp.ne.s32.totalorder %s121, %s137
      %p139 = scmp.eq.s32.totalorder %s35, 0
      %p140 = por %p138, %p139
      %s142 = sadd.s32 %s141, 1
      %p145 = scmp.eq.s32.totalorder %s29, 1
      %p146 = scmp.ne.s32.totalorder %s141, %s143
      %p147 = scmp.eq.s32.totalorder %s29, 0
      %p148 = por %p146, %p147
      %p149 = scmp.ne.s32.totalorder %s141, %s143
      %p150 = scmp.eq.s32.totalorder %s34, 1
      %p151 = por %p149, %p150
      %p152 = scmp.ne.s32.totalorder %s143, %s144
      %p153 = scmp.eq.s32.totalorder %s34, 0
      %p154 = por %p152, %p153
      %p155 = scmp.ne.s32.totalorder %s143, %s144
      %p156 = scmp.eq.s32.totalorder %s35, 1
      %p157 = por %p155, %p156
      %p159 = scmp.ne.s32.totalorder %s144, %s158
      %p160 = scmp.eq.s32.totalorder %s35, 0
      %p161 = por %p159, %p160
      %s163 = sadd.s32 %s162, 1
      %p166 = scmp.eq.s32.totalorder %s29, 1
      %p167 = scmp.ne.s32.totalorder %s162, %s164
      %p168 = scmp.eq.s32.totalorder %s29, 0
      %p169 = por %p167, %p168
      %p170 = scmp.ne.s32.totalorder %s162, %s164
      %p171 = scmp.eq.s32.totalorder %s34, 1
      %p172 = por %p170, %p171
      %p173 = scmp.ne.s32.totalorder %s164, %s165
      %p174 = scmp.eq.s32.totalorder %s34, 0
      %p175 = por %p173, %p174
      %p176 = scmp.ne.s32.totalorder %s164, %s165
      %p177 = scmp.eq.s32.totalorder %s35, 1
      %p178 = por %p176, %p177
      %p180 = scmp.ne.s32.totalorder %s165, %s179
      %p181 = scmp.eq.s32.totalorder %s35, 0
      %p182 = por %p180, %p181
      %s184 = sadd.s32 %s183, 1
      %p187 = scmp.eq.s32.totalorder %s29, 1
      %p188 = scmp.ne.s32.totalorder %s183, %s185
      %p189 = scmp.eq.s32.totalorder %s29, 0
      %p190 = por %p188, %p189
      %p191 = scmp.ne.s32.totalorder %s183, %s185
      %p192 = scmp.eq.s32.totalorder %s34, 1
      %p193 = por %p191, %p192
      %p194 = scmp.ne.s32.totalorder %s185, %s186
      %p195 = scmp.eq.s32.totalorder %s34, 0
      %p196 = por %p194, %p195
      %p197 = scmp.ne.s32.totalorder %s185, %s186
      %p198 = scmp.eq.s32.totalorder %s35, 1
      %p199 = por %p197, %p198
      %p201 = scmp.ne.s32.totalorder %s186, %s200
      %p202 = scmp.eq.s32.totalorder %s35, 0
      %p203 = por %p201, %p202
      %s205 = sadd.s32 %s204, 1
      %p208 = scmp.eq.s32.totalorder %s29, 1
      %p209 = scmp.ne.s32.totalorder %s204, %s206
      %p210 = scmp.eq.s32.totalorder %s29, 0
      %p211 = por %p209, %p210
      %p212 = scmp.ne.s32.totalorder %s204, %s206
      %p213 = scmp.eq.s32.totalorder %s34, 1
      %p214 = por %p212, %p213
      %p215 = scmp.ne.s32.totalorder %s206, %s207
      %p216 = scmp.eq.s32.totalorder %s34, 0
      %p217 = por %p215, %p216
      %p218 = scmp.ne.s32.totalorder %s206, %s207
      %p219 = scmp.eq.s32.totalorder %s35, 1
      %p220 = por %p218, %p219
      %p222 = scmp.ne.s32.totalorder %s207, %s221
      %p223 = scmp.eq.s32.totalorder %s35, 0
      %p224 = por %p222, %p223
      %s226 = sadd.s32 %s225, 1
      %p229 = scmp.eq.s32.totalorder %s29, 1
      %p230 = scmp.ne.s32.totalorder %s225, %s227
      %p231 = scmp.eq.s32.totalorder %s29, 0
      %p232 = por %p230, %p231
      %p233 = scmp.ne.s32.totalorder %s225, %s227
      %p234 = scmp.eq.s32.totalorder %s34, 1
      %p235 = por %p233, %p234
      %p236 = scmp.ne.s32.totalorder %s227, %s228
      %p237 = scmp.eq.s32.totalorder %s34, 0
      %p238 = por %p236, %p237
      %p239 = scmp.ne.s32.totalorder %s227, %s228
      %p240 = scmp.eq.s32.totalorder %s35, 1
      %p241 = por %p239, %p240
      %p243 = scmp.ne.s32.totalorder %s228, %s242
      %p244 = scmp.eq.s32.totalorder %s35, 0
      %p245 = por %p243, %p244
      %s247 = sadd.s32 %s246, 1
      %p250 = scmp.eq.s32.totalorder %s29, 1
      %p251 = scmp.ne.s32.totalorder %s246, %s248
      %p252 = scmp.eq.s32.totalorder %s29, 0
      %p253 = por %p251, %p252
      %p254 = scmp.ne.s32.totalorder %s246, %s248
      %p255 = scmp.eq.s32.totalorder %s34, 1
      %p256 = por %p254, %p255
      %p257 = scmp.ne.s32.totalorder %s248, %s249
      %p258 = scmp.eq.s32.totalorder %s34, 0
      %p259 = por %p257, %p258
      %p260 = scmp.ne.s32.totalorder %s248, %s249
      %p261 = scmp.eq.s32.totalorder %s35, 1
      %p262 = por %p260, %p261
      %p264 = scmp.ne.s32.totalorder %s249, %s263
      %p265 = scmp.eq.s32.totalorder %s35, 0
      %p266 = por %p264, %p265
      %s268 = sadd.s32 %s267, 1
      %p271 = scmp.eq.s32.totalorder %s29, 1
      %p272 = scmp.ne.s32.totalorder %s267, %s269
      %p273 = scmp.eq.s32.totalorder %s29, 0
      %p274 = por %p272, %p273
      %p275 = scmp.ne.s32.totalorder %s267, %s269
      %p276 = scmp.eq.s32.totalorder %s34, 1
      %p277 = por %p275, %p276
      %p278 = scmp.ne.s32.totalorder %s269, %s270
      %p279 = scmp.eq.s32.totalorder %s34, 0
      %p280 = por %p278, %p279
      %p281 = scmp.ne.s32.totalorder %s269, %s270
      %p282 = scmp.eq.s32.totalorder %s35, 1
      %p283 = por %p281, %p282
      %p285 = scmp.ne.s32.totalorder %s270, %s284
      %p286 = scmp.eq.s32.totalorder %s35, 0
      %p287 = por %p285, %p286
      %s289 = sadd.s32 %s288, 1
      %p292 = scmp.eq.s32.totalorder %s29, 1
      %p293 = scmp.ne.s32.totalorder %s288, %s290
      %p294 = scmp.eq.s32.totalorder %s29, 0
      %p295 = por %p293, %p294
      %p296 = scmp.ne.s32.totalorder %s288, %s290
      %p297 = scmp.eq.s32.totalorder %s34, 1
      %p298 = por %p296, %p297
      %p299 = scmp.ne.s32.totalorder %s290, %s291
      %p300 = scmp.eq.s32.totalorder %s34, 0
      %p301 = por %p299, %p300
      %p302 = scmp.ne.s32.totalorder %s290, %s291
      %p303 = scmp.eq.s32.totalorder %s35, 1
      %p304 = por %p302, %p303
      %p306 = scmp.ne.s32.totalorder %s291, %s305
      %p307 = scmp.eq.s32.totalorder %s35, 0
      %p308 = por %p306, %p307
      %s310 = sadd.s32 %s309, 1
      %p313 = scmp.eq.s32.totalorder %s29, 1
      %p314 = scmp.ne.s32.totalorder %s309, %s311
      %p315 = scmp.eq.s32.totalorder %s29, 0
      %p316 = por %p314, %p315
      %p317 = scmp.ne.s32.totalorder %s309, %s311
      %p318 = scmp.eq.s32.totalorder %s34, 1
      %p319 = por %p317, %p318
      %p320 = scmp.ne.s32.totalorder %s311, %s312
      %p321 = scmp.eq.s32.totalorder %s34, 0
      %p322 = por %p320, %p321
      %p323 = scmp.ne.s32.totalorder %s311, %s312
      %p324 = scmp.eq.s32.totalorder %s35, 1
      %p325 = por %p323, %p324
      %p327 = scmp.ne.s32.totalorder %s312, %s326
      %p328 = scmp.eq.s32.totalorder %s35, 0
      %p329 = por %p327, %p328
      %s331 = sadd.s32 %s330, 1
      %p334 = scmp.eq.s32.totalorder %s29, 1
      %p335 = scmp.ne.s32.totalorder %s330, %s332
      %p336 = scmp.eq.s32.totalorder %s29, 0
      %p337 = por %p335, %p336
      %p338 = scmp.ne.s32.totalorder %s330, %s332
      %p339 = scmp.eq.s32.totalorder %s34, 1
      %p340 = por %p338, %p339
      %p341 = scmp.ne.s32.totalorder %s332, %s333
      %p342 = scmp.eq.s32.totalorder %s34, 0
      %p343 = por %p341, %p342
      %p344 = scmp.ne.s32.totalorder %s332, %s333
      %p345 = scmp.eq.s32.totalorder %s35, 1
      %p346 = por %p344, %p345
      %p348 = scmp.ne.s32.totalorder %s333, %s347
      %p349 = scmp.eq.s32.totalorder %s35, 0
      %p350 = por %p348, %p349
      %s352 = sadd.s32 %s351, 1
      %p355 = scmp.eq.s32.totalorder %s29, 1
      %p356 = scmp.ne.s32.totalorder %s351, %s353
      %p357 = scmp.eq.s32.totalorder %s29, 0
      %p358 = por %p356, %p357
      %p359 = scmp.ne.s32.totalorder %s351, %s353
      %p360 = scmp.eq.s32.totalorder %s34, 1
      %p361 = por %p359, %p360
      %p362 = scmp.ne.s32.totalorder %s353, %s354
      %p363 = scmp.eq.s32.totalorder %s34, 0
      %p364 = por %p362, %p363
      %p365 = scmp.ne.s32.totalorder %s353, %s354
      %p366 = scmp.eq.s32.totalorder %s35, 1
      %p367 = por %p365, %p366
      %p369 = scmp.ne.s32.totalorder %s354, %s368
      %p370 = scmp.eq.s32.totalorder %s35, 0
      %p371 = por %p369, %p370
      %s373 = sadd.s32 %s372, 1
      %p376 = scmp.eq.s32.totalorder %s29, 1
      %p377 = scmp.ne.s32.totalorder %s372, %s374
      %p378 = scmp.eq.s32.totalorder %s29, 0
      %p379 = por %p377, %p378
      %p380 = scmp.ne.s32.totalorder %s372, %s374
      %p381 = scmp.eq.s32.totalorder %s34, 1
      %p382 = por %p380, %p381
      %p383 = scmp.ne.s32.totalorder %s374, %s375
      %p384 = scmp.eq.s32.totalorder %s34, 0
      %p385 = por %p383, %p384
      %p386 = scmp.ne.s32.totalorder %s374, %s375
      %p387 = scmp.eq.s32.totalorder %s35, 1
      %p388 = por %p386, %p387
      %p390 = scmp.ne.s32.totalorder %s375, %s389
      %p391 = scmp.eq.s32.totalorder %s35, 0
      %p392 = por %p390, %p391
      %s394 = sadd.s32 %s393, 1
      %p397 = scmp.eq.s32.totalorder %s29, 1
      %p398 = scmp.ne.s32.totalorder %s393, %s395
      %p399 = scmp.eq.s32.totalorder %s29, 0
      %p400 = por %p398, %p399
      %p401 = scmp.ne.s32.totalorder %s393, %s395
      %p402 = scmp.eq.s32.totalorder %s34, 1
      %p403 = por %p401, %p402
      %p404 = scmp.ne.s32.totalorder %s395, %s396
      %p405 = scmp.eq.s32.totalorder %s34, 0
      %p406 = por %p404, %p405
      %p407 = scmp.ne.s32.totalorder %s395, %s396
      %p408 = scmp.eq.s32.totalorder %s35, 1
      %p409 = por %p407, %p408
      %p411 = scmp.ne.s32.totalorder %s396, %s410
      %p412 = scmp.eq.s32.totalorder %s35, 0
      %p413 = por %p411, %p412
      %s415 = sadd.s32 %s414, 1
      %p418 = scmp.eq.s32.totalorder %s29, 1
      %p419 = scmp.ne.s32.totalorder %s414, %s416
      %p420 = scmp.eq.s32.totalorder %s29, 0
      %p421 = por %p419, %p420
      %p422 = scmp.ne.s32.totalorder %s414, %s416
      %p423 = scmp.eq.s32.totalorder %s34, 1
      %p424 = por %p422, %p423
      %p425 = scmp.ne.s32.totalorder %s416, %s417
      %p426 = scmp.eq.s32.totalorder %s34, 0
      %p427 = por %p425, %p426
      %p428 = scmp.ne.s32.totalorder %s416, %s417
      %p429 = scmp.eq.s32.totalorder %s35, 1
      %p430 = por %p428, %p429
      %p432 = scmp.ne.s32.totalorder %s417, %s431
      %p433 = scmp.eq.s32.totalorder %s35, 0
      %p434 = por %p432, %p433
      %s436 = sadd.s32 %s435, 1
      %p439 = scmp.eq.s32.totalorder %s29, 1
      %p440 = scmp.ne.s32.totalorder %s435, %s437
      %p441 = scmp.eq.s32.totalorder %s29, 0
      %p442 = por %p440, %p441
      %p443 = scmp.ne.s32.totalorder %s435, %s437
      %p444 = scmp.eq.s32.totalorder %s34, 1
      %p445 = por %p443, %p444
      %p446 = scmp.ne.s32.totalorder %s437, %s438
      %p447 = scmp.eq.s32.totalorder %s34, 0
      %p448 = por %p446, %p447
      %p449 = scmp.ne.s32.totalorder %s437, %s438
      %p450 = scmp.eq.s32.totalorder %s35, 1
      %p451 = por %p449, %p450
      %p453 = scmp.ne.s32.totalorder %s438, %s452
      %p454 = scmp.eq.s32.totalorder %s35, 0
      %p455 = por %p453, %p454
      %s457 = sadd.s32 %s456, 1
      %p460 = scmp.eq.s32.totalorder %s29, 1
      %p461 = scmp.ne.s32.totalorder %s456, %s458
      %p462 = scmp.eq.s32.totalorder %s29, 0
      %p463 = por %p461, %p462
      %p464 = scmp.ne.s32.totalorder %s456, %s458
      %p465 = scmp.eq.s32.totalorder %s34, 1
      %p466 = por %p464, %p465
      %p467 = scmp.ne.s32.totalorder %s458, %s459
      %p468 = scmp.eq.s32.totalorder %s34, 0
      %p469 = por %p467, %p468
      %p470 = scmp.ne.s32.totalorder %s458, %s459
      %p471 = scmp.eq.s32.totalorder %s35, 1
      %p472 = por %p470, %p471
      %p474 = scmp.ne.s32.totalorder %s459, %s473
      %p475 = scmp.eq.s32.totalorder %s35, 0
      %p476 = por %p474, %p475
      %s477 = ssub.s32 %s29, %s36
      %p478 = scmp.eq.s32.totalorder %s477, 0
      %s480 = sadd.s32 %s479, 1
      %s481 = scalar_select %p478, %s479, %s480
      %p484 = pneg %p478
      %p485 = scmp.eq.s32.totalorder %s29, 1
      %p486 = por %p484, %p485
      %p487 = scmp.ne.s32.totalorder %s479, %s482
      %p488 = scmp.eq.s32.totalorder %s29, 0
      %p489 = por %p487, %p488
      %p490 = scmp.ne.s32.totalorder %s479, %s482
      %p491 = scmp.eq.s32.totalorder %s34, 1
      %p492 = por %p490, %p491
      %p493 = scmp.ne.s32.totalorder %s482, %s483
      %p494 = scmp.eq.s32.totalorder %s34, 0
      %p495 = por %p493, %p494
      %p496 = scmp.ne.s32.totalorder %s482, %s483
      %p497 = scmp.eq.s32.totalorder %s35, 1
      %p498 = por %p496, %p497
      %p500 = scmp.ne.s32.totalorder %s483, %s499
      %p501 = scmp.eq.s32.totalorder %s35, 0
      %p502 = por %p500, %p501
      %p503 = scmp.le.s32.totalorder 1, %s29
      %p504 = scmp.lt.s32.totalorder %s29, 3
      %p505 = pnand %p503, %p504
      %p506 = pneg %p505
      // Predicated region
      $region9: #{decoder_forward.1} parent=5 // pred_check
        _
      $region10: #{decoder_forward.1} parent=5 // pred_check_branch
        %508 = sbr.rel (%p505) target = $region12
      $region11: #{decoder_forward.1} parent=5 // pred_region
        %s509 = ssub.s32 %s29, 1
        // Predicated region
        $region13: #{decoder_forward.1} parent=11 // pred_check
          %p510 = pneg %p154
        $region14: #{decoder_forward.1} parent=11 // pred_check_branch
          %512 = sbr.rel (%p510) target = $region16
        $region15: #{decoder_forward.1} parent=11 // pred_region
          _
        $region16: #{decoder_forward.1} parent=11 // pred_fallthru
          _
        // Predicated region
        $region17: #{decoder_forward.1} parent=11 // pred_check
          %p513 = pneg %p175
        $region18: #{decoder_forward.1} parent=11 // pred_check_branch
          %515 = sbr.rel (%p513) target = $region20
        $region19: #{decoder_forward.1} parent=11 // pred_region
          _
        $region20: #{decoder_forward.1} parent=11 // pred_fallthru
          _
        // Predicated region
        $region21: #{decoder_forward.1} parent=11 // pred_check
          %p516 = pneg %p196
        $region22: #{decoder_forward.1} parent=11 // pred_check_branch
          %518 = sbr.rel (%p516) target = $region24
        $region23: #{decoder_forward.1} parent=11 // pred_region
          _
        $region24: #{decoder_forward.1} parent=11 // pred_fallthru
          _
        // Predicated region
        $region25: #{decoder_forward.1} parent=11 // pred_check
          %p519 = pneg %p217
        $region26: #{decoder_forward.1} parent=11 // pred_check_branch
          %521 = sbr.rel (%p519) target = $region28
        $region27: #{decoder_forward.1} parent=11 // pred_region
          _
        $region28: #{decoder_forward.1} parent=11 // pred_fallthru
          _
        // Predicated region
        $region29: #{decoder_forward.1} parent=11 // pred_check
          %p522 = pneg %p238
        $region30: #{decoder_forward.1} parent=11 // pred_check_branch
          %524 = sbr.rel (%p522) target = $region32
        $region31: #{decoder_forward.1} parent=11 // pred_region
          _
        $region32: #{decoder_forward.1} parent=11 // pred_fallthru
          _
        // Predicated region
        $region33: #{decoder_forward.1} parent=11 // pred_check
          %p525 = pneg %p259
        $region34: #{decoder_forward.1} parent=11 // pred_check_branch
          %527 = sbr.rel (%p525) target = $region36
        $region35: #{decoder_forward.1} parent=11 // pred_region
          _
        $region36: #{decoder_forward.1} parent=11 // pred_fallthru
          _
        // Predicated region
        $region37: #{decoder_forward.1} parent=11 // pred_check
          %p528 = pneg %p280
        $region38: #{decoder_forward.1} parent=11 // pred_check_branch
          %530 = sbr.rel (%p528) target = $region40
        $region39: #{decoder_forward.1} parent=11 // pred_region
          _
        $region40: #{decoder_forward.1} parent=11 // pred_fallthru
          _
        // Predicated region
        $region41: #{decoder_forward.1} parent=11 // pred_check
          %p531 = pneg %p301
        $region42: #{decoder_forward.1} parent=11 // pred_check_branch
          %533 = sbr.rel (%p531) target = $region44
        $region43: #{decoder_forward.1} parent=11 // pred_region
          _
        $region44: #{decoder_forward.1} parent=11 // pred_fallthru
          _
        // Predicated region
        $region45: #{decoder_forward.1} parent=11 // pred_check
          %p534 = pneg %p322
        $region46: #{decoder_forward.1} parent=11 // pred_check_branch
          %536 = sbr.rel (%p534) target = $region48
        $region47: #{decoder_forward.1} parent=11 // pred_region
          _
        $region48: #{decoder_forward.1} parent=11 // pred_fallthru
          _
        // Predicated region
        $region49: #{decoder_forward.1} parent=11 // pred_check
          %p537 = pneg %p343
        $region50: #{decoder_forward.1} parent=11 // pred_check_branch
          %539 = sbr.rel (%p537) target = $region52
        $region51: #{decoder_forward.1} parent=11 // pred_region
          _
        $region52: #{decoder_forward.1} parent=11 // pred_fallthru
          _
        // Predicated region
        $region53: #{decoder_forward.1} parent=11 // pred_check
          %p540 = pneg %p364
        $region54: #{decoder_forward.1} parent=11 // pred_check_branch
          %542 = sbr.rel (%p540) target = $region56
        $region55: #{decoder_forward.1} parent=11 // pred_region
          _
        $region56: #{decoder_forward.1} parent=11 // pred_fallthru
          _
        // Predicated region
        $region57: #{decoder_forward.1} parent=11 // pred_check
          %p543 = pneg %p385
        $region58: #{decoder_forward.1} parent=11 // pred_check_branch
          %545 = sbr.rel (%p543) target = $region60
        $region59: #{decoder_forward.1} parent=11 // pred_region
          _
        $region60: #{decoder_forward.1} parent=11 // pred_fallthru
          _
        // Predicated region
        $region61: #{decoder_forward.1} parent=11 // pred_check
          %p546 = pneg %p406
        $region62: #{decoder_forward.1} parent=11 // pred_check_branch
          %548 = sbr.rel (%p546) target = $region64
        $region63: #{decoder_forward.1} parent=11 // pred_region
          _
        $region64: #{decoder_forward.1} parent=11 // pred_fallthru
          _
        // Predicated region
        $region65: #{decoder_forward.1} parent=11 // pred_check
          %p549 = pneg %p427
        $region66: #{decoder_forward.1} parent=11 // pred_check_branch
          %551 = sbr.rel (%p549) target = $region68
        $region67: #{decoder_forward.1} parent=11 // pred_region
          _
        $region68: #{decoder_forward.1} parent=11 // pred_fallthru
          _
        // Predicated region
        $region69: #{decoder_forward.1} parent=11 // pred_check
          %p552 = pneg %p448
        $region70: #{decoder_forward.1} parent=11 // pred_check_branch
          %554 = sbr.rel (%p552) target = $region72
        $region71: #{decoder_forward.1} parent=11 // pred_region
          _
        $region72: #{decoder_forward.1} parent=11 // pred_fallthru
          _
        // Predicated region
        $region73: #{decoder_forward.1} parent=11 // pred_check
          %p555 = pneg %p469
        $region74: #{decoder_forward.1} parent=11 // pred_check_branch
          %557 = sbr.rel (%p555) target = $region76
        $region75: #{decoder_forward.1} parent=11 // pred_region
          _
        $region76: #{decoder_forward.1} parent=11 // pred_fallthru
          _
      $region12: #{decoder_forward.1} parent=5 // pred_fallthru
        _
      %p558 = scmp.lt.s32.totalorder %s29, 2
      // Predicated region
      $region77: #{decoder_forward.1} parent=5 // pred_check
        %p559 = pneg %p558
      $region78: #{decoder_forward.1} parent=5 // pred_check_branch
        %561 = sbr.rel (%p559) target = $region80
      $region79: #{decoder_forward.1} parent=5 // pred_region
        // Predicated region
        $region81: #{decoder_forward.1} parent=79 // pred_check
          %p562 = pneg %p49
        $region82: #{decoder_forward.1} parent=79 // pred_check_branch
          %564 = sbr.rel (%p562) target = $region84
        $region83: #{decoder_forward.1} parent=79 // pred_region
          %p565 = scmp.lt.s32.totalorder %s29, 1
          %s566 = scalar_select %p565, %s29, 1
          %s567 = smul.addr %s566, 8
          %s568 = scalar_lea.vmem %s0, %s567
        $region84: #{decoder_forward.1} parent=79 // pred_fallthru
          _
        // Predicated region
        $region85: #{decoder_forward.1} parent=79 // pred_check
          %p569 = pneg %p75
        $region86: #{decoder_forward.1} parent=79 // pred_check_branch
          %571 = sbr.rel (%p569) target = $region88
        $region87: #{decoder_forward.1} parent=79 // pred_region
          %p572 = scmp.lt.s32.totalorder %s29, 1
          %s573 = scalar_select %p572, %s29, 1
          %s574 = smul.addr %s573, 2
          %s575 = smul.addr %s574, 8
          %s576 = scalar_lea.vmem %s1, %s575
        $region88: #{decoder_forward.1} parent=79 // pred_fallthru
          _
        // Predicated region
        $region89: #{decoder_forward.1} parent=79 // pred_check
          %p577 = pneg %p101
        $region90: #{decoder_forward.1} parent=79 // pred_check_branch
          %579 = sbr.rel (%p577) target = $region92
        $region91: #{decoder_forward.1} parent=79 // pred_region
          %p580 = scmp.lt.s32.totalorder %s29, 1
          %s581 = scalar_select %p580, %s29, 1
          %s582 = smul.addr %s581, 8
          %s583 = scalar_lea.vmem %s2, %s582
        $region92: #{decoder_forward.1} parent=79 // pred_fallthru
          _
        // Predicated region
        $region93: #{decoder_forward.1} parent=79 // pred_check
          %p584 = pneg %p127
        $region94: #{decoder_forward.1} parent=79 // pred_check_branch
          %586 = sbr.rel (%p584) target = $region96
        $region95: #{decoder_forward.1} parent=79 // pred_region
          %p587 = scmp.lt.s32.totalorder %s29, 1
          %s588 = scalar_select %p587, %s29, 1
          %s589 = smul.addr %s588, 8
          %s590 = scalar_lea.vmem %s3, %s589
        $region96: #{decoder_forward.1} parent=79 // pred_fallthru
          _
      $region80: #{decoder_forward.1} parent=5 // pred_fallthru
        _
      %p591 = scmp.le.s32.totalorder 1, %s29
      %p592 = scmp.lt.s32.totalorder %s29, 3
      %p593 = pnand %p591, %p592
      %p594 = pneg %p593
      // Predicated region
      $region97: #{decoder_forward.1} parent=5 // pred_check
        _
      $region98: #{decoder_forward.1} parent=5 // pred_check_branch
        %596 = sbr.rel (%p593) target = $region100
      $region99: #{decoder_forward.1} parent=5 // pred_region
        %s597 = ssub.s32 %s29, 1
        %p598 = scmp.lt.s32.totalorder %s34, 1
        %s599 = scalar_select %p598, %s34, 1
        %s600 = smul.addr %s599, 8
        %s601 = scalar_lea.vmem %s0, %s600
        %p602 = pneg %p55
        %p603 = pneg %p52
        %p604 = scmp.lt.s32.totalorder %s34, 1
        %s605 = scalar_select %p604, %s34, 1
        %s606 = smul.addr %s605, 2
        %s607 = smul.addr %s606, 8
        %s608 = scalar_lea.vmem %s1, %s607
        %p609 = pneg %p81
        %p610 = pneg %p78
        %p611 = scmp.lt.s32.totalorder %s34, 1
        %s612 = scalar_select %p611, %s34, 1
        %s613 = smul.addr %s612, 8
        %s614 = scalar_lea.vmem %s2, %s613
        %p615 = pneg %p107
        %p616 = pneg %p104
        %p617 = scmp.lt.s32.totalorder %s34, 1
        %s618 = scalar_select %p617, %s34, 1
        %s619 = smul.addr %s618, 8
        %s620 = scalar_lea.vmem %s3, %s619
        %p621 = pneg %p133
        %p622 = pneg %p130
        %p623 = pneg %p154
        %p624 = pneg %p151
        %p625 = pneg %p175
        %p626 = pneg %p172
        %p627 = pneg %p196
        %p628 = pneg %p193
        %p629 = pneg %p217
        %p630 = pneg %p214
        %p631 = pneg %p238
        %p632 = pneg %p235
        %p633 = pneg %p259
        %p634 = pneg %p256
        %p635 = pneg %p280
        %p636 = pneg %p277
        %p637 = pneg %p301
        %p638 = pneg %p298
        %p639 = pneg %p322
        %p640 = pneg %p319
        %p641 = pneg %p343
        %p642 = pneg %p340
        %p643 = pneg %p364
        %p644 = pneg %p361
        %p645 = pneg %p385
        %p646 = pneg %p382
        %p647 = pneg %p406
        %p648 = pneg %p403
        %p649 = pneg %p427
        %p650 = pneg %p424
        %p651 = pneg %p448
        %p652 = pneg %p445
        %p653 = pneg %p469
        %p654 = pneg %p466
        %p655 = pneg %p495
        %p656 = pneg %p492
        %s657 = sand.u32 %s482, 1
        %s658 = scalar_lea.sflag [#allocation3], %s657
        %s659 = sand.u32 %s482, 1
        %s660 = smul.addr %s659, 8
        %s661 = scalar_lea.vmem [#allocation2], %s660
        %p662 = scmp.lt.s32.totalorder %s34, 1
        %s663 = scalar_select %p662, %s34, 1
        %s664 = smul.addr %s663, 8
        %s665 = scalar_lea.vmem %s0, %s664
        %p666 = scmp.lt.s32.totalorder %s34, 1
        %s667 = scalar_select %p666, %s34, 1
        %s668 = smul.addr %s667, 2
        %s669 = smul.addr %s668, 8
        %s670 = scalar_lea.vmem %s1, %s669
        %p671 = scmp.lt.s32.totalorder %s34, 1
        %s672 = scalar_select %p671, %s34, 1
        %s673 = smul.addr %s672, 8
        %s674 = scalar_lea.vmem %s2, %s673
        %p675 = scmp.lt.s32.totalorder %s34, 1
        %s676 = scalar_select %p675, %s34, 1
        %s677 = smul.addr %s676, 8
        %s678 = scalar_lea.vmem %s3, %s677
        %v680 = vld [vmem:[%s665] sm:$0xff]
        %v681 = vld [vmem:[%s670] sm:$0xff]
        %v682 = vld [vmem:[%s670 + $0x8] sm:$0xf]
        %v683 = vld [vmem:[%s14] sm:$0x7]
        %v684 = vld [vmem:[%s15] sm:$0x7]
        %v685 = vpack.c.bf16 %v680, %v680
        %v686 = vld [vmem:[%s4] sm:$0xff]
        %v687 = vld [vmem:[%s4 + $0x8] sm:$0xf]
        %v688 = vld [vmem:[%s4 + $0xc] sm:$0xff]
        %v689 = vld [vmem:[%s4 + $0x14] sm:$0xf]
        %v690 = vld [vmem:[%s4 + $0x18] sm:$0xff]
        %v691 = vld [vmem:[%s4 + $0x20] sm:$0xf]
        %v692 = vld [vmem:[%s4 + $0x24] sm:$0xff]
        %v693 = vld [vmem:[%s4 + $0x2c] sm:$0xf]
        %v694 = vld [vmem:[%s4 + $0x30] sm:$0xff]
        %v695 = vld [vmem:[%s4 + $0x38] sm:$0xf]
        %v696 = vld [vmem:[%s4 + $0x3c] sm:$0xff]
        %v697 = vld [vmem:[%s4 + $0x44] sm:$0xf]
        %v698 = vld [vmem:[%s4 + $0x48] sm:$0xff]
        %v699 = vld [vmem:[%s4 + $0x50] sm:$0xf]
        %v700 = vld [vmem:[%s4 + $0x54] sm:$0xff]
        %v701 = vld [vmem:[%s4 + $0x5c] sm:$0xf]
        %v702 = vld [vmem:[%s4 + $0x60] sm:$0xff]
        %v703 = vld [vmem:[%s4 + $0x68] sm:$0xf]
        %v704 = vld [vmem:[%s4 + $0x6c] sm:$0xff]
        %v705 = vld [vmem:[%s4 + $0x74] sm:$0xf]
        %v706 = vld [vmem:[%s4 + $0x78] sm:$0xff]
        %v707 = vld [vmem:[%s4 + $0x80] sm:$0xf]
        %v708 = vld [vmem:[%s4 + $0x84] sm:$0xff]
        %v709 = vld [vmem:[%s4 + $0x8c] sm:$0xf]
        %v710 = vld [vmem:[%s4 + $0x90] sm:$0xff]
        %v711 = vld [vmem:[%s4 + $0x98] sm:$0xf]
        %v712 = vld [vmem:[%s4 + $0x9c] sm:$0xff]
        %v713 = vld [vmem:[%s4 + $0xa4] sm:$0xf]
        %v714 = vld [vmem:[%s4 + $0xa8] sm:$0xff]
        %v715 = vld [vmem:[%s4 + $0xb0] sm:$0xf]
        %v716 = vld [vmem:[%s4 + $0xb4] sm:$0xff]
        %v717 = vld [vmem:[%s4 + $0xbc] sm:$0xf]
        %v718 = vld [vmem:[%s5] sm:$0x7]
        %v720 = vlaneseq
        %v721 = vshrl.u32 %v720, 7
        %v722 = vsub.s32 0, %v721
        %v723 = vrot.slane %v718, %v722
        %v724 = vlaneseq
        %v725 = vshrl.u32 %v724, 7
        %v726 = vsub.s32 1, %v725
        %v727 = vrot.slane %v718, %v726
        %v728 = vlaneseq
        %v729 = vshrl.u32 %v728, 7
        %v730 = vsub.s32 2, %v729
        %v731 = vrot.slane %v718, %v730
        %v767 = vunpack.c.l.b16 %v686
        %v768 = vunpack.c.h.b16 %v686
        %v769 = vunpack.c.l.b16 %v687
        %v770 = vunpack.c.l.b16 %v688
        %v771 = vunpack.c.h.b16 %v688
        %v772 = vunpack.c.l.b16 %v689
        %v773 = vunpack.c.l.b16 %v690
        %v774 = vunpack.c.h.b16 %v690
        %v775 = vunpack.c.l.b16 %v691
        %v776 = vunpack.c.l.b16 %v692
        %v777 = vunpack.c.h.b16 %v692
        %v778 = vunpack.c.l.b16 %v693
        %v779 = vunpack.c.l.b16 %v694
        %v780 = vunpack.c.h.b16 %v694
        %v781 = vunpack.c.l.b16 %v695
        %v782 = vunpack.c.l.b16 %v696
        %v783 = vunpack.c.h.b16 %v696
        %v784 = vunpack.c.l.b16 %v697
        %v785 = vunpack.c.l.b16 %v698
        %v786 = vunpack.c.h.b16 %v698
        %v787 = vunpack.c.l.b16 %v699
        %v788 = vunpack.c.l.b16 %v700
        %v789 = vunpack.c.h.b16 %v700
        %v790 = vunpack.c.l.b16 %v701
        %v791 = vunpack.c.l.b16 %v702
        %v792 = vunpack.c.h.b16 %v702
        %v793 = vunpack.c.l.b16 %v703
        %v794 = vunpack.c.l.b16 %v704
        %v795 = vunpack.c.h.b16 %v704
        %v796 = vunpack.c.l.b16 %v705
        %v797 = vunpack.c.l.b16 %v706
        %v798 = vunpack.c.h.b16 %v706
        %v799 = vunpack.c.l.b16 %v707
        %v800 = vunpack.c.l.b16 %v708
        %v801 = vunpack.c.h.b16 %v708
        %v802 = vunpack.c.l.b16 %v709
        %v803 = vunpack.c.l.b16 %v710
        %v804 = vunpack.c.h.b16 %v710
        %v805 = vunpack.c.l.b16 %v711
        %v806 = vunpack.c.l.b16 %v712
        %v807 = vunpack.c.h.b16 %v712
        %v808 = vunpack.c.l.b16 %v713
        %v809 = vunpack.c.l.b16 %v714
        %v810 = vunpack.c.h.b16 %v714
        %v811 = vunpack.c.l.b16 %v715
        %v812 = vunpack.c.l.b16 %v716
        %v813 = vunpack.c.h.b16 %v716
        %v814 = vunpack.c.l.b16 %v717
        %v815 = vpack.c.b16 %v770, %v767
        %v816 = vpack.c.b16 %v771, %v768
        %v817 = vpack.c.b16 %v772, %v769
        %v818 = vpack.c.b16 %v776, %v773
        %v819 = vpack.c.b16 %v777, %v774
        %v820 = vpack.c.b16 %v778, %v775
        %v821 = vpack.c.b16 %v782, %v779
        %v822 = vpack.c.b16 %v783, %v780
        %v823 = vpack.c.b16 %v784, %v781
        %v824 = vpack.c.b16 %v788, %v785
        %v825 = vpack.c.b16 %v789, %v786
        %v826 = vpack.c.b16 %v790, %v787
        %v827 = vpack.c.b16 %v794, %v791
        %v828 = vpack.c.b16 %v795, %v792
        %v829 = vpack.c.b16 %v796, %v793
        %v830 = vpack.c.b16 %v800, %v797
        %v831 = vpack.c.b16 %v801, %v798
        %v832 = vpack.c.b16 %v802, %v799
        %v833 = vpack.c.b16 %v806, %v803
        %v834 = vpack.c.b16 %v807, %v804
        %v835 = vpack.c.b16 %v808, %v805
        %v836 = vpack.c.b16 %v812, %v809
        %v837 = vpack.c.b16 %v813, %v810
        %v838 = vpack.c.b16 %v814, %v811
        %863 = vmatprep.subr.bf16.mxu0 %v816
        %864 = vmatpush1.bf16.msra.mxu0 %v815
        %865 = vmatprep.subr.bf16.mxu0 %v819
        %866 = vmatpush1.bf16.msra.mxu0 %v818
        %867 = vmatprep.subr.bf16.mxu0 %v822
        %868 = vmatpush1.bf16.msra.mxu0 %v821
        %869 = vmatprep.subr.bf16.mxu0 %v825
        %870 = vmatpush1.bf16.msra.mxu0 %v824
        %871 = vmatprep.subr.bf16.mxu0 %v828
        %872 = vmatpush1.bf16.msra.mxu0 %v827
        %873 = vmatprep.subr.bf16.mxu0 %v831
        %874 = vmatpush1.bf16.msra.mxu0 %v830
        %875 = vmatprep.subr.bf16.mxu0 %v834
        %876 = vmatpush1.bf16.msra.mxu0 %v833
        %877 = vmatprep.subr.bf16.mxu0 %v837
        %878 = vmatpush1.bf16.msra.mxu0 %v836
        %879 = vmatprep.subr.bf16.mxu0 0
        %880 = vmatpush1.bf16.msra.mxu0 0
        %881 = vmatprep.subr.bf16.mxu0 0
        %882 = vmatpush1.bf16.msra.mxu0 0
        %883 = vmatprep.subr.bf16.mxu0 0
        %884 = vmatpush1.bf16.msra.mxu0 0
        %885 = vmatprep.subr.bf16.mxu0 0
        %886 = vmatpush1.bf16.msra.mxu0 0
        %887 = vmatprep.subr.bf16.mxu0 0
        %888 = vmatpush1.bf16.msra.mxu0 0
        %889 = vmatprep.subr.bf16.mxu0 0
        %890 = vmatpush1.bf16.msra.mxu0 0
        %891 = vmatprep.subr.bf16.mxu0 0
        %892 = vmatpush1.bf16.msra.mxu0 0
        %893 = vmatprep.subr.bf16.mxu0 0
        %894 = vmatpush1.bf16.msra.mxu0 0
        %895 = vmatprep.mubr.bf16.mxu0 0
        %896 = vmatmul.mubr.bf16.gmra.mrb[0].mxu0 %v685
        %v897 = vpop.f32.mrb[0].mxu0
        %v898 = vadd.f32 %v723, %v897
        %v899 = vpop.f32.mrb[0].mxu0
        %v900 = vadd.f32 %v727, %v899
        %v901 = vpop.f32.mrb[0].mxu0
        %v902 = vpop.f32.mrb[0].mxu0
        %903 = vdwg.mxu0
        %904 = vmatprep.subr.bf16.mxu0 0
        %905 = vmatpush1.bf16.msra.mxu0 %v817
        %906 = vmatprep.subr.bf16.mxu0 0
        %907 = vmatpush1.bf16.msra.mxu0 %v820
        %908 = vmatprep.subr.bf16.mxu0 0
        %909 = vmatpush1.bf16.msra.mxu0 %v823
        %910 = vmatprep.subr.bf16.mxu0 0
        %911 = vmatpush1.bf16.msra.mxu0 %v826
        %912 = vmatprep.subr.bf16.mxu0 0
        %913 = vmatpush1.bf16.msra.mxu0 %v829
        %914 = vmatprep.subr.bf16.mxu0 0
        %915 = vmatpush1.bf16.msra.mxu0 %v832
        %916 = vmatprep.subr.bf16.mxu0 0
        %917 = vmatpush1.bf16.msra.mxu0 %v835
        %918 = vmatprep.subr.bf16.mxu0 0
        %919 = vmatpush1.bf16.msra.mxu0 %v838
        %920 = vmatprep.subr.bf16.mxu0 0
        %921 = vmatpush1.bf16.msra.mxu0 0
        %922 = vmatprep.subr.bf16.mxu0 0
        %923 = vmatpush1.bf16.msra.mxu0 0
        %924 = vmatprep.subr.bf16.mxu0 0
        %925 = vmatpush1.bf16.msra.mxu0 0
        %926 = vmatprep.subr.bf16.mxu0 0
        %927 = vmatpush1.bf16.msra.mxu0 0
        %928 = vmatprep.subr.bf16.mxu0 0
        %929 = vmatpush1.bf16.msra.mxu0 0
        %930 = vmatprep.subr.bf16.mxu0 0
        %931 = vmatpush1.bf16.msra.mxu0 0
        %932 = vmatprep.subr.bf16.mxu0 0
        %933 = vmatpush1.bf16.msra.mxu0 0
        %934 = vmatprep.subr.bf16.mxu0 0
        %935 = vmatpush1.bf16.msra.mxu0 0
        %936 = vmatprep.mubr.bf16.mxu0 0
        %937 = vmatmul.mubr.bf16.gmra.mrb[0].mxu0 %v685
        %v938 = vpop.f32.mrb[0].mxu0
        %v939 = vadd.f32 %v731, %v938
        %v940 = vpop.f32.mrb[0].mxu0
        %v941 = vpop.f32.mrb[0].mxu0
        %v942 = vpop.f32.mrb[0].mxu0
        %943 = vdwg.mxu0
        %v944 = vld [vmem:[%s674] sm:$0xff]
        %v945 = vld [vmem:[%s6] sm:$0xf]
        %v946 = vld [vmem:[%s6 + $0x4] sm:$0xf]
        %v947 = vld [vmem:[%s6 + $0x8] sm:$0xf]
        %v948 = vld [vmem:[%s6 + $0xc] sm:$0xf]
        %v949 = vld [vmem:[%s6 + $0x10] sm:$0xf]
        %v950 = vld [vmem:[%s6 + $0x14] sm:$0xf]
        %v951 = vld [vmem:[%s6 + $0x18] sm:$0xf]
        %v952 = vld [vmem:[%s6 + $0x1c] sm:$0xf]
        %v953 = vld [vmem:[%s6 + $0x20] sm:$0xf]
        %v954 = vld [vmem:[%s6 + $0x24] sm:$0xf]
        %v955 = vld [vmem:[%s6 + $0x28] sm:$0xf]
        %v956 = vld [vmem:[%s6 + $0x2c] sm:$0xf]
        %v957 = vld [vmem:[%s6 + $0x30] sm:$0xf]
        %v958 = vld [vmem:[%s6 + $0x34] sm:$0xf]
        %v959 = vld [vmem:[%s6 + $0x38] sm:$0xf]
        %v960 = vld [vmem:[%s6 + $0x3c] sm:$0xf]
        %v961 = vld [vmem:[%s7] sm:$0x1]
        %v962 = vpack.c.bf16 %v898, %v898
        %v963 = vpack.c.bf16 %v900, %v900
        %vm964 = vcmask 261120
        %v966 = vsel %vm964, %v962, 0
        %v969 = vsel %vm964, %v963, 0
        %971 = vmatprep.subr.bf16.mxu0 0
        %972 = vmatpush1.bf16.xpose.msra.mxu0 %v969
        %973 = vmatprep.subr.bf16.mxu0 0
        %974 = vmatpush1.bf16.xpose.msra.mxu0 0
        %975 = vmatprep.subr.bf16.mxu0 0
        %976 = vmatpush1.bf16.xpose.msra.mxu0 0
        %977 = vmatprep.subr.bf16.mxu0 0
        %978 = vmatpush1.bf16.xpose.msra.mxu0 0
        %979 = vmatprep.subr.bf16.mxu0 0
        %980 = vmatpush1.bf16.xpose.msra.mxu0 0
        %981 = vmatprep.subr.bf16.mxu0 0
        %982 = vmatpush1.bf16.xpose.msra.mxu0 0
        %983 = vmatprep.subr.bf16.mxu0 0
        %984 = vmatpush1.bf16.xpose.msra.mxu0 0
        %985 = vmatprep.subr.bf16.mxu0 0
        %986 = vmatpush1.bf16.xpose.msra.mxu0 0
        %987 = vmatprep.subr.bf16.mxu0 0
        %988 = vmatpush1.bf16.xpose.msra.mxu0 0
        %989 = vmatprep.subr.bf16.mxu0 0
        %990 = vmatpush1.bf16.xpose.msra.mxu0 0
        %991 = vmatprep.subr.bf16.mxu0 0
        %992 = vmatpush1.bf16.xpose.msra.mxu0 0
        %993 = vmatprep.subr.bf16.mxu0 0
        %994 = vmatpush1.bf16.xpose.msra.mxu0 0
        %995 = vmatprep.subr.bf16.mxu0 0
        %996 = vmatpush1.bf16.xpose.msra.mxu0 0
        %997 = vmatprep.subr.bf16.mxu0 0
        %998 = vmatpush1.bf16.xpose.msra.mxu0 0
        %999 = vmatprep.subr.bf16.mxu0 0
        %1000 = vmatpush1.bf16.xpose.msra.mxu0 0
        %1001 = vmatprep.subr.bf16.mxu0 0
        %1002 = vmatpush1.bf16.xpose.msra.mxu0 0
        %1003 = vmatprep.mubr.bf16.mxu0 0
        %1004 = vmatmul.mubr.bf16.gmra.mrb[0].mxu0 %v966
        %v1005 = vpop.f32.mrb[0].mxu0
        %v1006 = vadd.f32 %v944, %v1005
        %v1007 = vpop.f32.mrb[0].mxu0
        %v1008 = vpop.f32.mrb[0].mxu0
        %v1009 = vpop.f32.mrb[0].mxu0
        %1010 = vdwg.mxu0
        %vm1011 = vcmask 64512
        %v1012 = vsel %vm1011, %v1006, -inf
        %1013 = vmax.xlane.f32.xlu0 %v1012
        %v1014 = vpop.xlane.xlu0 %1013
        %v1015 = vsub.f32 %v1006, %v1014
        %v1016 = vmul.f32 %v1015, 1.442695
        %v1017 = vpow.pop %v1016
        %v1018 = vsel %vm1011, %v1017, 0.0
        %1019 = vadd.xlane.f32.xlu0 %v1018
        %v1020 = vpop.xlane.xlu0 %1019
        %v1021 = vrcp.pop %v1020
        %v1022 = vmul.f32 %v1017, %v1021
        %v1023 = vpack.c.bf16 %v1022, %v1022
        %v1024 = vpack.c.bf16 %v939, %v939
        %v1026 = vsel %vm1011, %v1023, 0
        %vm1028 = vcmask 1043456
        %v1030 = vsel %vm1028, %v1024, 0
        %1032 = vmatprep.subr.bf16.mxu0 0
        %1033 = vmatpush1.bf16.msra.mxu0 %v1030
        %1034 = vmatprep.subr.bf16.mxu0 0
        %1035 = vmatpush1.bf16.msra.mxu0 0
        %1036 = vmatprep.subr.bf16.mxu0 0
        %1037 = vmatpush1.bf16.msra.mxu0 0
        %1038 = vmatprep.subr.bf16.mxu0 0
        %1039 = vmatpush1.bf16.msra.mxu0 0
        %1040 = vmatprep.subr.bf16.mxu0 0
        %1041 = vmatpush1.bf16.msra.mxu0 0
        %1042 = vmatprep.subr.bf16.mxu0 0
        %1043 = vmatpush1.bf16.msra.mxu0 0
        %1044 = vmatprep.subr.bf16.mxu0 0
        %1045 = vmatpush1.bf16.msra.mxu0 0
        %1046 = vmatprep.subr.bf16.mxu0 0
        %1047 = vmatpush1.bf16.msra.mxu0 0
        %1048 = vmatprep.subr.bf16.mxu0 0
        %1049 = vmatpush1.bf16.msra.mxu0 0
        %1050 = vmatprep.subr.bf16.mxu0 0
        %1051 = vmatpush1.bf16.msra.mxu0 0
        %1052 = vmatprep.subr.bf16.mxu0 0
        %1053 = vmatpush1.bf16.msra.mxu0 0
        %1054 = vmatprep.subr.bf16.mxu0 0
        %1055 = vmatpush1.bf16.msra.mxu0 0
        %1056 = vmatprep.subr.bf16.mxu0 0
        %1057 = vmatpush1.bf16.msra.mxu0 0
        %1058 = vmatprep.subr.bf16.mxu0 0
        %1059 = vmatpush1.bf16.msra.mxu0 0
        %1060 = vmatprep.subr.bf16.mxu0 0
        %1061 = vmatpush1.bf16.msra.mxu0 0
        %1062 = vmatprep.subr.bf16.mxu0 0
        %1063 = vmatpush1.bf16.msra.mxu0 0
        %1064 = vmatprep.mubr.bf16.mxu0 0
        %1065 = vmatmul.mubr.bf16.gmra.mrb[0].mxu0 %v1026
        %v1066 = vpop.f32.mrb[0].mxu0
        %v1067 = vadd.f32 0.0, %v1066
        %v1068 = vpop.f32.mrb[0].mxu0
        %v1069 = vpop.f32.mrb[0].mxu0
        %v1070 = vpop.f32.mrb[0].mxu0
        %1071 = vdwg.mxu0
        %1073 = vrot.lane.b32.xlu0 %v962, 96
        %v1074 = vpop.permute.xlu0 %1073
        %1076 = vrot.lane.b32.xlu0 %v963, 96
        %v1077 = vpop.permute.xlu0 %1076
        %v1079 = vsel %vm964, %v1074, 0
        %v1082 = vsel %vm964, %v1077, 0
        %1084 = vmatprep.subr.bf16.mxu0 0
        %1085 = vmatpush1.bf16.xpose.msra.mxu0 %v1082
        %1086 = vmatprep.subr.bf16.mxu0 0
        %1087 = vmatpush1.bf16.xpose.msra.mxu0 0
        %1088 = vmatprep.subr.bf16.mxu0 0
        %1089 = vmatpush1.bf16.xpose.msra.mxu0 0
        %1090 = vmatprep.subr.bf16.mxu0 0
        %1091 = vmatpush1.bf16.xpose.msra.mxu0 0
        %1092 = vmatprep.subr.bf16.mxu0 0
        %1093 = vmatpush1.bf16.xpose.msra.mxu0 0
        %1094 = vmatprep.subr.bf16.mxu0 0
        %1095 = vmatpush1.bf16.xpose.msra.mxu0 0
        %1096 = vmatprep.subr.bf16.mxu0 0
        %1097 = vmatpush1.bf16.xpose.msra.mxu0 0
        %1098 = vmatprep.subr.bf16.mxu0 0
        %1099 = vmatpush1.bf16.xpose.msra.mxu0 0
        %1100 = vmatprep.subr.bf16.mxu0 0
        %1101 = vmatpush1.bf16.xpose.msra.mxu0 0
        %1102 = vmatprep.subr.bf16.mxu0 0
        %1103 = vmatpush1.bf16.xpose.msra.mxu0 0
        %1104 = vmatprep.subr.bf16.mxu0 0
        %1105 = vmatpush1.bf16.xpose.msra.mxu0 0
        %1106 = vmatprep.subr.bf16.mxu0 0
        %1107 = vmatpush1.bf16.xpose.msra.mxu0 0
        %1108 = vmatprep.subr.bf16.mxu0 0
        %1109 = vmatpush1.bf16.xpose.msra.mxu0 0
        %1110 = vmatprep.subr.bf16.mxu0 0
        %1111 = vmatpush1.bf16.xpose.msra.mxu0 0
        %1112 = vmatprep.subr.bf16.mxu0 0
        %1113 = vmatpush1.bf16.xpose.msra.mxu0 0
        %1114 = vmatprep.subr.bf16.mxu0 0
        %1115 = vmatpush1.bf16.xpose.msra.mxu0 0
        %1116 = vmatprep.mubr.bf16.mxu0 0
        %1117 = vmatmul.mubr.bf16.gmra.mrb[0].mxu0 %v1079
        %v1118 = vpop.f32.mrb[0].mxu0
        %v1119 = vadd.f32 %v944, %v1118
        %v1120 = vpop.f32.mrb[0].mxu0
        %v1121 = vpop.f32.mrb[0].mxu0
        %v1122 = vpop.f32.mrb[0].mxu0
        %1123 = vdwg.mxu0
        %v1124 = vsel %vm1011, %v1119, -inf
        %1125 = vmax.xlane.f32.xlu0 %v1124
        %v1126 = vpop.xlane.xlu0 %1125
        %v1127 = vsub.f32 %v1119, %v1126
        %v1128 = vmul.f32 %v1127, 1.442695
        %v1129 = vpow.pop %v1128
        %v1130 = vsel %vm1011, %v1129, 0.0
        %1131 = vadd.xlane.f32.xlu0 %v1130
        %v1132 = vpop.xlane.xlu0 %1131
        %v1133 = vrcp.pop %v1132
        %v1134 = vmul.f32 %v1129, %v1133
        %v1135 = vpack.c.bf16 %v1134, %v1134
        %1137 = vrot.lane.b32.xlu0 %v1024, 96
        %v1138 = vpop.permute.xlu0 %1137
        %v1140 = vsel %vm1011, %v1135, 0
        %v1143 = vsel %vm1028, %v1138, 0
        %1145 = vmatprep.subr.bf16.mxu0 0
        %1146 = vmatpush1.bf16.msra.mxu0 %v1143
        %1147 = vmatprep.subr.bf16.mxu0 0
        %1148 = vmatpush1.bf16.msra.mxu0 0
        %1149 = vmatprep.subr.bf16.mxu0 0
        %1150 = vmatpush1.bf16.msra.mxu0 0
        %1151 = vmatprep.subr.bf16.mxu0 0
        %1152 = vmatpush1.bf16.msra.mxu0 0
        %1153 = vmatprep.subr.bf16.mxu0 0
        %1154 = vmatpush1.bf16.msra.mxu0 0
        %1155 = vmatprep.subr.bf16.mxu0 0
        %1156 = vmatpush1.bf16.msra.mxu0 0
        %1157 = vmatprep.subr.bf16.mxu0 0
        %1158 = vmatpush1.bf16.msra.mxu0 0
        %1159 = vmatprep.subr.bf16.mxu0 0
        %1160 = vmatpush1.bf16.msra.mxu0 0
        %1161 = vmatprep.subr.bf16.mxu0 0
        %1162 = vmatpush1.bf16.msra.mxu0 0
        %1163 = vmatprep.subr.bf16.mxu0 0
        %1164 = vmatpush1.bf16.msra.mxu0 0
        %1165 = vmatprep.subr.bf16.mxu0 0
        %1166 = vmatpush1.bf16.msra.mxu0 0
        %1167 = vmatprep.subr.bf16.mxu0 0
        %1168 = vmatpush1.bf16.msra.mxu0 0
        %1169 = vmatprep.subr.bf16.mxu0 0
        %1170 = vmatpush1.bf16.msra.mxu0 0
        %1171 = vmatprep.subr.bf16.mxu0 0
        %1172 = vmatpush1.bf16.msra.mxu0 0
        %1173 = vmatprep.subr.bf16.mxu0 0
        %1174 = vmatpush1.bf16.msra.mxu0 0
        %1175 = vmatprep.subr.bf16.mxu0 0
        %1176 = vmatpush1.bf16.msra.mxu0 0
        %1177 = vmatprep.mubr.bf16.mxu0 0
        %1178 = vmatmul.mubr.bf16.gmra.mrb[0].mxu0 %v1140
        %v1179 = vpop.f32.mrb[0].mxu0
        %v1180 = vadd.f32 0.0, %v1179
        %v1181 = vpop.f32.mrb[0].mxu0
        %v1182 = vpop.f32.mrb[0].mxu0
        %v1183 = vpop.f32.mrb[0].mxu0
        %1184 = vdwg.mxu0
        %1185 = vrot.lane.b32.xlu0 %v962, 64
        %v1186 = vpop.permute.xlu0 %1185
        %1187 = vrot.lane.b32.xlu0 %v963, 64
        %v1188 = vpop.permute.xlu0 %1187
        %v1190 = vsel %vm964, %v1186, 0
        %v1193 = vsel %vm964, %v1188, 0
        %1195 = vmatprep.subr.bf16.mxu0 0
        %1196 = vmatpush1.bf16.xpose.msra.mxu0 %v1193
        %1197 = vmatprep.subr.bf16.mxu0 0
        %1198 = vmatpush1.bf16.xpose.msra.mxu0 0
        %1199 = vmatprep.subr.bf16.mxu0 0
        %1200 = vmatpush1.bf16.xpose.msra.mxu0 0
        %1201 = vmatprep.subr.bf16.mxu0 0
        %1202 = vmatpush1.bf16.xpose.msra.mxu0 0
        %1203 = vmatprep.subr.bf16.mxu0 0
        %1204 = vmatpush1.bf16.xpose.msra.mxu0 0
        %1205 = vmatprep.subr.bf16.mxu0 0
        %1206 = vmatpush1.bf16.xpose.msra.mxu0 0
        %1207 = vmatprep.subr.bf16.mxu0 0
        %1208 = vmatpush1.bf16.xpose.msra.mxu0 0
        %1209 = vmatprep.subr.bf16.mxu0 0
        %1210 = vmatpush1.bf16.xpose.msra.mxu0 0
        %1211 = vmatprep.subr.bf16.mxu0 0
        %1212 = vmatpush1.bf16.xpose.msra.mxu0 0
        %1213 = vmatprep.subr.bf16.mxu0 0
        %1214 = vmatpush1.bf16.xpose.msra.mxu0 0
        %1215 = vmatprep.subr.bf16.mxu0 0
        %1216 = vmatpush1.bf16.xpose.msra.mxu0 0
        %1217 = vmatprep.subr.bf16.mxu0 0
        %1218 = vmatpush1.bf16.xpose.msra.mxu0 0
        %1219 = vmatprep.subr.bf16.mxu0 0
        %1220 = vmatpush1.bf16.xpose.msra.mxu0 0
        %1221 = vmatprep.subr.bf16.mxu0 0
        %1222 = vmatpush1.bf16.xpose.msra.mxu0 0
        %1223 = vmatprep.subr.bf16.mxu0 0
        %1224 = vmatpush1.bf16.xpose.msra.mxu0 0
        %1225 = vmatprep.subr.bf16.mxu0 0
        %1226 = vmatpush1.bf16.xpose.msra.mxu0 0
        %1227 = vmatprep.mubr.bf16.mxu0 0
        %1228 = vmatmul.mubr.bf16.gmra.mrb[0].mxu0 %v1190
        %v1229 = vpop.f32.mrb[0].mxu0
        %v1230 = vadd.f32 %v944, %v1229
        %v1231 = vpop.f32.mrb[0].mxu0
        %v1232 = vpop.f32.mrb[0].mxu0
        %v1233 = vpop.f32.mrb[0].mxu0
        %1234 = vdwg.mxu0
        %v1235 = vsel %vm1011, %v1230, -inf
        %1236 = vmax.xlane.f32.xlu0 %v1235
        %v1237 = vpop.xlane.xlu0 %1236
        %v1238 = vsub.f32 %v1230, %v1237
        %v1239 = vmul.f32 %v1238, 1.442695
        %v1240 = vpow.pop %v1239
        %v1241 = vsel %vm1011, %v1240, 0.0
        %1242 = vadd.xlane.f32.xlu0 %v1241
        %v1243 = vpop.xlane.xlu0 %1242
        %v1244 = vrcp.pop %v1243
        %v1245 = vmul.f32 %v1240, %v1244
        %v1246 = vpack.c.bf16 %v1245, %v1245
        %1247 = vrot.lane.b32.xlu0 %v1024, 64
        %v1248 = vpop.permute.xlu0 %1247
        %v1250 = vsel %vm1011, %v1246, 0
        %v1253 = vsel %vm1028, %v1248, 0
        %1255 = vmatprep.subr.bf16.mxu0 0
        %1256 = vmatpush1.bf16.msra.mxu0 %v1253
        %1257 = vmatprep.subr.bf16.mxu0 0
        %1258 = vmatpush1.bf16.msra.mxu0 0
        %1259 = vmatprep.subr.bf16.mxu0 0
        %1260 = vmatpush1.bf16.msra.mxu0 0
        %1261 = vmatprep.subr.bf16.mxu0 0
        %1262 = vmatpush1.bf16.msra.mxu0 0
        %1263 = vmatprep.subr.bf16.mxu0 0
        %1264 = vmatpush1.bf16.msra.mxu0 0
        %1265 = vmatprep.subr.bf16.mxu0 0
        %1266 = vmatpush1.bf16.msra.mxu0 0
        %1267 = vmatprep.subr.bf16.mxu0 0
        %1268 = vmatpush1.bf16.msra.mxu0 0
        %1269 = vmatprep.subr.bf16.mxu0 0
        %1270 = vmatpush1.bf16.msra.mxu0 0
        %1271 = vmatprep.subr.bf16.mxu0 0
        %1272 = vmatpush1.bf16.msra.mxu0 0
        %1273 = vmatprep.subr.bf16.mxu0 0
        %1274 = vmatpush1.bf16.msra.mxu0 0
        %1275 = vmatprep.subr.bf16.mxu0 0
        %1276 = vmatpush1.bf16.msra.mxu0 0
        %1277 = vmatprep.subr.bf16.mxu0 0
        %1278 = vmatpush1.bf16.msra.mxu0 0
        %1279 = vmatprep.subr.bf16.mxu0 0
        %1280 = vmatpush1.bf16.msra.mxu0 0
        %1281 = vmatprep.subr.bf16.mxu0 0
        %1282 = vmatpush1.bf16.msra.mxu0 0
        %1283 = vmatprep.subr.bf16.mxu0 0
        %1284 = vmatpush1.bf16.msra.mxu0 0
        %1285 = vmatprep.subr.bf16.mxu0 0
        %1286 = vmatpush1.bf16.msra.mxu0 0
        %1287 = vmatprep.mubr.bf16.mxu0 0
        %1288 = vmatmul.mubr.bf16.gmra.mrb[0].mxu0 %v1250
        %v1289 = vpop.f32.mrb[0].mxu0
        %v1290 = vadd.f32 0.0, %v1289
        %v1291 = vpop.f32.mrb[0].mxu0
        %v1292 = vpop.f32.mrb[0].mxu0
        %v1293 = vpop.f32.mrb[0].mxu0
        %1294 = vdwg.mxu0
        %1295 = vrot.lane.b32.xlu0 %v962, 32
        %v1296 = vpop.permute.xlu0 %1295
        %1297 = vrot.lane.b32.xlu0 %v963, 32
        %v1298 = vpop.permute.xlu0 %1297
        %v1300 = vsel %vm964, %v1296, 0
        %v1303 = vsel %vm964, %v1298, 0
        %1305 = vmatprep.subr.bf16.mxu0 0
        %1306 = vmatpush1.bf16.xpose.msra.mxu0 %v1303
        %1307 = vmatprep.subr.bf16.mxu0 0
        %1308 = vmatpush1.bf16.xpose.msra.mxu0 0
        %1309 = vmatprep.subr.bf16.mxu0 0
        %1310 = vmatpush1.bf16.xpose.msra.mxu0 0
        %1311 = vmatprep.subr.bf16.mxu0 0
        %1312 = vmatpush1.bf16.xpose.msra.mxu0 0
        %1313 = vmatprep.subr.bf16.mxu0 0
        %1314 = vmatpush1.bf16.xpose.msra.mxu0 0
        %1315 = vmatprep.subr.bf16.mxu0 0
        %1316 = vmatpush1.bf16.xpose.msra.mxu0 0
        %1317 = vmatprep.subr.bf16.mxu0 0
        %1318 = vmatpush1.bf16.xpose.msra.mxu0 0
        %1319 = vmatprep.subr.bf16.mxu0 0
        %1320 = vmatpush1.bf16.xpose.msra.mxu0 0
        %1321 = vmatprep.subr.bf16.mxu0 0
        %1322 = vmatpush1.bf16.xpose.msra.mxu0 0
        %1323 = vmatprep.subr.bf16.mxu0 0
        %1324 = vmatpush1.bf16.xpose.msra.mxu0 0
        %1325 = vmatprep.subr.bf16.mxu0 0
        %1326 = vmatpush1.bf16.xpose.msra.mxu0 0
        %1327 = vmatprep.subr.bf16.mxu0 0
        %1328 = vmatpush1.bf16.xpose.msra.mxu0 0
        %1329 = vmatprep.subr.bf16.mxu0 0
        %1330 = vmatpush1.bf16.xpose.msra.mxu0 0
        %1331 = vmatprep.subr.bf16.mxu0 0
        %1332 = vmatpush1.bf16.xpose.msra.mxu0 0
        %1333 = vmatprep.subr.bf16.mxu0 0
        %1334 = vmatpush1.bf16.xpose.msra.mxu0 0
        %1335 = vmatprep.subr.bf16.mxu0 0
        %1336 = vmatpush1.bf16.xpose.msra.mxu0 0
        %1337 = vmatprep.mubr.bf16.mxu0 0
        %1338 = vmatmul.mubr.bf16.gmra.mrb[0].mxu0 %v1300
        %v1339 = vpop.f32.mrb[0].mxu0
        %v1340 = vadd.f32 %v944, %v1339
        %v1341 = vpop.f32.mrb[0].mxu0
        %v1342 = vpop.f32.mrb[0].mxu0
        %v1343 = vpop.f32.mrb[0].mxu0
        %1344 = vdwg.mxu0
        %v1345 = vsel %vm1011, %v1340, -inf
        %1346 = vmax.xlane.f32.xlu0 %v1345
        %v1347 = vpop.xlane.xlu0 %1346
        %v1348 = vsub.f32 %v1340, %v1347
        %v1349 = vmul.f32 %v1348, 1.442695
        %v1350 = vpow.pop %v1349
        %v1351 = vsel %vm1011, %v1350, 0.0
        %1352 = vadd.xlane.f32.xlu0 %v1351
        %v1353 = vpop.xlane.xlu0 %1352
        %v1354 = vrcp.pop %v1353
        %v1355 = vmul.f32 %v1350, %v1354
        %v1356 = vpack.c.bf16 %v1355, %v1355
        %1357 = vrot.lane.b32.xlu0 %v1024, 32
        %v1358 = vpop.permute.xlu0 %1357
        %v1360 = vsel %vm1011, %v1356, 0
        %v1363 = vsel %vm1028, %v1358, 0
        %1365 = vmatprep.subr.bf16.mxu0 0
        %1366 = vmatpush1.bf16.msra.mxu0 %v1363
        %1367 = vmatprep.subr.bf16.mxu0 0
        %1368 = vmatpush1.bf16.msra.mxu0 0
        %1369 = vmatprep.subr.bf16.mxu0 0
        %1370 = vmatpush1.bf16.msra.mxu0 0
        %1371 = vmatprep.subr.bf16.mxu0 0
        %1372 = vmatpush1.bf16.msra.mxu0 0
        %1373 = vmatprep.subr.bf16.mxu0 0
        %1374 = vmatpush1.bf16.msra.mxu0 0
        %1375 = vmatprep.subr.bf16.mxu0 0
        %1376 = vmatpush1.bf16.msra.mxu0 0
        %1377 = vmatprep.subr.bf16.mxu0 0
        %1378 = vmatpush1.bf16.msra.mxu0 0
        %1379 = vmatprep.subr.bf16.mxu0 0
        %1380 = vmatpush1.bf16.msra.mxu0 0
        %1381 = vmatprep.subr.bf16.mxu0 0
        %1382 = vmatpush1.bf16.msra.mxu0 0
        %1383 = vmatprep.subr.bf16.mxu0 0
        %1384 = vmatpush1.bf16.msra.mxu0 0
        %1385 = vmatprep.subr.bf16.mxu0 0
        %1386 = vmatpush1.bf16.msra.mxu0 0
        %1387 = vmatprep.subr.bf16.mxu0 0
        %1388 = vmatpush1.bf16.msra.mxu0 0
        %1389 = vmatprep.subr.bf16.mxu0 0
        %1390 = vmatpush1.bf16.msra.mxu0 0
        %1391 = vmatprep.subr.bf16.mxu0 0
        %1392 = vmatpush1.bf16.msra.mxu0 0
        %1393 = vmatprep.subr.bf16.mxu0 0
        %1394 = vmatpush1.bf16.msra.mxu0 0
        %1395 = vmatprep.subr.bf16.mxu0 0
        %1396 = vmatpush1.bf16.msra.mxu0 0
        %1397 = vmatprep.mubr.bf16.mxu0 0
        %1398 = vmatmul.mubr.bf16.gmra.mrb[0].mxu0 %v1360
        %v1399 = vpop.f32.mrb[0].mxu0
        %v1400 = vadd.f32 0.0, %v1399
        %v1401 = vpop.f32.mrb[0].mxu0
        %v1402 = vpop.f32.mrb[0].mxu0
        %v1403 = vpop.f32.mrb[0].mxu0
        %1404 = vdwg.mxu0
        %1406 = vrot.lane.b32.xlu0 %v1180, 32
        %v1407 = vpop.permute.xlu0 %1406
        %1410 = vrot.lane.b32.xlu0 %v1290, 64
        %v1411 = vpop.permute.xlu0 %1410
        %1414 = vrot.lane.b32.xlu0 %v1400, 96
        %v1415 = vpop.permute.xlu0 %1414
        %v1417 = vsel %vm964, %v1067, %v1407
        %vm1418 = vcmask 523264
        %v1419 = vsel %vm1418, %v1417, %v1411
        %vm1420 = vcmask 785408
        %v1421 = vsel %vm1420, %v1419, %v1415
        %v1422 = vpack.c.bf16 %v1421, %v1421
        %v1424 = vlaneseq
        %v1425 = vshrl.u32 %v1424, 7
        %v1426 = vsub.s32 0, %v1425
        %v1427 = vrot.slane %v961, %v1426
        %v1445 = vunpack.c.l.b16 %v945
        %v1446 = vunpack.c.l.b16 %v946
        %v1447 = vunpack.c.l.b16 %v947
        %v1448 = vunpack.c.l.b16 %v948
        %v1449 = vunpack.c.l.b16 %v949
        %v1450 = vunpack.c.l.b16 %v950
        %v1451 = vunpack.c.l.b16 %v951
        %v1452 = vunpack.c.l.b16 %v952
        %v1453 = vunpack.c.l.b16 %v953
        %v1454 = vunpack.c.l.b16 %v954
        %v1455 = vunpack.c.l.b16 %v955
        %v1456 = vunpack.c.l.b16 %v956
        %v1457 = vunpack.c.l.b16 %v957
        %v1458 = vunpack.c.l.b16 %v958
        %v1459 = vunpack.c.l.b16 %v959
        %v1460 = vunpack.c.l.b16 %v960
        %v1461 = vpack.c.b16 %v1446, %v1445
        %v1462 = vpack.c.b16 %v1448, %v1447
        %v1463 = vpack.c.b16 %v1450, %v1449
        %v1464 = vpack.c.b16 %v1452, %v1451
        %v1465 = vpack.c.b16 %v1454, %v1453
        %v1466 = vpack.c.b16 %v1456, %v1455
        %v1467 = vpack.c.b16 %v1458, %v1457
        %v1468 = vpack.c.b16 %v1460, %v1459
        %1477 = vmatprep.subr.bf16.mxu0 0
        %1478 = vmatpush1.bf16.msra.mxu0 %v1461
        %1479 = vmatprep.subr.bf16.mxu0 0
        %1480 = vmatpush1.bf16.msra.mxu0 %v1462
        %1481 = vmatprep.subr.bf16.mxu0 0
        %1482 = vmatpush1.bf16.msra.mxu0 %v1463
        %1483 = vmatprep.subr.bf16.mxu0 0
        %1484 = vmatpush1.bf16.msra.mxu0 %v1464
        %1485 = vmatprep.subr.bf16.mxu0 0
        %1486 = vmatpush1.bf16.msra.mxu0 %v1465
        %1487 = vmatprep.subr.bf16.mxu0 0
        %1488 = vmatpush1.bf16.msra.mxu0 %v1466
        %1489 = vmatprep.subr.bf16.mxu0 0
        %1490 = vmatpush1.bf16.msra.mxu0 %v1467
        %1491 = vmatprep.subr.bf16.mxu0 0
        %1492 = vmatpush1.bf16.msra.mxu0 %v1468
        %1493 = vmatprep.subr.bf16.mxu0 0
        %1494 = vmatpush1.bf16.msra.mxu0 0
        %1495 = vmatprep.subr.bf16.mxu0 0
        %1496 = vmatpush1.bf16.msra.mxu0 0
        %1497 = vmatprep.subr.bf16.mxu0 0
        %1498 = vmatpush1.bf16.msra.mxu0 0
        %1499 = vmatprep.subr.bf16.mxu0 0
        %1500 = vmatpush1.bf16.msra.mxu0 0
        %1501 = vmatprep.subr.bf16.mxu0 0
        %1502 = vmatpush1.bf16.msra.mxu0 0
        %1503 = vmatprep.subr.bf16.mxu0 0
        %1504 = vmatpush1.bf16.msra.mxu0 0
        %1505 = vmatprep.subr.bf16.mxu0 0
        %1506 = vmatpush1.bf16.msra.mxu0 0
        %1507 = vmatprep.subr.bf16.mxu0 0
        %1508 = vmatpush1.bf16.msra.mxu0 0
        %1509 = vmatprep.mubr.bf16.mxu0 0
        %1510 = vmatmul.mubr.bf16.gmra.mrb[0].mxu0 %v1422
        %v1511 = vpop.f32.mrb[0].mxu0
        %v1512 = vadd.f32 %v1427, %v1511
        %v1513 = vpop.f32.mrb[0].mxu0
        %v1514 = vpop.f32.mrb[0].mxu0
        %v1515 = vpop.f32.mrb[0].mxu0
        %1516 = vdwg.mxu0
        %v1517 = vadd.f32 %v680, %v1512
        %1518 = vadd.xlane.f32.xlu0 %v1517
        %v1519 = vpop.xlane.xlu0 %1518
        %v1520 = vmul.f32 %v1519, 0.03125
        %v1521 = vsub.f32 %v1517, %v1520
        %v1522 = vmul.f32 %v1521, %v1521
        %1523 = vadd.xlane.f32.xlu0 %v1522
        %v1524 = vpop.xlane.xlu0 %1523
        %v1525 = vmul.f32 %v1520, 96.0
        %v1526 = vmul.f32 %v1525, %v1520
        %v1527 = vsub.f32 %v1524, %v1526
        %v1528 = vmul.f32 %v1527, 0.03125
        %v1529 = vadd.f32 %v1528, 1e-05
        %v1530 = vrsqrt.pop %v1529
        %v1531 = vmul.f32 %v1521, %v1530
        %v1532 = vlaneseq
        %v1533 = vshrl.u32 %v1532, 7
        %v1534 = vsub.s32 0, %v1533
        %v1535 = vrot.slane %v683, %v1534
        %v1536 = vmul.f32 %v1531, %v1535
        %v1537 = vlaneseq
        %v1538 = vshrl.u32 %v1537, 7
        %v1539 = vsub.s32 0, %v1538
        %v1540 = vrot.slane %v684, %v1539
        %v1541 = vadd.f32 %v1536, %v1540
        %v1542 = vpack.c.bf16 %v1541, %v1541
        %v1543 = vld [vmem:[%s8] sm:$0xf]
        %v1544 = vld [vmem:[%s8 + $0x4] sm:$0xf]
        %v1545 = vld [vmem:[%s8 + $0x8] sm:$0xf]
        %v1546 = vld [vmem:[%s8 + $0xc] sm:$0xf]
        %v1547 = vld [vmem:[%s8 + $0x10] sm:$0xf]
        %v1548 = vld [vmem:[%s8 + $0x14] sm:$0xf]
        %v1549 = vld [vmem:[%s8 + $0x18] sm:$0xf]
        %v1550 = vld [vmem:[%s8 + $0x1c] sm:$0xf]
        %v1551 = vld [vmem:[%s8 + $0x20] sm:$0xf]
        %v1552 = vld [vmem:[%s8 + $0x24] sm:$0xf]
        %v1553 = vld [vmem:[%s8 + $0x28] sm:$0xf]
        %v1554 = vld [vmem:[%s8 + $0x2c] sm:$0xf]
        %v1555 = vld [vmem:[%s8 + $0x30] sm:$0xf]
        %v1556 = vld [vmem:[%s8 + $0x34] sm:$0xf]
        %v1557 = vld [vmem:[%s8 + $0x38] sm:$0xf]
        %v1558 = vld [vmem:[%s8 + $0x3c] sm:$0xf]
        %v1559 = vld [vmem:[%s9] sm:$0x1]
        %v1561 = vlaneseq
        %v1562 = vshrl.u32 %v1561, 7
        %v1563 = vsub.s32 0, %v1562
        %v1564 = vrot.slane %v1559, %v1563
        %v1582 = vunpack.c.l.b16 %v1543
        %v1583 = vunpack.c.l.b16 %v1544
        %v1584 = vunpack.c.l.b16 %v1545
        %v1585 = vunpack.c.l.b16 %v1546
        %v1586 = vunpack.c.l.b16 %v1547
        %v1587 = vunpack.c.l.b16 %v1548
        %v1588 = vunpack.c.l.b16 %v1549
        %v1589 = vunpack.c.l.b16 %v1550
        %v1590 = vunpack.c.l.b16 %v1551
        %v1591 = vunpack.c.l.b16 %v1552
        %v1592 = vunpack.c.l.b16 %v1553
        %v1593 = vunpack.c.l.b16 %v1554
        %v1594 = vunpack.c.l.b16 %v1555
        %v1595 = vunpack.c.l.b16 %v1556
        %v1596 = vunpack.c.l.b16 %v1557
        %v1597 = vunpack.c.l.b16 %v1558
        %v1598 = vpack.c.b16 %v1583, %v1582
        %v1599 = vpack.c.b16 %v1585, %v1584
        %v1600 = vpack.c.b16 %v1587, %v1586
        %v1601 = vpack.c.b16 %v1589, %v1588
        %v1602 = vpack.c.b16 %v1591, %v1590
        %v1603 = vpack.c.b16 %v1593, %v1592
        %v1604 = vpack.c.b16 %v1595, %v1594
        %v1605 = vpack.c.b16 %v1597, %v1596
        %1614 = vmatprep.subr.bf16.mxu0 0
        %1615 = vmatpush1.bf16.msra.mxu0 %v1598
        %1616 = vmatprep.subr.bf16.mxu0 0
        %1617 = vmatpush1.bf16.msra.mxu0 %v1599
        %1618 = vmatprep.subr.bf16.mxu0 0
        %1619 = vmatpush1.bf16.msra.mxu0 %v1600
        %1620 = vmatprep.subr.bf16.mxu0 0
        %1621 = vmatpush1.bf16.msra.mxu0 %v1601
        %1622 = vmatprep.subr.bf16.mxu0 0
        %1623 = vmatpush1.bf16.msra.mxu0 %v1602
        %1624 = vmatprep.subr.bf16.mxu0 0
        %1625 = vmatpush1.bf16.msra.mxu0 %v1603
        %1626 = vmatprep.subr.bf16.mxu0 0
        %1627 = vmatpush1.bf16.msra.mxu0 %v1604
        %1628 = vmatprep.subr.bf16.mxu0 0
        %1629 = vmatpush1.bf16.msra.mxu0 %v1605
        %1630 = vmatprep.subr.bf16.mxu0 0
        %1631 = vmatpush1.bf16.msra.mxu0 0
        %1632 = vmatprep.subr.bf16.mxu0 0
        %1633 = vmatpush1.bf16.msra.mxu0 0
        %1634 = vmatprep.subr.bf16.mxu0 0
        %1635 = vmatpush1.bf16.msra.mxu0 0
        %1636 = vmatprep.subr.bf16.mxu0 0
        %1637 = vmatpush1.bf16.msra.mxu0 0
        %1638 = vmatprep.subr.bf16.mxu0 0
        %1639 = vmatpush1.bf16.msra.mxu0 0
        %1640 = vmatprep.subr.bf16.mxu0 0
        %1641 = vmatpush1.bf16.msra.mxu0 0
        %1642 = vmatprep.subr.bf16.mxu0 0
        %1643 = vmatpush1.bf16.msra.mxu0 0
        %1644 = vmatprep.subr.bf16.mxu0 0
        %1645 = vmatpush1.bf16.msra.mxu0 0
        %1646 = vmatprep.mubr.bf16.mxu0 0
        %1647 = vmatmul.mubr.bf16.gmra.mrb[0].mxu0 %v1542
        %v1648 = vpop.f32.mrb[0].mxu0
        %v1649 = vadd.f32 %v1564, %v1648
        %v1650 = vpop.f32.mrb[0].mxu0
        %v1651 = vpop.f32.mrb[0].mxu0
        %v1652 = vpop.f32.mrb[0].mxu0
        %1653 = vdwg.mxu0
        %v1654 = vpack.c.bf16 %v682, %v681
        %v1655 = vld [vmem:[%s10] sm:$0xff]
        %v1656 = vld [vmem:[%s10 + $0x8] sm:$0xff]
        %v1657 = vld [vmem:[%s10 + $0x10] sm:$0xff]
        %v1658 = vld [vmem:[%s10 + $0x18] sm:$0xff]
        %v1659 = vld [vmem:[%s10 + $0x20] sm:$0xff]
        %v1660 = vld [vmem:[%s10 + $0x28] sm:$0xff]
        %v1661 = vld [vmem:[%s10 + $0x30] sm:$0xff]
        %v1662 = vld [vmem:[%s10 + $0x38] sm:$0xff]
        %v1663 = vld [vmem:[%s10 + $0x40] sm:$0xff]
        %v1664 = vld [vmem:[%s10 + $0x48] sm:$0xff]
        %v1665 = vld [vmem:[%s10 + $0x50] sm:$0xff]
        %v1666 = vld [vmem:[%s10 + $0x58] sm:$0xff]
        %v1667 = vld [vmem:[%s10 + $0x60] sm:$0xff]
        %v1668 = vld [vmem:[%s10 + $0x68] sm:$0xff]
        %v1669 = vld [vmem:[%s10 + $0x70] sm:$0xff]
        %v1670 = vld [vmem:[%s10 + $0x78] sm:$0xff]
        %v1671 = vld [vmem:[%s11] sm:$0x3]
        %v1673 = vlaneseq
        %v1674 = vshrl.u32 %v1673, 7
        %v1675 = vsub.s32 0, %v1674
        %v1676 = vrot.slane %v1671, %v1675
        %v1677 = vlaneseq
        %v1678 = vshrl.u32 %v1677, 7
        %v1679 = vsub.s32 1, %v1678
        %v1680 = vrot.slane %v1671, %v1679
        %v1699 = vunpack.c.l.b16 %v1655
        %v1700 = vunpack.c.h.b16 %v1655
        %v1701 = vunpack.c.l.b16 %v1656
        %v1702 = vunpack.c.h.b16 %v1656
        %v1703 = vunpack.c.l.b16 %v1657
        %v1704 = vunpack.c.h.b16 %v1657
        %v1705 = vunpack.c.l.b16 %v1658
        %v1706 = vunpack.c.h.b16 %v1658
        %v1707 = vunpack.c.l.b16 %v1659
        %v1708 = vunpack.c.h.b16 %v1659
        %v1709 = vunpack.c.l.b16 %v1660
        %v1710 = vunpack.c.h.b16 %v1660
        %v1711 = vunpack.c.l.b16 %v1661
        %v1712 = vunpack.c.h.b16 %v1661
        %v1713 = vunpack.c.l.b16 %v1662
        %v1714 = vunpack.c.h.b16 %v1662
        %v1715 = vunpack.c.l.b16 %v1663
        %v1716 = vunpack.c.h.b16 %v1663
        %v1717 = vunpack.c.l.b16 %v1664
        %v1718 = vunpack.c.h.b16 %v1664
        %v1719 = vunpack.c.l.b16 %v1665
        %v1720 = vunpack.c.h.b16 %v1665
        %v1721 = vunpack.c.l.b16 %v1666
        %v1722 = vunpack.c.h.b16 %v1666
        %v1723 = vunpack.c.l.b16 %v1667
        %v1724 = vunpack.c.h.b16 %v1667
        %v1725 = vunpack.c.l.b16 %v1668
        %v1726 = vunpack.c.h.b16 %v1668
        %v1727 = vunpack.c.l.b16 %v1669
        %v1728 = vunpack.c.h.b16 %v1669
        %v1729 = vunpack.c.l.b16 %v1670
        %v1730 = vunpack.c.h.b16 %v1670
        %v1731 = vpack.c.b16 %v1701, %v1699
        %v1732 = vpack.c.b16 %v1702, %v1700
        %v1733 = vpack.c.b16 %v1705, %v1703
        %v1734 = vpack.c.b16 %v1706, %v1704
        %v1735 = vpack.c.b16 %v1709, %v1707
        %v1736 = vpack.c.b16 %v1710, %v1708
        %v1737 = vpack.c.b16 %v1713, %v1711
        %v1738 = vpack.c.b16 %v1714, %v1712
        %v1739 = vpack.c.b16 %v1717, %v1715
        %v1740 = vpack.c.b16 %v1718, %v1716
        %v1741 = vpack.c.b16 %v1721, %v1719
        %v1742 = vpack.c.b16 %v1722, %v1720
        %v1743 = vpack.c.b16 %v1725, %v1723
        %v1744 = vpack.c.b16 %v1726, %v1724
        %v1745 = vpack.c.b16 %v1729, %v1727
        %v1746 = vpack.c.b16 %v1730, %v1728
        %1763 = vmatprep.subr.bf16.mxu0 %v1732
        %1764 = vmatpush1.bf16.msra.mxu0 %v1731
        %1765 = vmatprep.subr.bf16.mxu0 %v1734
        %1766 = vmatpush1.bf16.msra.mxu0 %v1733
        %1767 = vmatprep.subr.bf16.mxu0 %v1736
        %1768 = vmatpush1.bf16.msra.mxu0 %v1735
        %1769 = vmatprep.subr.bf16.mxu0 %v1738
        %1770 = vmatpush1.bf16.msra.mxu0 %v1737
        %1771 = vmatprep.subr.bf16.mxu0 %v1740
        %1772 = vmatpush1.bf16.msra.mxu0 %v1739
        %1773 = vmatprep.subr.bf16.mxu0 %v1742
        %1774 = vmatpush1.bf16.msra.mxu0 %v1741
        %1775 = vmatprep.subr.bf16.mxu0 %v1744
        %1776 = vmatpush1.bf16.msra.mxu0 %v1743
        %1777 = vmatprep.subr.bf16.mxu0 %v1746
        %1778 = vmatpush1.bf16.msra.mxu0 %v1745
        %1779 = vmatprep.subr.bf16.mxu0 0
        %1780 = vmatpush1.bf16.msra.mxu0 0
        %1781 = vmatprep.subr.bf16.mxu0 0
        %1782 = vmatpush1.bf16.msra.mxu0 0
        %1783 = vmatprep.subr.bf16.mxu0 0
        %1784 = vmatpush1.bf16.msra.mxu0 0
        %1785 = vmatprep.subr.bf16.mxu0 0
        %1786 = vmatpush1.bf16.msra.mxu0 0
        %1787 = vmatprep.subr.bf16.mxu0 0
        %1788 = vmatpush1.bf16.msra.mxu0 0
        %1789 = vmatprep.subr.bf16.mxu0 0
        %1790 = vmatpush1.bf16.msra.mxu0 0
        %1791 = vmatprep.subr.bf16.mxu0 0
        %1792 = vmatpush1.bf16.msra.mxu0 0
        %1793 = vmatprep.subr.bf16.mxu0 0
        %1794 = vmatpush1.bf16.msra.mxu0 0
        %1795 = vmatprep.mubr.bf16.mxu0 0
        %1796 = vmatmul.mubr.bf16.gmra.mrb[0].mxu0 %v1654
        %v1797 = vpop.f32.mrb[0].mxu0
        %v1798 = vadd.f32 %v1676, %v1797
        %v1799 = vpop.f32.mrb[0].mxu0
        %v1800 = vadd.f32 %v1680, %v1799
        %v1801 = vpop.f32.mrb[0].mxu0
        %v1802 = vadd.f32 %v1676, %v1801
        %v1803 = vpop.f32.mrb[0].mxu0
        %v1804 = vadd.f32 %v1680, %v1803
        %1805 = vdwg.mxu0
        %v1806 = vld [vmem:[%s678] sm:$0xff]
        %v1807 = vld [vmem:[%s12] sm:$0xf]
        %v1808 = vld [vmem:[%s12 + $0x4] sm:$0xf]
        %v1809 = vld [vmem:[%s12 + $0x8] sm:$0xf]
        %v1810 = vld [vmem:[%s12 + $0xc] sm:$0xf]
        %v1811 = vld [vmem:[%s12 + $0x10] sm:$0xf]
        %v1812 = vld [vmem:[%s12 + $0x14] sm:$0xf]
        %v1813 = vld [vmem:[%s12 + $0x18] sm:$0xf]
        %v1814 = vld [vmem:[%s12 + $0x1c] sm:$0xf]
        %v1815 = vld [vmem:[%s12 + $0x20] sm:$0xf]
        %v1816 = vld [vmem:[%s12 + $0x24] sm:$0xf]
        %v1817 = vld [vmem:[%s12 + $0x28] sm:$0xf]
        %v1818 = vld [vmem:[%s12 + $0x2c] sm:$0xf]
        %v1819 = vld [vmem:[%s12 + $0x30] sm:$0xf]
        %v1820 = vld [vmem:[%s12 + $0x34] sm:$0xf]
        %v1821 = vld [vmem:[%s12 + $0x38] sm:$0xf]
        %v1822 = vld [vmem:[%s12 + $0x3c] sm:$0xf]
        %v1823 = vld [vmem:[%s13] sm:$0x1]
        %v1824 = vpack.c.bf16 %v1649, %v1649
        %v1825 = vpack.c.bf16 %v1802, %v1798
        %v1827 = vsel %vm964, %v1824, 0
        %v1830 = vsel %vm964, %v1825, 0
        %1832 = vmatprep.subr.bf16.mxu0 0
        %1833 = vmatpush1.bf16.xpose.msra.mxu0 %v1830
        %1834 = vmatprep.subr.bf16.mxu0 0
        %1835 = vmatpush1.bf16.xpose.msra.mxu0 0
        %1836 = vmatprep.subr.bf16.mxu0 0
        %1837 = vmatpush1.bf16.xpose.msra.mxu0 0
        %1838 = vmatprep.subr.bf16.mxu0 0
        %1839 = vmatpush1.bf16.xpose.msra.mxu0 0
        %1840 = vmatprep.subr.bf16.mxu0 0
        %1841 = vmatpush1.bf16.xpose.msra.mxu0 0
        %1842 = vmatprep.subr.bf16.mxu0 0
        %1843 = vmatpush1.bf16.xpose.msra.mxu0 0
        %1844 = vmatprep.subr.bf16.mxu0 0
        %1845 = vmatpush1.bf16.xpose.msra.mxu0 0
        %1846 = vmatprep.subr.bf16.mxu0 0
        %1847 = vmatpush1.bf16.xpose.msra.mxu0 0
        %1848 = vmatprep.subr.bf16.mxu0 0
        %1849 = vmatpush1.bf16.xpose.msra.mxu0 0
        %1850 = vmatprep.subr.bf16.mxu0 0
        %1851 = vmatpush1.bf16.xpose.msra.mxu0 0
        %1852 = vmatprep.subr.bf16.mxu0 0
        %1853 = vmatpush1.bf16.xpose.msra.mxu0 0
        %1854 = vmatprep.subr.bf16.mxu0 0
        %1855 = vmatpush1.bf16.xpose.msra.mxu0 0
        %1856 = vmatprep.subr.bf16.mxu0 0
        %1857 = vmatpush1.bf16.xpose.msra.mxu0 0
        %1858 = vmatprep.subr.bf16.mxu0 0
        %1859 = vmatpush1.bf16.xpose.msra.mxu0 0
        %1860 = vmatprep.subr.bf16.mxu0 0
        %1861 = vmatpush1.bf16.xpose.msra.mxu0 0
        %1862 = vmatprep.subr.bf16.mxu0 0
        %1863 = vmatpush1.bf16.xpose.msra.mxu0 0
        %1864 = vmatprep.mubr.bf16.mxu0 0
        %1865 = vmatmul.mubr.bf16.gmra.mrb[0].mxu0 %v1827
        %v1866 = vpop.f32.mrb[0].mxu0
        %v1867 = vadd.f32 %v1806, %v1866
        %v1868 = vpop.f32.mrb[0].mxu0
        %v1869 = vpop.f32.mrb[0].mxu0
        %v1870 = vpop.f32.mrb[0].mxu0
        %1871 = vdwg.mxu0
        %vm1872 = vcmask 97280
        %v1873 = vsel %vm1872, %v1867, -inf
        %1874 = vmax.xlane.f32.xlu0 %v1873
        %v1875 = vpop.xlane.xlu0 %1874
        %v1876 = vsub.f32 %v1867, %v1875
        %v1877 = vmul.f32 %v1876, 1.442695
        %v1878 = vpow.pop %v1877
        %v1879 = vsel %vm1872, %v1878, 0.0
        %1880 = vadd.xlane.f32.xlu0 %v1879
        %v1881 = vpop.xlane.xlu0 %1880
        %v1882 = vrcp.pop %v1881
        %v1883 = vmul.f32 %v1878, %v1882
        %v1884 = vpack.c.bf16 %v1883, %v1883
        %v1885 = vpack.c.bf16 %v1804, %v1800
        %v1887 = vsel %vm1872, %v1884, 0
        %vm1889 = vcmask 1045504
        %v1891 = vsel %vm1889, %v1885, 0
        %1893 = vmatprep.subr.bf16.mxu0 0
        %1894 = vmatpush1.bf16.msra.mxu0 %v1891
        %1895 = vmatprep.subr.bf16.mxu0 0
        %1896 = vmatpush1.bf16.msra.mxu0 0
        %1897 = vmatprep.subr.bf16.mxu0 0
        %1898 = vmatpush1.bf16.msra.mxu0 0
        %1899 = vmatprep.subr.bf16.mxu0 0
        %1900 = vmatpush1.bf16.msra.mxu0 0
        %1901 = vmatprep.subr.bf16.mxu0 0
        %1902 = vmatpush1.bf16.msra.mxu0 0
        %1903 = vmatprep.subr.bf16.mxu0 0
        %1904 = vmatpush1.bf16.msra.mxu0 0
        %1905 = vmatprep.subr.bf16.mxu0 0
        %1906 = vmatpush1.bf16.msra.mxu0 0
        %1907 = vmatprep.subr.bf16.mxu0 0
        %1908 = vmatpush1.bf16.msra.mxu0 0
        %1909 = vmatprep.subr.bf16.mxu0 0
        %1910 = vmatpush1.bf16.msra.mxu0 0
        %1911 = vmatprep.subr.bf16.mxu0 0
        %1912 = vmatpush1.bf16.msra.mxu0 0
        %1913 = vmatprep.subr.bf16.mxu0 0
        %1914 = vmatpush1.bf16.msra.mxu0 0
        %1915 = vmatprep.subr.bf16.mxu0 0
        %1916 = vmatpush1.bf16.msra.mxu0 0
        %1917 = vmatprep.subr.bf16.mxu0 0
        %1918 = vmatpush1.bf16.msra.mxu0 0
        %1919 = vmatprep.subr.bf16.mxu0 0
        %1920 = vmatpush1.bf16.msra.mxu0 0
        %1921 = vmatprep.subr.bf16.mxu0 0
        %1922 = vmatpush1.bf16.msra.mxu0 0
        %1923 = vmatprep.subr.bf16.mxu0 0
        %1924 = vmatpush1.bf16.msra.mxu0 0
        %1925 = vmatprep.mubr.bf16.mxu0 0
        %1926 = vmatmul.mubr.bf16.gmra.mrb[0].mxu0 %v1887
        %v1927 = vpop.f32.mrb[0].mxu0
        %v1928 = vadd.f32 0.0, %v1927
        %v1929 = vpop.f32.mrb[0].mxu0
        %v1930 = vpop.f32.mrb[0].mxu0
        %v1931 = vpop.f32.mrb[0].mxu0
        %1932 = vdwg.mxu0
        %1934 = vrot.lane.b32.xlu0 %v1824, 96
        %v1935 = vpop.permute.xlu0 %1934
        %1937 = vrot.lane.b32.xlu0 %v1825, 96
        %v1938 = vpop.permute.xlu0 %1937
        %v1940 = vsel %vm964, %v1935, 0
        %v1943 = vsel %vm964, %v1938, 0
        %1945 = vmatprep.subr.bf16.mxu0 0
        %1946 = vmatpush1.bf16.xpose.msra.mxu0 %v1943
        %1947 = vmatprep.subr.bf16.mxu0 0
        %1948 = vmatpush1.bf16.xpose.msra.mxu0 0
        %1949 = vmatprep.subr.bf16.mxu0 0
        %1950 = vmatpush1.bf16.xpose.msra.mxu0 0
        %1951 = vmatprep.subr.bf16.mxu0 0
        %1952 = vmatpush1.bf16.xpose.msra.mxu0 0
        %1953 = vmatprep.subr.bf16.mxu0 0
        %1954 = vmatpush1.bf16.xpose.msra.mxu0 0
        %1955 = vmatprep.subr.bf16.mxu0 0
        %1956 = vmatpush1.bf16.xpose.msra.mxu0 0
        %1957 = vmatprep.subr.bf16.mxu0 0
        %1958 = vmatpush1.bf16.xpose.msra.mxu0 0
        %1959 = vmatprep.subr.bf16.mxu0 0
        %1960 = vmatpush1.bf16.xpose.msra.mxu0 0
        %1961 = vmatprep.subr.bf16.mxu0 0
        %1962 = vmatpush1.bf16.xpose.msra.mxu0 0
        %1963 = vmatprep.subr.bf16.mxu0 0
        %1964 = vmatpush1.bf16.xpose.msra.mxu0 0
        %1965 = vmatprep.subr.bf16.mxu0 0
        %1966 = vmatpush1.bf16.xpose.msra.mxu0 0
        %1967 = vmatprep.subr.bf16.mxu0 0
        %1968 = vmatpush1.bf16.xpose.msra.mxu0 0
        %1969 = vmatprep.subr.bf16.mxu0 0
        %1970 = vmatpush1.bf16.xpose.msra.mxu0 0
        %1971 = vmatprep.subr.bf16.mxu0 0
        %1972 = vmatpush1.bf16.xpose.msra.mxu0 0
        %1973 = vmatprep.subr.bf16.mxu0 0
        %1974 = vmatpush1.bf16.xpose.msra.mxu0 0
        %1975 = vmatprep.subr.bf16.mxu0 0
        %1976 = vmatpush1.bf16.xpose.msra.mxu0 0
        %1977 = vmatprep.mubr.bf16.mxu0 0
        %1978 = vmatmul.mubr.bf16.gmra.mrb[0].mxu0 %v1940
        %v1979 = vpop.f32.mrb[0].mxu0
        %v1980 = vadd.f32 %v1806, %v1979
        %v1981 = vpop.f32.mrb[0].mxu0
        %v1982 = vpop.f32.mrb[0].mxu0
        %v1983 = vpop.f32.mrb[0].mxu0
        %1984 = vdwg.mxu0
        %v1985 = vsel %vm1872, %v1980, -inf
        %1986 = vmax.xlane.f32.xlu0 %v1985
        %v1987 = vpop.xlane.xlu0 %1986
        %v1988 = vsub.f32 %v1980, %v1987
        %v1989 = vmul.f32 %v1988, 1.442695
        %v1990 = vpow.pop %v1989
        %v1991 = vsel %vm1872, %v1990, 0.0
        %1992 = vadd.xlane.f32.xlu0 %v1991
        %v1993 = vpop.xlane.xlu0 %1992
        %v1994 = vrcp.pop %v1993
        %v1995 = vmul.f32 %v1990, %v1994
        %v1996 = vpack.c.bf16 %v1995, %v1995
        %1998 = vrot.lane.b32.xlu0 %v1885, 96
        %v1999 = vpop.permute.xlu0 %1998
        %v2001 = vsel %vm1872, %v1996, 0
        %v2004 = vsel %vm1889, %v1999, 0
        %2006 = vmatprep.subr.bf16.mxu0 0
        %2007 = vmatpush1.bf16.msra.mxu0 %v2004
        %2008 = vmatprep.subr.bf16.mxu0 0
        %2009 = vmatpush1.bf16.msra.mxu0 0
        %2010 = vmatprep.subr.bf16.mxu0 0
        %2011 = vmatpush1.bf16.msra.mxu0 0
        %2012 = vmatprep.subr.bf16.mxu0 0
        %2013 = vmatpush1.bf16.msra.mxu0 0
        %2014 = vmatprep.subr.bf16.mxu0 0
        %2015 = vmatpush1.bf16.msra.mxu0 0
        %2016 = vmatprep.subr.bf16.mxu0 0
        %2017 = vmatpush1.bf16.msra.mxu0 0
        %2018 = vmatprep.subr.bf16.mxu0 0
        %2019 = vmatpush1.bf16.msra.mxu0 0
        %2020 = vmatprep.subr.bf16.mxu0 0
        %2021 = vmatpush1.bf16.msra.mxu0 0
        %2022 = vmatprep.subr.bf16.mxu0 0
        %2023 = vmatpush1.bf16.msra.mxu0 0
        %2024 = vmatprep.subr.bf16.mxu0 0
        %2025 = vmatpush1.bf16.msra.mxu0 0
        %2026 = vmatprep.subr.bf16.mxu0 0
        %2027 = vmatpush1.bf16.msra.mxu0 0
        %2028 = vmatprep.subr.bf16.mxu0 0
        %2029 = vmatpush1.bf16.msra.mxu0 0
        %2030 = vmatprep.subr.bf16.mxu0 0
        %2031 = vmatpush1.bf16.msra.mxu0 0
        %2032 = vmatprep.subr.bf16.mxu0 0
        %2033 = vmatpush1.bf16.msra.mxu0 0
        %2034 = vmatprep.subr.bf16.mxu0 0
        %2035 = vmatpush1.bf16.msra.mxu0 0
        %2036 = vmatprep.subr.bf16.mxu0 0
        %2037 = vmatpush1.bf16.msra.mxu0 0
        %2038 = vmatprep.mubr.bf16.mxu0 0
        %2039 = vmatmul.mubr.bf16.gmra.mrb[0].mxu0 %v2001
        %v2040 = vpop.f32.mrb[0].mxu0
        %v2041 = vadd.f32 0.0, %v2040
        %v2042 = vpop.f32.mrb[0].mxu0
        %v2043 = vpop.f32.mrb[0].mxu0
        %v2044 = vpop.f32.mrb[0].mxu0
        %2045 = vdwg.mxu0
        %2046 = vrot.lane.b32.xlu0 %v1824, 64
        %v2047 = vpop.permute.xlu0 %2046
        %2048 = vrot.lane.b32.xlu0 %v1825, 64
        %v2049 = vpop.permute.xlu0 %2048
        %v2051 = vsel %vm964, %v2047, 0
        %v2054 = vsel %vm964, %v2049, 0
        %2056 = vmatprep.subr.bf16.mxu0 0
        %2057 = vmatpush1.bf16.xpose.msra.mxu0 %v2054
        %2058 = vmatprep.subr.bf16.mxu0 0
        %2059 = vmatpush1.bf16.xpose.msra.mxu0 0
        %2060 = vmatprep.subr.bf16.mxu0 0
        %2061 = vmatpush1.bf16.xpose.msra.mxu0 0
        %2062 = vmatprep.subr.bf16.mxu0 0
        %2063 = vmatpush1.bf16.xpose.msra.mxu0 0
        %2064 = vmatprep.subr.bf16.mxu0 0
        %2065 = vmatpush1.bf16.xpose.msra.mxu0 0
        %2066 = vmatprep.subr.bf16.mxu0 0
        %2067 = vmatpush1.bf16.xpose.msra.mxu0 0
        %2068 = vmatprep.subr.bf16.mxu0 0
        %2069 = vmatpush1.bf16.xpose.msra.mxu0 0
        %2070 = vmatprep.subr.bf16.mxu0 0
        %2071 = vmatpush1.bf16.xpose.msra.mxu0 0
        %2072 = vmatprep.subr.bf16.mxu0 0
        %2073 = vmatpush1.bf16.xpose.msra.mxu0 0
        %2074 = vmatprep.subr.bf16.mxu0 0
        %2075 = vmatpush1.bf16.xpose.msra.mxu0 0
        %2076 = vmatprep.subr.bf16.mxu0 0
        %2077 = vmatpush1.bf16.xpose.msra.mxu0 0
        %2078 = vmatprep.subr.bf16.mxu0 0
        %2079 = vmatpush1.bf16.xpose.msra.mxu0 0
        %2080 = vmatprep.subr.bf16.mxu0 0
        %2081 = vmatpush1.bf16.xpose.msra.mxu0 0
        %2082 = vmatprep.subr.bf16.mxu0 0
        %2083 = vmatpush1.bf16.xpose.msra.mxu0 0
        %2084 = vmatprep.subr.bf16.mxu0 0
        %2085 = vmatpush1.bf16.xpose.msra.mxu0 0
        %2086 = vmatprep.subr.bf16.mxu0 0
        %2087 = vmatpush1.bf16.xpose.msra.mxu0 0
        %2088 = vmatprep.mubr.bf16.mxu0 0
        %2089 = vmatmul.mubr.bf16.gmra.mrb[0].mxu0 %v2051
        %v2090 = vpop.f32.mrb[0].mxu0
        %v2091 = vadd.f32 %v1806, %v2090
        %v2092 = vpop.f32.mrb[0].mxu0
        %v2093 = vpop.f32.mrb[0].mxu0
        %v2094 = vpop.f32.mrb[0].mxu0
        %2095 = vdwg.mxu0
        %v2096 = vsel %vm1872, %v2091, -inf
        %2097 = vmax.xlane.f32.xlu0 %v2096
        %v2098 = vpop.xlane.xlu0 %2097
        %v2099 = vsub.f32 %v2091, %v2098
        %v2100 = vmul.f32 %v2099, 1.442695
        %v2101 = vpow.pop %v2100
        %v2102 = vsel %vm1872, %v2101, 0.0
        %2103 = vadd.xlane.f32.xlu0 %v2102
        %v2104 = vpop.xlane.xlu0 %2103
        %v2105 = vrcp.pop %v2104
        %v2106 = vmul.f32 %v2101, %v2105
        %v2107 = vpack.c.bf16 %v2106, %v2106
        %2108 = vrot.lane.b32.xlu0 %v1885, 64
        %v2109 = vpop.permute.xlu0 %2108
        %v2111 = vsel %vm1872, %v2107, 0
        %v2114 = vsel %vm1889, %v2109, 0
        %2116 = vmatprep.subr.bf16.mxu0 0
        %2117 = vmatpush1.bf16.msra.mxu0 %v2114
        %2118 = vmatprep.subr.bf16.mxu0 0
        %2119 = vmatpush1.bf16.msra.mxu0 0
        %2120 = vmatprep.subr.bf16.mxu0 0
        %2121 = vmatpush1.bf16.msra.mxu0 0
        %2122 = vmatprep.subr.bf16.mxu0 0
        %2123 = vmatpush1.bf16.msra.mxu0 0
        %2124 = vmatprep.subr.bf16.mxu0 0
        %2125 = vmatpush1.bf16.msra.mxu0 0
        %2126 = vmatprep.subr.bf16.mxu0 0
        %2127 = vmatpush1.bf16.msra.mxu0 0
        %2128 = vmatprep.subr.bf16.mxu0 0
        %2129 = vmatpush1.bf16.msra.mxu0 0
        %2130 = vmatprep.subr.bf16.mxu0 0
        %2131 = vmatpush1.bf16.msra.mxu0 0
        %2132 = vmatprep.subr.bf16.mxu0 0
        %2133 = vmatpush1.bf16.msra.mxu0 0
        %2134 = vmatprep.subr.bf16.mxu0 0
        %2135 = vmatpush1.bf16.msra.mxu0 0
        %2136 = vmatprep.subr.bf16.mxu0 0
        %2137 = vmatpush1.bf16.msra.mxu0 0
        %2138 = vmatprep.subr.bf16.mxu0 0
        %2139 = vmatpush1.bf16.msra.mxu0 0
        %2140 = vmatprep.subr.bf16.mxu0 0
        %2141 = vmatpush1.bf16.msra.mxu0 0
        %2142 = vmatprep.subr.bf16.mxu0 0
        %2143 = vmatpush1.bf16.msra.mxu0 0
        %2144 = vmatprep.subr.bf16.mxu0 0
        %2145 = vmatpush1.bf16.msra.mxu0 0
        %2146 = vmatprep.subr.bf16.mxu0 0
        %2147 = vmatpush1.bf16.msra.mxu0 0
        %2148 = vmatprep.mubr.bf16.mxu0 0
        %2149 = vmatmul.mubr.bf16.gmra.mrb[0].mxu0 %v2111
        %v2150 = vpop.f32.mrb[0].mxu0
        %v2151 = vadd.f32 0.0, %v2150
        %v2152 = vpop.f32.mrb[0].mxu0
        %v2153 = vpop.f32.mrb[0].mxu0
        %v2154 = vpop.f32.mrb[0].mxu0
        %2155 = vdwg.mxu0
        %2156 = vrot.lane.b32.xlu0 %v1824, 32
        %v2157 = vpop.permute.xlu0 %2156
        %2158 = vrot.lane.b32.xlu0 %v1825, 32
        %v2159 = vpop.permute.xlu0 %2158
        %v2161 = vsel %vm964, %v2157, 0
        %v2164 = vsel %vm964, %v2159, 0
        %2166 = vmatprep.subr.bf16.mxu0 0
        %2167 = vmatpush1.bf16.xpose.msra.mxu0 %v2164
        %2168 = vmatprep.subr.bf16.mxu0 0
        %2169 = vmatpush1.bf16.xpose.msra.mxu0 0
        %2170 = vmatprep.subr.bf16.mxu0 0
        %2171 = vmatpush1.bf16.xpose.msra.mxu0 0
        %2172 = vmatprep.subr.bf16.mxu0 0
        %2173 = vmatpush1.bf16.xpose.msra.mxu0 0
        %2174 = vmatprep.subr.bf16.mxu0 0
        %2175 = vmatpush1.bf16.xpose.msra.mxu0 0
        %2176 = vmatprep.subr.bf16.mxu0 0
        %2177 = vmatpush1.bf16.xpose.msra.mxu0 0
        %2178 = vmatprep.subr.bf16.mxu0 0
        %2179 = vmatpush1.bf16.xpose.msra.mxu0 0
        %2180 = vmatprep.subr.bf16.mxu0 0
        %2181 = vmatpush1.bf16.xpose.msra.mxu0 0
        %2182 = vmatprep.subr.bf16.mxu0 0
        %2183 = vmatpush1.bf16.xpose.msra.mxu0 0
        %2184 = vmatprep.subr.bf16.mxu0 0
        %2185 = vmatpush1.bf16.xpose.msra.mxu0 0
        %2186 = vmatprep.subr.bf16.mxu0 0
        %2187 = vmatpush1.bf16.xpose.msra.mxu0 0
        %2188 = vmatprep.subr.bf16.mxu0 0
        %2189 = vmatpush1.bf16.xpose.msra.mxu0 0
        %2190 = vmatprep.subr.bf16.mxu0 0
        %2191 = vmatpush1.bf16.xpose.msra.mxu0 0
        %2192 = vmatprep.subr.bf16.mxu0 0
        %2193 = vmatpush1.bf16.xpose.msra.mxu0 0
        %2194 = vmatprep.subr.bf16.mxu0 0
        %2195 = vmatpush1.bf16.xpose.msra.mxu0 0
        %2196 = vmatprep.subr.bf16.mxu0 0
        %2197 = vmatpush1.bf16.xpose.msra.mxu0 0
        %2198 = vmatprep.mubr.bf16.mxu0 0
        %2199 = vmatmul.mubr.bf16.gmra.mrb[0].mxu0 %v2161
        %v2200 = vpop.f32.mrb[0].mxu0
        %v2201 = vadd.f32 %v1806, %v2200
        %v2202 = vpop.f32.mrb[0].mxu0
        %v2203 = vpop.f32.mrb[0].mxu0
        %v2204 = vpop.f32.mrb[0].mxu0
        %2205 = vdwg.mxu0
        %v2206 = vsel %vm1872, %v2201, -inf
        %2207 = vmax.xlane.f32.xlu0 %v2206
        %v2208 = vpop.xlane.xlu0 %2207
        %v2209 = vsub.f32 %v2201, %v2208
        %v2210 = vmul.f32 %v2209, 1.442695
        %v2211 = vpow.pop %v2210
        %v2212 = vsel %vm1872, %v2211, 0.0
        %2213 = vadd.xlane.f32.xlu0 %v2212
        %v2214 = vpop.xlane.xlu0 %2213
        %v2215 = vrcp.pop %v2214
        %v2216 = vmul.f32 %v2211, %v2215
        %v2217 = vpack.c.bf16 %v2216, %v2216
        %2218 = vrot.lane.b32.xlu0 %v1885, 32
        %v2219 = vpop.permute.xlu0 %2218
        %v2221 = vsel %vm1872, %v2217, 0
        %v2224 = vsel %vm1889, %v2219, 0
        %2226 = vmatprep.subr.bf16.mxu0 0
        %2227 = vmatpush1.bf16.msra.mxu0 %v2224
        %2228 = vmatprep.subr.bf16.mxu0 0
        %2229 = vmatpush1.bf16.msra.mxu0 0
        %2230 = vmatprep.subr.bf16.mxu0 0
        %2231 = vmatpush1.bf16.msra.mxu0 0
        %2232 = vmatprep.subr.bf16.mxu0 0
        %2233 = vmatpush1.bf16.msra.mxu0 0
        %2234 = vmatprep.subr.bf16.mxu0 0
        %2235 = vmatpush1.bf16.msra.mxu0 0
        %2236 = vmatprep.subr.bf16.mxu0 0
        %2237 = vmatpush1.bf16.msra.mxu0 0
        %2238 = vmatprep.subr.bf16.mxu0 0
        %2239 = vmatpush1.bf16.msra.mxu0 0
        %2240 = vmatprep.subr.bf16.mxu0 0
        %2241 = vmatpush1.bf16.msra.mxu0 0
        %2242 = vmatprep.subr.bf16.mxu0 0
        %2243 = vmatpush1.bf16.msra.mxu0 0
        %2244 = vmatprep.subr.bf16.mxu0 0
        %2245 = vmatpush1.bf16.msra.mxu0 0
        %2246 = vmatprep.subr.bf16.mxu0 0
        %2247 = vmatpush1.bf16.msra.mxu0 0
        %2248 = vmatprep.subr.bf16.mxu0 0
        %2249 = vmatpush1.bf16.msra.mxu0 0
        %2250 = vmatprep.subr.bf16.mxu0 0
        %2251 = vmatpush1.bf16.msra.mxu0 0
        %2252 = vmatprep.subr.bf16.mxu0 0
        %2253 = vmatpush1.bf16.msra.mxu0 0
        %2254 = vmatprep.subr.bf16.mxu0 0
        %2255 = vmatpush1.bf16.msra.mxu0 0
        %2256 = vmatprep.subr.bf16.mxu0 0
        %2257 = vmatpush1.bf16.msra.mxu0 0
        %2258 = vmatprep.mubr.bf16.mxu0 0
        %2259 = vmatmul.mubr.bf16.gmra.mrb[0].mxu0 %v2221
        %v2260 = vpop.f32.mrb[0].mxu0
        %v2261 = vadd.f32 0.0, %v2260
        %v2262 = vpop.f32.mrb[0].mxu0
        %v2263 = vpop.f32.mrb[0].mxu0
        %v2264 = vpop.f32.mrb[0].mxu0
        %2265 = vdwg.mxu0
        %2267 = vrot.lane.b32.xlu0 %v2041, 32
        %v2268 = vpop.permute.xlu0 %2267
        %2271 = vrot.lane.b32.xlu0 %v2151, 64
        %v2272 = vpop.permute.xlu0 %2271
        %2275 = vrot.lane.b32.xlu0 %v2261, 96
        %v2276 = vpop.permute.xlu0 %2275
        %v2278 = vsel %vm964, %v1928, %v2268
        %v2279 = vsel %vm1418, %v2278, %v2272
        %v2280 = vsel %vm1420, %v2279, %v2276
        %v2281 = vpack.c.bf16 %v2280, %v2280
        %v2283 = vlaneseq
        %v2284 = vshrl.u32 %v2283, 7
        %v2285 = vsub.s32 0, %v2284
        %v2286 = vrot.slane %v1823, %v2285
        %v2304 = vunpack.c.l.b16 %v1807
        %v2305 = vunpack.c.l.b16 %v1808
        %v2306 = vunpack.c.l.b16 %v1809
        %v2307 = vunpack.c.l.b16 %v1810
        %v2308 = vunpack.c.l.b16 %v1811
        %v2309 = vunpack.c.l.b16 %v1812
        %v2310 = vunpack.c.l.b16 %v1813
        %v2311 = vunpack.c.l.b16 %v1814
        %v2312 = vunpack.c.l.b16 %v1815
        %v2313 = vunpack.c.l.b16 %v1816
        %v2314 = vunpack.c.l.b16 %v1817
        %v2315 = vunpack.c.l.b16 %v1818
        %v2316 = vunpack.c.l.b16 %v1819
        %v2317 = vunpack.c.l.b16 %v1820
        %v2318 = vunpack.c.l.b16 %v1821
        %v2319 = vunpack.c.l.b16 %v1822
        %v2320 = vpack.c.b16 %v2305, %v2304
        %v2321 = vpack.c.b16 %v2307, %v2306
        %v2322 = vpack.c.b16 %v2309, %v2308
        %v2323 = vpack.c.b16 %v2311, %v2310
        %v2324 = vpack.c.b16 %v2313, %v2312
        %v2325 = vpack.c.b16 %v2315, %v2314
        %v2326 = vpack.c.b16 %v2317, %v2316
        %v2327 = vpack.c.b16 %v2319, %v2318
        %2336 = vmatprep.subr.bf16.mxu0 0
        %2337 = vmatpush1.bf16.msra.mxu0 %v2320
        %2338 = vmatprep.subr.bf16.mxu0 0
        %2339 = vmatpush1.bf16.msra.mxu0 %v2321
        %2340 = vmatprep.subr.bf16.mxu0 0
        %2341 = vmatpush1.bf16.msra.mxu0 %v2322
        %2342 = vmatprep.subr.bf16.mxu0 0
        %2343 = vmatpush1.bf16.msra.mxu0 %v2323
        %2344 = vmatprep.subr.bf16.mxu0 0
        %2345 = vmatpush1.bf16.msra.mxu0 %v2324
        %2346 = vmatprep.subr.bf16.mxu0 0
        %2347 = vmatpush1.bf16.msra.mxu0 %v2325
        %2348 = vmatprep.subr.bf16.mxu0 0
        %2349 = vmatpush1.bf16.msra.mxu0 %v2326
        %2350 = vmatprep.subr.bf16.mxu0 0
        %2351 = vmatpush1.bf16.msra.mxu0 %v2327
        %2352 = vmatprep.subr.bf16.mxu0 0
        %2353 = vmatpush1.bf16.msra.mxu0 0
        %2354 = vmatprep.subr.bf16.mxu0 0
        %2355 = vmatpush1.bf16.msra.mxu0 0
        %2356 = vmatprep.subr.bf16.mxu0 0
        %2357 = vmatpush1.bf16.msra.mxu0 0
        %2358 = vmatprep.subr.bf16.mxu0 0
        %2359 = vmatpush1.bf16.msra.mxu0 0
        %2360 = vmatprep.subr.bf16.mxu0 0
        %2361 = vmatpush1.bf16.msra.mxu0 0
        %2362 = vmatprep.subr.bf16.mxu0 0
        %2363 = vmatpush1.bf16.msra.mxu0 0
        %2364 = vmatprep.subr.bf16.mxu0 0
        %2365 = vmatpush1.bf16.msra.mxu0 0
        %2366 = vmatprep.subr.bf16.mxu0 0
        %2367 = vmatpush1.bf16.msra.mxu0 0
        %2368 = vmatprep.mubr.bf16.mxu0 0
        %2369 = vmatmul.mubr.bf16.gmra.mrb[0].mxu0 %v2281
        %v2370 = vpop.f32.mrb[0].mxu0
        %v2371 = vadd.f32 %v2286, %v2370
        %v2372 = vpop.f32.mrb[0].mxu0
        %v2373 = vpop.f32.mrb[0].mxu0
        %v2374 = vpop.f32.mrb[0].mxu0
        %2375 = vdwg.mxu0
        %v2376 = vadd.f32 %v1541, %v2371
        %2377 = vadd.xlane.f32.xlu0 %v2376
        %v2378 = vpop.xlane.xlu0 %2377
        %v2379 = vmul.f32 %v2378, 0.03125
        %v2380 = vsub.f32 %v2376, %v2379
        %v2381 = vmul.f32 %v2380, %v2380
        %2382 = vadd.xlane.f32.xlu0 %v2381
        %v2383 = vpop.xlane.xlu0 %2382
        %v2384 = vmul.f32 %v2379, 96.0
        %v2385 = vmul.f32 %v2384, %v2379
        %v2386 = vsub.f32 %v2383, %v2385
        %v2387 = vmul.f32 %v2386, 0.03125
        %v2388 = vadd.f32 %v2387, 1e-05
        %v2389 = vrsqrt.pop %v2388
        %v2390 = vmul.f32 %v2380, %v2389
        %v2391 = vlaneseq
        %v2392 = vshrl.u32 %v2391, 7
        %v2393 = vsub.s32 1, %v2392
        %v2394 = vrot.slane %v683, %v2393
        %v2395 = vmul.f32 %v2390, %v2394
        %v2396 = vlaneseq
        %v2397 = vshrl.u32 %v2396, 7
        %v2398 = vsub.s32 1, %v2397
        %v2399 = vrot.slane %v684, %v2398
        %v2400 = vadd.f32 %v2395, %v2399
        %v2401 = vpack.c.bf16 %v2400, %v2400
        %v2402 = vld [vmem:[%s16] sm:$0xf]
        %v2403 = vld [vmem:[%s16 + $0x4] sm:$0xf]
        %v2404 = vld [vmem:[%s16 + $0x8] sm:$0xf]
        %v2405 = vld [vmem:[%s16 + $0xc] sm:$0xf]
        %v2406 = vld [vmem:[%s16 + $0x10] sm:$0xf]
        %v2407 = vld [vmem:[%s16 + $0x14] sm:$0xf]
        %v2408 = vld [vmem:[%s16 + $0x18] sm:$0xf]
        %v2409 = vld [vmem:[%s16 + $0x1c] sm:$0xf]
        %v2410 = vld [vmem:[%s16 + $0x20] sm:$0xf]
        %v2411 = vld [vmem:[%s16 + $0x24] sm:$0xf]
        %v2412 = vld [vmem:[%s16 + $0x28] sm:$0xf]
        %v2413 = vld [vmem:[%s16 + $0x2c] sm:$0xf]
        %v2414 = vld [vmem:[%s16 + $0x30] sm:$0xf]
        %v2415 = vld [vmem:[%s16 + $0x34] sm:$0xf]
        %v2416 = vld [vmem:[%s16 + $0x38] sm:$0xf]
        %v2417 = vld [vmem:[%s16 + $0x3c] sm:$0xf]
        %v2418 = vld [vmem:[%s17] sm:$0x1]
        %v2420 = vlaneseq
        %v2421 = vshrl.u32 %v2420, 7
        %v2422 = vsub.s32 0, %v2421
        %v2423 = vrot.slane %v2418, %v2422
        %v2441 = vunpack.c.l.b16 %v2402
        %v2442 = vunpack.c.l.b16 %v2403
        %v2443 = vunpack.c.l.b16 %v2404
        %v2444 = vunpack.c.l.b16 %v2405
        %v2445 = vunpack.c.l.b16 %v2406
        %v2446 = vunpack.c.l.b16 %v2407
        %v2447 = vunpack.c.l.b16 %v2408
        %v2448 = vunpack.c.l.b16 %v2409
        %v2449 = vunpack.c.l.b16 %v2410
        %v2450 = vunpack.c.l.b16 %v2411
        %v2451 = vunpack.c.l.b16 %v2412
        %v2452 = vunpack.c.l.b16 %v2413
        %v2453 = vunpack.c.l.b16 %v2414
        %v2454 = vunpack.c.l.b16 %v2415
        %v2455 = vunpack.c.l.b16 %v2416
        %v2456 = vunpack.c.l.b16 %v2417
        %v2457 = vpack.c.b16 %v2442, %v2441
        %v2458 = vpack.c.b16 %v2444, %v2443
        %v2459 = vpack.c.b16 %v2446, %v2445
        %v2460 = vpack.c.b16 %v2448, %v2447
        %v2461 = vpack.c.b16 %v2450, %v2449
        %v2462 = vpack.c.b16 %v2452, %v2451
        %v2463 = vpack.c.b16 %v2454, %v2453
        %v2464 = vpack.c.b16 %v2456, %v2455
        %2473 = vmatprep.subr.bf16.mxu0 0
        %2474 = vmatpush1.bf16.msra.mxu0 %v2457
        %2475 = vmatprep.subr.bf16.mxu0 0
        %2476 = vmatpush1.bf16.msra.mxu0 %v2458
        %2477 = vmatprep.subr.bf16.mxu0 0
        %2478 = vmatpush1.bf16.msra.mxu0 %v2459
        %2479 = vmatprep.subr.bf16.mxu0 0
        %2480 = vmatpush1.bf16.msra.mxu0 %v2460
        %2481 = vmatprep.subr.bf16.mxu0 0
        %2482 = vmatpush1.bf16.msra.mxu0 %v2461
        %2483 = vmatprep.subr.bf16.mxu0 0
        %2484 = vmatpush1.bf16.msra.mxu0 %v2462
        %2485 = vmatprep.subr.bf16.mxu0 0
        %2486 = vmatpush1.bf16.msra.mxu0 %v2463
        %2487 = vmatprep.subr.bf16.mxu0 0
        %2488 = vmatpush1.bf16.msra.mxu0 %v2464
        %2489 = vmatprep.subr.bf16.mxu0 0
        %2490 = vmatpush1.bf16.msra.mxu0 0
        %2491 = vmatprep.subr.bf16.mxu0 0
        %2492 = vmatpush1.bf16.msra.mxu0 0
        %2493 = vmatprep.subr.bf16.mxu0 0
        %2494 = vmatpush1.bf16.msra.mxu0 0
        %2495 = vmatprep.subr.bf16.mxu0 0
        %2496 = vmatpush1.bf16.msra.mxu0 0
        %2497 = vmatprep.subr.bf16.mxu0 0
        %2498 = vmatpush1.bf16.msra.mxu0 0
        %2499 = vmatprep.subr.bf16.mxu0 0
        %2500 = vmatpush1.bf16.msra.mxu0 0
        %2501 = vmatprep.subr.bf16.mxu0 0
        %2502 = vmatpush1.bf16.msra.mxu0 0
        %2503 = vmatprep.subr.bf16.mxu0 0
        %2504 = vmatpush1.bf16.msra.mxu0 0
        %2505 = vmatprep.mubr.bf16.mxu0 0
        %2506 = vmatmul.mubr.bf16.gmra.mrb[0].mxu0 %v2401
        %v2507 = vpop.f32.mrb[0].mxu0
        %v2508 = vadd.f32 %v2423, %v2507
        %v2509 = vpop.f32.mrb[0].mxu0
        %v2510 = vpop.f32.mrb[0].mxu0
        %v2511 = vpop.f32.mrb[0].mxu0
        %2512 = vdwg.mxu0
        %v2513 = vmax.f32 %v2508, 0.0
        %v2514 = vpack.c.bf16 %v2513, %v2513
        %v2515 = vld [vmem:[%s18] sm:$0xf]
        %v2516 = vld [vmem:[%s18 + $0x4] sm:$0xf]
        %v2517 = vld [vmem:[%s18 + $0x8] sm:$0xf]
        %v2518 = vld [vmem:[%s18 + $0xc] sm:$0xf]
        %v2519 = vld [vmem:[%s18 + $0x10] sm:$0xf]
        %v2520 = vld [vmem:[%s18 + $0x14] sm:$0xf]
        %v2521 = vld [vmem:[%s18 + $0x18] sm:$0xf]
        %v2522 = vld [vmem:[%s18 + $0x1c] sm:$0xf]
        %v2523 = vld [vmem:[%s18 + $0x20] sm:$0xf]
        %v2524 = vld [vmem:[%s18 + $0x24] sm:$0xf]
        %v2525 = vld [vmem:[%s18 + $0x28] sm:$0xf]
        %v2526 = vld [vmem:[%s18 + $0x2c] sm:$0xf]
        %v2527 = vld [vmem:[%s18 + $0x30] sm:$0xf]
        %v2528 = vld [vmem:[%s18 + $0x34] sm:$0xf]
        %v2529 = vld [vmem:[%s18 + $0x38] sm:$0xf]
        %v2530 = vld [vmem:[%s18 + $0x3c] sm:$0xf]
        %v2531 = vld [vmem:[%s19] sm:$0x1]
        %v2533 = vlaneseq
        %v2534 = vshrl.u32 %v2533, 7
        %v2535 = vsub.s32 0, %v2534
        %v2536 = vrot.slane %v2531, %v2535
        %v2554 = vunpack.c.l.b16 %v2515
        %v2555 = vunpack.c.l.b16 %v2516
        %v2556 = vunpack.c.l.b16 %v2517
        %v2557 = vunpack.c.l.b16 %v2518
        %v2558 = vunpack.c.l.b16 %v2519
        %v2559 = vunpack.c.l.b16 %v2520
        %v2560 = vunpack.c.l.b16 %v2521
        %v2561 = vunpack.c.l.b16 %v2522
        %v2562 = vunpack.c.l.b16 %v2523
        %v2563 = vunpack.c.l.b16 %v2524
        %v2564 = vunpack.c.l.b16 %v2525
        %v2565 = vunpack.c.l.b16 %v2526
        %v2566 = vunpack.c.l.b16 %v2527
        %v2567 = vunpack.c.l.b16 %v2528
        %v2568 = vunpack.c.l.b16 %v2529
        %v2569 = vunpack.c.l.b16 %v2530
        %v2570 = vpack.c.b16 %v2555, %v2554
        %v2571 = vpack.c.b16 %v2557, %v2556
        %v2572 = vpack.c.b16 %v2559, %v2558
        %v2573 = vpack.c.b16 %v2561, %v2560
        %v2574 = vpack.c.b16 %v2563, %v2562
        %v2575 = vpack.c.b16 %v2565, %v2564
        %v2576 = vpack.c.b16 %v2567, %v2566
        %v2577 = vpack.c.b16 %v2569, %v2568
        %2586 = vmatprep.subr.bf16.mxu0 0
        %2587 = vmatpush1.bf16.msra.mxu0 %v2570
        %2588 = vmatprep.subr.bf16.mxu0 0
        %2589 = vmatpush1.bf16.msra.mxu0 %v2571
        %2590 = vmatprep.subr.bf16.mxu0 0
        %2591 = vmatpush1.bf16.msra.mxu0 %v2572
        %2592 = vmatprep.subr.bf16.mxu0 0
        %2593 = vmatpush1.bf16.msra.mxu0 %v2573
        %2594 = vmatprep.subr.bf16.mxu0 0
        %2595 = vmatpush1.bf16.msra.mxu0 %v2574
        %2596 = vmatprep.subr.bf16.mxu0 0
        %2597 = vmatpush1.bf16.msra.mxu0 %v2575
        %2598 = vmatprep.subr.bf16.mxu0 0
        %2599 = vmatpush1.bf16.msra.mxu0 %v2576
        %2600 = vmatprep.subr.bf16.mxu0 0
        %2601 = vmatpush1.bf16.msra.mxu0 %v2577
        %2602 = vmatprep.subr.bf16.mxu0 0
        %2603 = vmatpush1.bf16.msra.mxu0 0
        %2604 = vmatprep.subr.bf16.mxu0 0
        %2605 = vmatpush1.bf16.msra.mxu0 0
        %2606 = vmatprep.subr.bf16.mxu0 0
        %2607 = vmatpush1.bf16.msra.mxu0 0
        %2608 = vmatprep.subr.bf16.mxu0 0
        %2609 = vmatpush1.bf16.msra.mxu0 0
        %2610 = vmatprep.subr.bf16.mxu0 0
        %2611 = vmatpush1.bf16.msra.mxu0 0
        %2612 = vmatprep.subr.bf16.mxu0 0
        %2613 = vmatpush1.bf16.msra.mxu0 0
        %2614 = vmatprep.subr.bf16.mxu0 0
        %2615 = vmatpush1.bf16.msra.mxu0 0
        %2616 = vmatprep.subr.bf16.mxu0 0
        %2617 = vmatpush1.bf16.msra.mxu0 0
        %2618 = vmatprep.mubr.bf16.mxu0 0
        %2619 = vmatmul.mubr.bf16.gmra.mrb[0].mxu0 %v2514
        %v2620 = vpop.f32.mrb[0].mxu0
        %v2621 = vadd.f32 %v2536, %v2620
        %v2622 = vpop.f32.mrb[0].mxu0
        %v2623 = vpop.f32.mrb[0].mxu0
        %v2624 = vpop.f32.mrb[0].mxu0
        %2625 = vdwg.mxu0
        %v2626 = vadd.f32 %v2400, %v2621
        %2627 = vadd.xlane.f32.xlu0 %v2626
        %v2628 = vpop.xlane.xlu0 %2627
        %v2629 = vmul.f32 %v2628, 0.03125
        %v2630 = vsub.f32 %v2626, %v2629
        %v2631 = vmul.f32 %v2630, %v2630
        %2632 = vadd.xlane.f32.xlu0 %v2631
        %v2633 = vpop.xlane.xlu0 %2632
        %v2634 = vmul.f32 %v2629, 96.0
        %v2635 = vmul.f32 %v2634, %v2629
        %v2636 = vsub.f32 %v2633, %v2635
        %v2637 = vmul.f32 %v2636, 0.03125
        %v2638 = vadd.f32 %v2637, 1e-05
        %v2639 = vrsqrt.pop %v2638
        %v2640 = vmul.f32 %v2630, %v2639
        %v2641 = vlaneseq
        %v2642 = vshrl.u32 %v2641, 7
        %v2643 = vsub.s32 2, %v2642
        %v2644 = vrot.slane %v683, %v2643
        %v2645 = vmul.f32 %v2640, %v2644
        %v2646 = vlaneseq
        %v2647 = vshrl.u32 %v2646, 7
        %v2648 = vsub.s32 2, %v2647
        %v2649 = vrot.slane %v684, %v2648
        %v2650 = vadd.f32 %v2645, %v2649
        %2651 = vst [vmem:[%s661] sm:$0xff] %v2650
        %s2652 = sand.u32 %s482, 1
        %s2653 = scalar_lea.sflag [#allocation3], %s2652
        %s2654 = sand.u32 %s482, 1
        %s2655 = smul.addr %s2654, 8
        %s2656 = scalar_lea.vmem [#allocation2], %s2655
        // Predicated region
        $region101: #{decoder_forward.1} parent=99 // pred_check
          %p2657 = pneg %p492
        $region102: #{decoder_forward.1} parent=99 // pred_check_branch
          %2659 = sbr.rel (%p2657) target = $region104
        $region103: #{decoder_forward.1} parent=99 // pred_region
          %s2661 = ssub.s32 128, 128
          %2662 = vsyncadd %s2653, %s2661
          %s2663 = smul.addr %s34, 128
          %s2664 = scalar_lea.hbm %s20, %s2663
          %s2666 = sshll.u32 %s2656, 4
          %s2667 = int_to_ptr.vmem [resolvable:$true] %s2666
          %2669 = dma.vmem_to_hbm [thread:$0]  %s2667, 128, %s2664, %s2653
        $region104: #{decoder_forward.1} parent=99 // pred_fallthru
          _
      $region100: #{decoder_forward.1} parent=5 // pred_fallthru
        _
      %p2670 = scmp.le.s32.totalorder 2, %s29
      // Predicated region
      $region105: #{decoder_forward.1} parent=5 // pred_check
        %p2671 = pneg %p2670
      $region106: #{decoder_forward.1} parent=5 // pred_check_branch
        %2673 = sbr.rel (%p2671) target = $region108
      $region107: #{decoder_forward.1} parent=5 // pred_region
        %s2674 = ssub.s32 %s29, 2
        // Predicated region
        $region109: #{decoder_forward.1} parent=107 // pred_check
          %p2675 = pneg %p498
        $region110: #{decoder_forward.1} parent=107 // pred_check_branch
          %2677 = sbr.rel (%p2675) target = $region112
        $region111: #{decoder_forward.1} parent=107 // pred_region
          %s2678 = sand.u32 %s483, 1
          %s2679 = scalar_lea.sflag [#allocation3], %s2678
          %s2680 = sand.u32 %s483, 1
          %s2681 = smul.addr %s2680, 8
          %s2682 = scalar_lea.vmem [#allocation2], %s2681
          %2683 = dma.done %s2679, 128
        $region112: #{decoder_forward.1} parent=107 // pred_fallthru
          _
      $region108: #{decoder_forward.1} parent=5 // pred_fallthru
        _
    $region6: #{decoder_forward.1} parent=1 // loop_footer
      %s33 = sadd.s32 1, %s29
    $region7: #{decoder_forward.1} parent=1 // loop_footer_branch
      %28 = sbr.rel target = $region3
    $region8: #{decoder_forward.1} parent=1 // loop_exit
      _
    %2684 = vsyncpa [#allocation3], 1
    %s2685 = scalar_lea.sflag [#allocation3], 1
    %2686 = vsyncpa %s2685, 1

</llo_original>
